<compile_context>
chip_gen: v7x
topology: tpu7x:2x2x1
jax: 0.10.0
libtpu: 0.0.40
codegen_flags: <defaults>
</compile_context>

<pallas_src>
import math

import jax
import jax.numpy as jnp
from jax.experimental import pallas as pl
from jax.experimental.pallas import tpu as pltpu

# ---- model hyperparameters (match the PyTorch script) ----
VOCAB_SIZE = 1000
D_MODEL = 32
NUM_HEADS = 4
NUM_LAYERS = 2
DIM_FF = 2048
BATCH = 2
SEQ_LEN = 10
MAX_LEN = 512
D_K = D_MODEL // NUM_HEADS
LN_EPS = 1e-5
N_TOK = BATCH * SEQ_LEN


def _layer_norm(v, gamma, beta):
    # gamma, beta: (1, D); v: (T, D). Biased variance, eps=1e-5 (torch default).
    mu = jnp.mean(v, axis=-1, keepdims=True)
    var = jnp.mean((v - mu) ** 2, axis=-1, keepdims=True)
    return (v - mu) * jax.lax.rsqrt(var + LN_EPS) * gamma + beta


def fused_transformer_kernel(
    ids_ref, emb_ref, pe_ref, bias_ref, hmask_ref,
    wqkv_ref, bqkv_ref, wo_ref, bo_ref, ln1g_ref, ln1b_ref,
    w1_ref, b1_ref, w2_ref, b2_ref, ln2g_ref, ln2b_ref,
    o_ref, x_scr,
):
    """One encoder layer per grid step; activations carried in VMEM scratch."""
    layer = pl.program_id(0)

    # ---- layer-0 prologue: bf16 one-hot MXU embedding gather + pos-enc ----
    @pl.when(layer == 0)
    def _():
        vocab_iota = jax.lax.broadcasted_iota(jnp.int32, (N_TOK, VOCAB_SIZE), 1)
        onehot = (ids_ref[...] == vocab_iota).astype(jnp.bfloat16)     # (T, V)
        x0 = jnp.dot(onehot, emb_ref[...], preferred_element_type=jnp.float32)
        x_scr[...] = x0 + pe_ref[...]                                   # (T, D)

    x = x_scr[...]                    # (T, D) f32 activation carried across layers
    bias = bias_ref[...]              # (T, T): 0 within a batch row, -1e30 across
    scale = 1.0 / math.sqrt(D_K)

    # --- fused Q|K|V projection: one (T,32) @ (32,96) matmul ---
    qkv = jnp.dot(x, wqkv_ref[...], preferred_element_type=jnp.float32) + bqkv_ref[...]
    q = qkv[:, 0:D_MODEL]
    k = qkv[:, D_MODEL:2 * D_MODEL]
    v = qkv[:, 2 * D_MODEL:3 * D_MODEL]

    # --- multi-head attention: full-width lane-masked heads, both batch rows
    #     handled at once by the block-diagonal bias; deferred normalization ---
    ctx = jnp.zeros((N_TOK, D_MODEL), jnp.float32)
    den = jnp.zeros((N_TOK, D_MODEL), jnp.float32)
    for h in range(NUM_HEADS):
        hm = hmask_ref[h:h + 1, :]                                      # (1, D)
        s = jax.lax.dot_general(q * hm, k, (((1,), (1,)), ((), ())),
                                preferred_element_type=jnp.float32) * scale + bias
        s = s - jnp.max(s, axis=-1, keepdims=True)
        p = jnp.exp(s)                                                  # unnormalized
        ctx = ctx + jnp.dot(p, v * hm, preferred_element_type=jnp.float32)
        den = den + jnp.sum(p, axis=-1, keepdims=True) * hm
    ctx = ctx * pl.reciprocal(den, approx=True)

    # --- output projection, residual + LayerNorm (dropout = identity) ---
    attn = jnp.dot(ctx, wo_ref[...], preferred_element_type=jnp.float32) + bo_ref[...]
    x1 = _layer_norm(x + attn, ln1g_ref[...], ln1b_ref[...])

    # --- feed-forward (bf16 MXU operands, f32 accumulate / bias / ReLU) ---
    h1 = jnp.dot(x1.astype(jnp.bfloat16), w1_ref[...],
                 preferred_element_type=jnp.float32) + b1_ref[...]
    h1 = jnp.maximum(h1, 0.0)
    ff = jnp.dot(h1.astype(jnp.bfloat16), w2_ref[...],
                 preferred_element_type=jnp.float32) + b2_ref[...]

    # --- residual + LayerNorm, carry to next layer ---
    x2 = _layer_norm(x1 + ff, ln2g_ref[...], ln2b_ref[...])
    x_scr[...] = x2

    @pl.when(layer == pl.num_programs(0) - 1)
    def _():
        o_ref[...] = x2               # single narrow store of the fused result


@jax.jit
def mini_transformer(input_ids, emb_bf16, pe_bs, attn_bias, head_mask, stacked):
    """input_ids: (B, S) int32. Returns (B, S, D) float32."""
    ids2d = input_ids.reshape(N_TOK, 1).astype(jnp.int32)

    def full(shape):
        return pl.BlockSpec(shape, lambda l: (0,) * len(shape))

    def per_layer(shape):
        return pl.BlockSpec((None,) + shape, lambda l: (l,) + (0,) * len(shape))

    in_specs = [
        full((N_TOK, 1)),                       # token ids
        full((VOCAB_SIZE, D_MODEL)),            # embedding table (bf16)
        full((N_TOK, D_MODEL)),                 # positional encoding slab
        full((N_TOK, N_TOK)),                   # block-diagonal attention bias
        full((NUM_HEADS, D_MODEL)),             # per-head lane masks
        per_layer((D_MODEL, 3 * D_MODEL)),      # wqkv (f32)
        per_layer((1, 3 * D_MODEL)),            # bqkv
        per_layer((D_MODEL, D_MODEL)),          # wo
        per_layer((1, D_MODEL)),                # bo
        per_layer((1, D_MODEL)),                # ln1 gamma
        per_layer((1, D_MODEL)),                # ln1 beta
        per_layer((D_MODEL, DIM_FF)),           # w1 (bf16)
        per_layer((1, DIM_FF)),                 # b1
        per_layer((DIM_FF, D_MODEL)),           # w2 (bf16)
        per_layer((1, D_MODEL)),                # b2
        per_layer((1, D_MODEL)),                # ln2 gamma
        per_layer((1, D_MODEL)),                # ln2 beta
    ]

    out_flat = pl.pallas_call(
        fused_transformer_kernel,
        out_shape=jax.ShapeDtypeStruct((N_TOK, D_MODEL), jnp.float32),
        grid_spec=pltpu.PrefetchScalarGridSpec(
            num_scalar_prefetch=0,
            grid=(NUM_LAYERS,),
            in_specs=in_specs,
            out_specs=pl.BlockSpec((N_TOK, D_MODEL), lambda l: (0, 0)),
            scratch_shapes=[pltpu.VMEM((N_TOK, D_MODEL), jnp.float32)],
        ),
        compiler_params=pltpu.CompilerParams(
            dimension_semantics=("arbitrary",)),
        cost_estimate=pl.CostEstimate(
            flops=26_000_000, transcendentals=320, bytes_accessed=1_500_000),
    )(ids2d, emb_bf16, pe_bs, attn_bias, head_mask, *stacked)

    return out_flat.reshape(BATCH, SEQ_LEN, D_MODEL)


# ---------------- parameter init (deterministic, in-script) ----------------
def make_params(key):
    def linear(key, fan_in, fan_out):
        kw, kb = jax.random.split(key)
        bound = 1.0 / math.sqrt(fan_in)
        w = jax.random.uniform(kw, (fan_in, fan_out), jnp.float32, -bound, bound)
        b = jax.random.uniform(kb, (1, fan_out), jnp.float32, -bound, bound)
        return w, b

    keys = jax.random.split(key, NUM_LAYERS * 6 + 1)
    emb = jax.random.normal(keys[0], (VOCAB_SIZE, D_MODEL), jnp.float32)

    layers = []
    for l in range(NUM_LAYERS):
        k = keys[1 + 6 * l: 1 + 6 * (l + 1)]
        wq, bq = linear(k[0], D_MODEL, D_MODEL)
        wk, bk = linear(k[1], D_MODEL, D_MODEL)
        wv, bv = linear(k[2], D_MODEL, D_MODEL)
        wo, bo = linear(k[3], D_MODEL, D_MODEL)
        w1, b1 = linear(k[4], D_MODEL, DIM_FF)
        w2, b2 = linear(k[5], DIM_FF, D_MODEL)
        layers.append(dict(
            wq=wq, bq=bq, wk=wk, bk=bk, wv=wv, bv=bv, wo=wo, bo=bo,
            ln1_g=jnp.ones((1, D_MODEL), jnp.float32),
            ln1_b=jnp.zeros((1, D_MODEL), jnp.float32),
            w1=w1, b1=b1, w2=w2, b2=b2,
            ln2_g=jnp.ones((1, D_MODEL), jnp.float32),
            ln2_b=jnp.zeros((1, D_MODEL), jnp.float32),
        ))
    return emb, layers


def positional_encoding(max_len, d_model):
    position = jnp.arange(max_len, dtype=jnp.float32)[:, None]
    div_term = jnp.exp(
        jnp.arange(0, d_model, 2, dtype=jnp.float32) * (-math.log(10000.0) / d_model)
    )
    pe = jnp.zeros((max_len, d_model), jnp.float32)
    pe = pe.at[:, 0::2].set(jnp.sin(position * div_term))
    pe = pe.at[:, 1::2].set(jnp.cos(position * div_term))
    return pe


def prepare_inputs(emb, layer_params):
    """One-time host-side prep: bf16 casts, QKV fusion, per-layer stacking."""
    emb_bf16 = emb.astype(jnp.bfloat16)

    pe = positional_encoding(MAX_LEN, D_MODEL)
    pe_bs = jnp.tile(pe[:SEQ_LEN], (BATCH, 1))                         # (B*S, D)

    tok_batch = jnp.arange(N_TOK) // SEQ_LEN
    attn_bias = jnp.where(tok_batch[:, None] == tok_batch[None, :],
                          0.0, -1e30).astype(jnp.float32)              # (B*S, B*S)
    head_mask = (jnp.arange(D_MODEL)[None, :] // D_K
                 == jnp.arange(NUM_HEADS)[:, None]).astype(jnp.float32)  # (H, D)

    def st(fn):
        return jnp.stack([fn(p) for p in layer_params], axis=0)

    stacked = [
        st(lambda p: jnp.concatenate([p["wq"], p["wk"], p["wv"]], axis=1)),  # (L,32,96)
        st(lambda p: jnp.concatenate([p["bq"], p["bk"], p["bv"]], axis=1)),  # (L,1,96)
        st(lambda p: p["wo"]),
        st(lambda p: p["bo"]),
        st(lambda p: p["ln1_g"]),
        st(lambda p: p["ln1_b"]),
        st(lambda p: p["w1"].astype(jnp.bfloat16)),
        st(lambda p: p["b1"]),
        st(lambda p: p["w2"].astype(jnp.bfloat16)),
        st(lambda p: p["b2"]),
        st(lambda p: p["ln2_g"]),
        st(lambda p: p["ln2_b"]),
    ]
    return emb_bf16, pe_bs, attn_bias, head_mask, stacked


if __name__ == "__main__":
    key = jax.random.PRNGKey(0)
    k_param, k_ids = jax.random.split(key)

    emb_table, layer_params = make_params(k_param)
    emb_bf16, pe_bs, attn_bias, head_mask, stacked = prepare_inputs(
        emb_table, layer_params)

    input_ids = jax.random.randint(k_ids, (BATCH, SEQ_LEN), 0, VOCAB_SIZE, jnp.int32)

    out = mini_transformer(input_ids, emb_bf16, pe_bs, attn_bias, head_mask, stacked)
    out = jax.block_until_ready(out)

    assert out.shape == (BATCH, SEQ_LEN, D_MODEL)
    assert out.dtype == jnp.float32
    assert bool(jnp.all(jnp.isfinite(out)))
    print("KERNEL_OK")
</pallas_src>

<mosaic_0001>
module attributes {stable_mosaic.version = 11 : i64} {
  func.func @fused_transformer_kernel(%arg0: i32, %arg1: memref<20x1xi32, #tpu.memory_space<vmem>>, %arg2: memref<1000x32xbf16, #tpu.memory_space<vmem>>, %arg3: memref<20x32xf32, #tpu.memory_space<vmem>>, %arg4: memref<20x20xf32, #tpu.memory_space<vmem>>, %arg5: memref<4x32xf32, #tpu.memory_space<vmem>>, %arg6: memref<1x32x96xf32, #tpu.memory_space<vmem>>, %arg7: memref<1x1x96xf32, #tpu.memory_space<vmem>>, %arg8: memref<1x32x32xf32, #tpu.memory_space<vmem>>, %arg9: memref<1x1x32xf32, #tpu.memory_space<vmem>>, %arg10: memref<1x1x32xf32, #tpu.memory_space<vmem>>, %arg11: memref<1x1x32xf32, #tpu.memory_space<vmem>>, %arg12: memref<1x32x2048xbf16, #tpu.memory_space<vmem>>, %arg13: memref<1x1x2048xf32, #tpu.memory_space<vmem>>, %arg14: memref<1x2048x32xbf16, #tpu.memory_space<vmem>>, %arg15: memref<1x1x32xf32, #tpu.memory_space<vmem>>, %arg16: memref<1x1x32xf32, #tpu.memory_space<vmem>>, %arg17: memref<1x1x32xf32, #tpu.memory_space<vmem>>, %arg18: memref<20x32xf32, #tpu.memory_space<vmem>>, %arg19: memref<20x32xf32, #tpu.memory_space<vmem>>) attributes {dimension_semantics = [#tpu.dimension_semantics<arbitrary>], iteration_bounds = array<i64: 2>, scalar_prefetch = 0 : i64, scratch_operands = 1 : i64, tpu.core_type = #tpu.core_type<tc>, window_params = [{pipeline_mode = #tpu.pipeline_mode<synchronous>, transform_indices = @transform_0, window_bounds = array<i64: 20, 1>}, {pipeline_mode = #tpu.pipeline_mode<synchronous>, transform_indices = @transform_1, window_bounds = array<i64: 1000, 32>}, {pipeline_mode = #tpu.pipeline_mode<synchronous>, transform_indices = @transform_2, window_bounds = array<i64: 20, 32>}, {pipeline_mode = #tpu.pipeline_mode<synchronous>, transform_indices = @transform_3, window_bounds = array<i64: 20, 20>}, {pipeline_mode = #tpu.pipeline_mode<synchronous>, transform_indices = @transform_4, window_bounds = array<i64: 4, 32>}, {transform_indices = @transform_5, window_bounds = array<i64: 1, 32, 96>}, {transform_indices = @transform_6, window_bounds = array<i64: 1, 1, 96>}, {transform_indices = @transform_7, window_bounds = array<i64: 1, 32, 32>}, {transform_indices = @transform_8, window_bounds = array<i64: 1, 1, 32>}, {transform_indices = @transform_9, window_bounds = array<i64: 1, 1, 32>}, {transform_indices = @transform_10, window_bounds = array<i64: 1, 1, 32>}, {transform_indices = @transform_11, window_bounds = array<i64: 1, 32, 2048>}, {transform_indices = @transform_12, window_bounds = array<i64: 1, 1, 2048>}, {transform_indices = @transform_13, window_bounds = array<i64: 1, 2048, 32>}, {transform_indices = @transform_14, window_bounds = array<i64: 1, 1, 32>}, {transform_indices = @transform_15, window_bounds = array<i64: 1, 1, 32>}, {transform_indices = @transform_16, window_bounds = array<i64: 1, 1, 32>}, {pipeline_mode = #tpu.pipeline_mode<synchronous>, transform_indices = @transform_17, window_bounds = array<i64: 20, 32>}]} {
    %c0_i32 = arith.constant 0 : i32
    %0 = arith.cmpi eq, %arg0, %c0_i32 : i32
    %1 = arith.extui %0 : i1 to i32
    %c0_i32_0 = arith.constant 0 : i32
    %2 = arith.cmpi ne, %1, %c0_i32_0 : i32
    scf.if %2 {
      %190 = tpu.iota {dimensions = array<i32: 1>} : vector<20x1000xi32>
      %c0_84 = arith.constant 0 : index
      %c0_85 = arith.constant 0 : index
      %191 = vector.load %arg1[%c0_84, %c0_85] : memref<20x1xi32, #tpu.memory_space<vmem>>, vector<20x1xi32>
      %192 = vector.broadcast %191 : vector<20x1xi32> to vector<20x1000xi32>
      %193 = arith.cmpi eq, %192, %190 : vector<20x1000xi32>
      %194 = arith.extui %193 : vector<20x1000xi1> to vector<20x1000xi32>
      %195 = arith.sitofp %194 : vector<20x1000xi32> to vector<20x1000xf32>
      %196 = arith.truncf %195 : vector<20x1000xf32> to vector<20x1000xbf16>
      %c0_86 = arith.constant 0 : index
      %c0_87 = arith.constant 0 : index
      %197 = vector.load %arg2[%c0_86, %c0_87] : memref<1000x32xbf16, #tpu.memory_space<vmem>>, vector<1000x32xbf16>
      %cst_88 = arith.constant dense<0.000000e+00> : vector<20x32xf32>
      %198 = tpu.matmul %196, %197, %cst_88 {dimension_numbers = #tpu.dot_dimension_numbers<[1], [0], [0], [1], [0, 0, 1, 1], [], []>} : vector<20x1000xbf16>, vector<1000x32xbf16>, vector<20x32xf32> -> vector<20x32xf32>
      %c0_89 = arith.constant 0 : index
      %c0_90 = arith.constant 0 : index
      %199 = vector.load %arg3[%c0_89, %c0_90] : memref<20x32xf32, #tpu.memory_space<vmem>>, vector<20x32xf32>
      %200 = arith.addf %198, %199 : vector<20x32xf32>
      %c0_91 = arith.constant 0 : index
      %c0_92 = arith.constant 0 : index
      %201 = vector.load %arg19[%c0_91, %c0_92] : memref<20x32xf32, #tpu.memory_space<vmem>>, vector<20x32xf32>
      tpu.vector_store %arg19[%c0_91, %c0_92], %200 {strides = array<i32>} : memref<20x32xf32, #tpu.memory_space<vmem>>, vector<20x32xf32>,
    } else {
    }
    %c0 = arith.constant 0 : index
    %c0_1 = arith.constant 0 : index
    %3 = vector.load %arg19[%c0, %c0_1] : memref<20x32xf32, #tpu.memory_space<vmem>>, vector<20x32xf32>
    %c0_2 = arith.constant 0 : index
    %c0_3 = arith.constant 0 : index
    %4 = vector.load %arg4[%c0_2, %c0_3] : memref<20x20xf32, #tpu.memory_space<vmem>>, vector<20x20xf32>
    %c0_4 = arith.constant 0 : index
    %c0_5 = arith.constant 0 : index
    %c0_6 = arith.constant 0 : index
    %5 = vector.load %arg6[%c0_4, %c0_5, %c0_6] : memref<1x32x96xf32, #tpu.memory_space<vmem>>, vector<1x32x96xf32>
    %6 = vector.shape_cast %5 : vector<1x32x96xf32> to vector<32x96xf32>
    %cst = arith.constant dense<0.000000e+00> : vector<20x96xf32>
    %7 = tpu.matmul %3, %6, %cst {dimension_numbers = #tpu.dot_dimension_numbers<[1], [0], [0], [1], [0, 0, 1, 1], [], []>} : vector<20x32xf32>, vector<32x96xf32>, vector<20x96xf32> -> vector<20x96xf32>
    %c0_7 = arith.constant 0 : index
    %c0_8 = arith.constant 0 : index
    %c0_9 = arith.constant 0 : index
    %8 = vector.load %arg7[%c0_7, %c0_8, %c0_9] : memref<1x1x96xf32, #tpu.memory_space<vmem>>, vector<1x1x96xf32>
    %9 = vector.shape_cast %8 : vector<1x1x96xf32> to vector<1x96xf32>
    %10 = vector.broadcast %9 : vector<1x96xf32> to vector<20x96xf32>
    %11 = arith.addf %7, %10 : vector<20x96xf32>
    %12 = vector.extract_strided_slice %11 {offsets = [0, 0], sizes = [20, 32], strides = [1, 1]} : vector<20x96xf32> to vector<20x32xf32>
    %13 = vector.extract_strided_slice %11 {offsets = [0, 32], sizes = [20, 32], strides = [1, 1]} : vector<20x96xf32> to vector<20x32xf32>
    %14 = vector.extract_strided_slice %11 {offsets = [0, 64], sizes = [20, 32], strides = [1, 1]} : vector<20x96xf32> to vector<20x32xf32>
    %cst_10 = arith.constant 0.000000e+00 : f32
    %15 = vector.broadcast %cst_10 : f32 to vector<20x32xf32>
    %cst_11 = arith.constant 0.000000e+00 : f32
    %16 = vector.broadcast %cst_11 : f32 to vector<20x32xf32>
    %c0_12 = arith.constant 0 : index
    %c0_13 = arith.constant 0 : index
    %17 = vector.load %arg5[%c0_12, %c0_13] : memref<4x32xf32, #tpu.memory_space<vmem>>, vector<1x32xf32>
    %18 = vector.broadcast %17 : vector<1x32xf32> to vector<20x32xf32>
    %19 = arith.mulf %12, %18 : vector<20x32xf32>
    %cst_14 = arith.constant dense<0.000000e+00> : vector<20x20xf32>
    %20 = tpu.matmul %19, %13, %cst_14 {dimension_numbers = #tpu.dot_dimension_numbers<[1], [1], [0], [0], [0, 0, 1, 0], [], []>} : vector<20x32xf32>, vector<20x32xf32>, vector<20x20xf32> -> vector<20x20xf32>
    %cst_15 = arith.constant 0.353553385 : f32
    %21 = vector.broadcast %cst_15 : f32 to vector<20x20xf32>
    %22 = arith.mulf %20, %21 : vector<20x20xf32>
    %23 = arith.addf %22, %4 : vector<20x20xf32>
    %cst_16 = arith.constant dense<0xFF800000> : vector<20xf32>
    %24 = vector.multi_reduction <maximumf>, %23, %cst_16 [1] : vector<20x20xf32> to vector<20xf32>
    %25 = vector.shape_cast %24 : vector<20xf32> to vector<20x1xf32>
    %26 = vector.broadcast %25 : vector<20x1xf32> to vector<20x20xf32>
    %27 = arith.subf %23, %26 : vector<20x20xf32>
    %28 = math.exp %27 : vector<20x20xf32>
    %29 = vector.broadcast %17 : vector<1x32xf32> to vector<20x32xf32>
    %30 = arith.mulf %14, %29 : vector<20x32xf32>
    %cst_17 = arith.constant dense<0.000000e+00> : vector<20x32xf32>
    %31 = tpu.matmul %28, %30, %cst_17 {dimension_numbers = #tpu.dot_dimension_numbers<[1], [0], [0], [1], [0, 0, 1, 1], [], []>} : vector<20x20xf32>, vector<20x32xf32>, vector<20x32xf32> -> vector<20x32xf32>
    %32 = arith.addf %15, %31 : vector<20x32xf32>
    %cst_18 = arith.constant dense<0.000000e+00> : vector<20xf32>
    %33 = vector.multi_reduction <add>, %28, %cst_18 [1] : vector<20x20xf32> to vector<20xf32>
    %34 = vector.shape_cast %33 : vector<20xf32> to vector<20x1xf32>
    %35 = vector.broadcast %34 : vector<20x1xf32> to vector<20x32xf32>
    %36 = vector.broadcast %17 : vector<1x32xf32> to vector<20x32xf32>
    %37 = arith.mulf %35, %36 : vector<20x32xf32>
    %38 = arith.addf %16, %37 : vector<20x32xf32>
    %c1 = arith.constant 1 : index
    %c0_19 = arith.constant 0 : index
    %39 = vector.load %arg5[%c1, %c0_19] : memref<4x32xf32, #tpu.memory_space<vmem>>, vector<1x32xf32>
    %40 = vector.broadcast %39 : vector<1x32xf32> to vector<20x32xf32>
    %41 = arith.mulf %12, %40 : vector<20x32xf32>
    %cst_20 = arith.constant dense<0.000000e+00> : vector<20x20xf32>
    %42 = tpu.matmul %41, %13, %cst_20 {dimension_numbers = #tpu.dot_dimension_numbers<[1], [1], [0], [0], [0, 0, 1, 0], [], []>} : vector<20x32xf32>, vector<20x32xf32>, vector<20x20xf32> -> vector<20x20xf32>
    %cst_21 = arith.constant 0.353553385 : f32
    %43 = vector.broadcast %cst_21 : f32 to vector<20x20xf32>
    %44 = arith.mulf %42, %43 : vector<20x20xf32>
    %45 = arith.addf %44, %4 : vector<20x20xf32>
    %cst_22 = arith.constant dense<0xFF800000> : vector<20xf32>
    %46 = vector.multi_reduction <maximumf>, %45, %cst_22 [1] : vector<20x20xf32> to vector<20xf32>
    %47 = vector.shape_cast %46 : vector<20xf32> to vector<20x1xf32>
    %48 = vector.broadcast %47 : vector<20x1xf32> to vector<20x20xf32>
    %49 = arith.subf %45, %48 : vector<20x20xf32>
    %50 = math.exp %49 : vector<20x20xf32>
    %51 = vector.broadcast %39 : vector<1x32xf32> to vector<20x32xf32>
    %52 = arith.mulf %14, %51 : vector<20x32xf32>
    %cst_23 = arith.constant dense<0.000000e+00> : vector<20x32xf32>
    %53 = tpu.matmul %50, %52, %cst_23 {dimension_numbers = #tpu.dot_dimension_numbers<[1], [0], [0], [1], [0, 0, 1, 1], [], []>} : vector<20x20xf32>, vector<20x32xf32>, vector<20x32xf32> -> vector<20x32xf32>
    %54 = arith.addf %32, %53 : vector<20x32xf32>
    %cst_24 = arith.constant dense<0.000000e+00> : vector<20xf32>
    %55 = vector.multi_reduction <add>, %50, %cst_24 [1] : vector<20x20xf32> to vector<20xf32>
    %56 = vector.shape_cast %55 : vector<20xf32> to vector<20x1xf32>
    %57 = vector.broadcast %56 : vector<20x1xf32> to vector<20x32xf32>
    %58 = vector.broadcast %39 : vector<1x32xf32> to vector<20x32xf32>
    %59 = arith.mulf %57, %58 : vector<20x32xf32>
    %60 = arith.addf %38, %59 : vector<20x32xf32>
    %c2 = arith.constant 2 : index
    %c0_25 = arith.constant 0 : index
    %61 = vector.load %arg5[%c2, %c0_25] : memref<4x32xf32, #tpu.memory_space<vmem>>, vector<1x32xf32>
    %62 = vector.broadcast %61 : vector<1x32xf32> to vector<20x32xf32>
    %63 = arith.mulf %12, %62 : vector<20x32xf32>
    %cst_26 = arith.constant dense<0.000000e+00> : vector<20x20xf32>
    %64 = tpu.matmul %63, %13, %cst_26 {dimension_numbers = #tpu.dot_dimension_numbers<[1], [1], [0], [0], [0, 0, 1, 0], [], []>} : vector<20x32xf32>, vector<20x32xf32>, vector<20x20xf32> -> vector<20x20xf32>
    %cst_27 = arith.constant 0.353553385 : f32
    %65 = vector.broadcast %cst_27 : f32 to vector<20x20xf32>
    %66 = arith.mulf %64, %65 : vector<20x20xf32>
    %67 = arith.addf %66, %4 : vector<20x20xf32>
    %cst_28 = arith.constant dense<0xFF800000> : vector<20xf32>
    %68 = vector.multi_reduction <maximumf>, %67, %cst_28 [1] : vector<20x20xf32> to vector<20xf32>
    %69 = vector.shape_cast %68 : vector<20xf32> to vector<20x1xf32>
    %70 = vector.broadcast %69 : vector<20x1xf32> to vector<20x20xf32>
    %71 = arith.subf %67, %70 : vector<20x20xf32>
    %72 = math.exp %71 : vector<20x20xf32>
    %73 = vector.broadcast %61 : vector<1x32xf32> to vector<20x32xf32>
    %74 = arith.mulf %14, %73 : vector<20x32xf32>
    %cst_29 = arith.constant dense<0.000000e+00> : vector<20x32xf32>
    %75 = tpu.matmul %72, %74, %cst_29 {dimension_numbers = #tpu.dot_dimension_numbers<[1], [0], [0], [1], [0, 0, 1, 1], [], []>} : vector<20x20xf32>, vector<20x32xf32>, vector<20x32xf32> -> vector<20x32xf32>
    %76 = arith.addf %54, %75 : vector<20x32xf32>
    %cst_30 = arith.constant dense<0.000000e+00> : vector<20xf32>
    %77 = vector.multi_reduction <add>, %72, %cst_30 [1] : vector<20x20xf32> to vector<20xf32>
    %78 = vector.shape_cast %77 : vector<20xf32> to vector<20x1xf32>
    %79 = vector.broadcast %78 : vector<20x1xf32> to vector<20x32xf32>
    %80 = vector.broadcast %61 : vector<1x32xf32> to vector<20x32xf32>
    %81 = arith.mulf %79, %80 : vector<20x32xf32>
    %82 = arith.addf %60, %81 : vector<20x32xf32>
    %c3 = arith.constant 3 : index
    %c0_31 = arith.constant 0 : index
    %83 = vector.load %arg5[%c3, %c0_31] : memref<4x32xf32, #tpu.memory_space<vmem>>, vector<1x32xf32>
    %84 = vector.broadcast %83 : vector<1x32xf32> to vector<20x32xf32>
    %85 = arith.mulf %12, %84 : vector<20x32xf32>
    %cst_32 = arith.constant dense<0.000000e+00> : vector<20x20xf32>
    %86 = tpu.matmul %85, %13, %cst_32 {dimension_numbers = #tpu.dot_dimension_numbers<[1], [1], [0], [0], [0, 0, 1, 0], [], []>} : vector<20x32xf32>, vector<20x32xf32>, vector<20x20xf32> -> vector<20x20xf32>
    %cst_33 = arith.constant 0.353553385 : f32
    %87 = vector.broadcast %cst_33 : f32 to vector<20x20xf32>
    %88 = arith.mulf %86, %87 : vector<20x20xf32>
    %89 = arith.addf %88, %4 : vector<20x20xf32>
    %cst_34 = arith.constant dense<0xFF800000> : vector<20xf32>
    %90 = vector.multi_reduction <maximumf>, %89, %cst_34 [1] : vector<20x20xf32> to vector<20xf32>
    %91 = vector.shape_cast %90 : vector<20xf32> to vector<20x1xf32>
    %92 = vector.broadcast %91 : vector<20x1xf32> to vector<20x20xf32>
    %93 = arith.subf %89, %92 : vector<20x20xf32>
    %94 = math.exp %93 : vector<20x20xf32>
    %95 = vector.broadcast %83 : vector<1x32xf32> to vector<20x32xf32>
    %96 = arith.mulf %14, %95 : vector<20x32xf32>
    %cst_35 = arith.constant dense<0.000000e+00> : vector<20x32xf32>
    %97 = tpu.matmul %94, %96, %cst_35 {dimension_numbers = #tpu.dot_dimension_numbers<[1], [0], [0], [1], [0, 0, 1, 1], [], []>} : vector<20x20xf32>, vector<20x32xf32>, vector<20x32xf32> -> vector<20x32xf32>
    %98 = arith.addf %76, %97 : vector<20x32xf32>
    %cst_36 = arith.constant dense<0.000000e+00> : vector<20xf32>
    %99 = vector.multi_reduction <add>, %94, %cst_36 [1] : vector<20x20xf32> to vector<20xf32>
    %100 = vector.shape_cast %99 : vector<20xf32> to vector<20x1xf32>
    %101 = vector.broadcast %100 : vector<20x1xf32> to vector<20x32xf32>
    %102 = vector.broadcast %83 : vector<1x32xf32> to vector<20x32xf32>
    %103 = arith.mulf %101, %102 : vector<20x32xf32>
    %104 = arith.addf %82, %103 : vector<20x32xf32>
    %105 = tpu.reciprocal %104 {approx = true} : vector<20x32xf32> -> vector<20x32xf32>
    %106 = arith.mulf %98, %105 : vector<20x32xf32>
    %c0_37 = arith.constant 0 : index
    %c0_38 = arith.constant 0 : index
    %c0_39 = arith.constant 0 : index
    %107 = vector.load %arg8[%c0_37, %c0_38, %c0_39] : memref<1x32x32xf32, #tpu.memory_space<vmem>>, vector<1x32x32xf32>
    %108 = vector.shape_cast %107 : vector<1x32x32xf32> to vector<32x32xf32>
    %cst_40 = arith.constant dense<0.000000e+00> : vector<20x32xf32>
    %109 = tpu.matmul %106, %108, %cst_40 {dimension_numbers = #tpu.dot_dimension_numbers<[1], [0], [0], [1], [0, 0, 1, 1], [], []>} : vector<20x32xf32>, vector<32x32xf32>, vector<20x32xf32> -> vector<20x32xf32>
    %c0_41 = arith.constant 0 : index
    %c0_42 = arith.constant 0 : index
    %c0_43 = arith.constant 0 : index
    %110 = vector.load %arg9[%c0_41, %c0_42, %c0_43] : memref<1x1x32xf32, #tpu.memory_space<vmem>>, vector<1x1x32xf32>
    %111 = vector.shape_cast %110 : vector<1x1x32xf32> to vector<1x32xf32>
    %112 = vector.broadcast %111 : vector<1x32xf32> to vector<20x32xf32>
    %113 = arith.addf %109, %112 : vector<20x32xf32>
    %114 = arith.addf %3, %113 : vector<20x32xf32>
    %c0_44 = arith.constant 0 : index
    %c0_45 = arith.constant 0 : index
    %c0_46 = arith.constant 0 : index
    %115 = vector.load %arg10[%c0_44, %c0_45, %c0_46] : memref<1x1x32xf32, #tpu.memory_space<vmem>>, vector<1x1x32xf32>
    %116 = vector.shape_cast %115 : vector<1x1x32xf32> to vector<1x32xf32>
    %c0_47 = arith.constant 0 : index
    %c0_48 = arith.constant 0 : index
    %c0_49 = arith.constant 0 : index
    %117 = vector.load %arg11[%c0_47, %c0_48, %c0_49] : memref<1x1x32xf32, #tpu.memory_space<vmem>>, vector<1x1x32xf32>
    %118 = vector.shape_cast %117 : vector<1x1x32xf32> to vector<1x32xf32>
    %cst_50 = arith.constant dense<0.000000e+00> : vector<20xf32>
    %119 = vector.multi_reduction <add>, %114, %cst_50 [1] : vector<20x32xf32> to vector<20xf32>
    %120 = vector.shape_cast %119 : vector<20xf32> to vector<20x1xf32>
    %cst_51 = arith.constant 3.200000e+01 : f32
    %121 = vector.broadcast %cst_51 : f32 to vector<20x1xf32>
    %122 = arith.divf %120, %121 : vector<20x1xf32>
    %123 = vector.broadcast %122 : vector<20x1xf32> to vector<20x32xf32>
    %124 = arith.subf %114, %123 : vector<20x32xf32>
    %125 = arith.mulf %124, %124 : vector<20x32xf32>
    %cst_52 = arith.constant dense<0.000000e+00> : vector<20xf32>
    %126 = vector.multi_reduction <add>, %125, %cst_52 [1] : vector<20x32xf32> to vector<20xf32>
    %127 = vector.shape_cast %126 : vector<20xf32> to vector<20x1xf32>
    %cst_53 = arith.constant 3.200000e+01 : f32
    %128 = vector.broadcast %cst_53 : f32 to vector<20x1xf32>
    %129 = arith.divf %127, %128 : vector<20x1xf32>
    %130 = vector.broadcast %122 : vector<20x1xf32> to vector<20x32xf32>
    %131 = arith.subf %114, %130 : vector<20x32xf32>
    %cst_54 = arith.constant 9.99999974E-6 : f32
    %132 = vector.broadcast %cst_54 : f32 to vector<20x1xf32>
    %133 = arith.addf %129, %132 : vector<20x1xf32>
    %134 = math.rsqrt %133 : vector<20x1xf32>
    %135 = vector.broadcast %134 : vector<20x1xf32> to vector<20x32xf32>
    %136 = arith.mulf %131, %135 : vector<20x32xf32>
    %137 = vector.broadcast %116 : vector<1x32xf32> to vector<20x32xf32>
    %138 = arith.mulf %136, %137 : vector<20x32xf32>
    %139 = vector.broadcast %118 : vector<1x32xf32> to vector<20x32xf32>
    %140 = arith.addf %138, %139 : vector<20x32xf32>
    %141 = arith.truncf %140 : vector<20x32xf32> to vector<20x32xbf16>
    %c0_55 = arith.constant 0 : index
    %c0_56 = arith.constant 0 : index
    %c0_57 = arith.constant 0 : index
    %142 = vector.load %arg12[%c0_55, %c0_56, %c0_57] : memref<1x32x2048xbf16, #tpu.memory_space<vmem>>, vector<1x32x2048xbf16>
    %143 = vector.shape_cast %142 : vector<1x32x2048xbf16> to vector<32x2048xbf16>
    %cst_58 = arith.constant dense<0.000000e+00> : vector<20x2048xf32>
    %144 = tpu.matmul %141, %143, %cst_58 {dimension_numbers = #tpu.dot_dimension_numbers<[1], [0], [0], [1], [0, 0, 1, 1], [], []>} : vector<20x32xbf16>, vector<32x2048xbf16>, vector<20x2048xf32> -> vector<20x2048xf32>
    %c0_59 = arith.constant 0 : index
    %c0_60 = arith.constant 0 : index
    %c0_61 = arith.constant 0 : index
    %145 = vector.load %arg13[%c0_59, %c0_60, %c0_61] : memref<1x1x2048xf32, #tpu.memory_space<vmem>>, vector<1x1x2048xf32>
    %146 = vector.shape_cast %145 : vector<1x1x2048xf32> to vector<1x2048xf32>
    %147 = vector.broadcast %146 : vector<1x2048xf32> to vector<20x2048xf32>
    %148 = arith.addf %144, %147 : vector<20x2048xf32>
    %cst_62 = arith.constant 0.000000e+00 : f32
    %149 = vector.broadcast %cst_62 : f32 to vector<20x2048xf32>
    %150 = arith.maximumf %148, %149 : vector<20x2048xf32>
    %151 = arith.truncf %150 : vector<20x2048xf32> to vector<20x2048xbf16>
    %c0_63 = arith.constant 0 : index
    %c0_64 = arith.constant 0 : index
    %c0_65 = arith.constant 0 : index
    %152 = vector.load %arg14[%c0_63, %c0_64, %c0_65] : memref<1x2048x32xbf16, #tpu.memory_space<vmem>>, vector<1x2048x32xbf16>
    %153 = vector.shape_cast %152 : vector<1x2048x32xbf16> to vector<2048x32xbf16>
    %cst_66 = arith.constant dense<0.000000e+00> : vector<20x32xf32>
    %154 = tpu.matmul %151, %153, %cst_66 {dimension_numbers = #tpu.dot_dimension_numbers<[1], [0], [0], [1], [0, 0, 1, 1], [], []>} : vector<20x2048xbf16>, vector<2048x32xbf16>, vector<20x32xf32> -> vector<20x32xf32>
    %c0_67 = arith.constant 0 : index
    %c0_68 = arith.constant 0 : index
    %c0_69 = arith.constant 0 : index
    %155 = vector.load %arg15[%c0_67, %c0_68, %c0_69] : memref<1x1x32xf32, #tpu.memory_space<vmem>>, vector<1x1x32xf32>
    %156 = vector.shape_cast %155 : vector<1x1x32xf32> to vector<1x32xf32>
    %157 = vector.broadcast %156 : vector<1x32xf32> to vector<20x32xf32>
    %158 = arith.addf %154, %157 : vector<20x32xf32>
    %159 = arith.addf %140, %158 : vector<20x32xf32>
    %c0_70 = arith.constant 0 : index
    %c0_71 = arith.constant 0 : index
    %c0_72 = arith.constant 0 : index
    %160 = vector.load %arg16[%c0_70, %c0_71, %c0_72] : memref<1x1x32xf32, #tpu.memory_space<vmem>>, vector<1x1x32xf32>
    %161 = vector.shape_cast %160 : vector<1x1x32xf32> to vector<1x32xf32>
    %c0_73 = arith.constant 0 : index
    %c0_74 = arith.constant 0 : index
    %c0_75 = arith.constant 0 : index
    %162 = vector.load %arg17[%c0_73, %c0_74, %c0_75] : memref<1x1x32xf32, #tpu.memory_space<vmem>>, vector<1x1x32xf32>
    %163 = vector.shape_cast %162 : vector<1x1x32xf32> to vector<1x32xf32>
    %cst_76 = arith.constant dense<0.000000e+00> : vector<20xf32>
    %164 = vector.multi_reduction <add>, %159, %cst_76 [1] : vector<20x32xf32> to vector<20xf32>
    %165 = vector.shape_cast %164 : vector<20xf32> to vector<20x1xf32>
    %cst_77 = arith.constant 3.200000e+01 : f32
    %166 = vector.broadcast %cst_77 : f32 to vector<20x1xf32>
    %167 = arith.divf %165, %166 : vector<20x1xf32>
    %168 = vector.broadcast %167 : vector<20x1xf32> to vector<20x32xf32>
    %169 = arith.subf %159, %168 : vector<20x32xf32>
    %170 = arith.mulf %169, %169 : vector<20x32xf32>
    %cst_78 = arith.constant dense<0.000000e+00> : vector<20xf32>
    %171 = vector.multi_reduction <add>, %170, %cst_78 [1] : vector<20x32xf32> to vector<20xf32>
    %172 = vector.shape_cast %171 : vector<20xf32> to vector<20x1xf32>
    %cst_79 = arith.constant 3.200000e+01 : f32
    %173 = vector.broadcast %cst_79 : f32 to vector<20x1xf32>
    %174 = arith.divf %172, %173 : vector<20x1xf32>
    %175 = vector.broadcast %167 : vector<20x1xf32> to vector<20x32xf32>
    %176 = arith.subf %159, %175 : vector<20x32xf32>
    %cst_80 = arith.constant 9.99999974E-6 : f32
    %177 = vector.broadcast %cst_80 : f32 to vector<20x1xf32>
    %178 = arith.addf %174, %177 : vector<20x1xf32>
    %179 = math.rsqrt %178 : vector<20x1xf32>
    %180 = vector.broadcast %179 : vector<20x1xf32> to vector<20x32xf32>
    %181 = arith.mulf %176, %180 : vector<20x32xf32>
    %182 = vector.broadcast %161 : vector<1x32xf32> to vector<20x32xf32>
    %183 = arith.mulf %181, %182 : vector<20x32xf32>
    %184 = vector.broadcast %163 : vector<1x32xf32> to vector<20x32xf32>
    %185 = arith.addf %183, %184 : vector<20x32xf32>
    %c0_81 = arith.constant 0 : index
    %c0_82 = arith.constant 0 : index
    %186 = vector.load %arg19[%c0_81, %c0_82] : memref<20x32xf32, #tpu.memory_space<vmem>>, vector<20x32xf32>
    tpu.vector_store %arg19[%c0_81, %c0_82], %185 {strides = array<i32>} : memref<20x32xf32, #tpu.memory_space<vmem>>, vector<20x32xf32>,
    %c1_i32 = arith.constant 1 : i32
    %187 = arith.cmpi eq, %arg0, %c1_i32 : i32
    %188 = arith.extui %187 : i1 to i32
    %c0_i32_83 = arith.constant 0 : i32
    %189 = arith.cmpi ne, %188, %c0_i32_83 : i32
    scf.if %189 {
      %c0_84 = arith.constant 0 : index
      %c0_85 = arith.constant 0 : index
      %190 = vector.load %arg18[%c0_84, %c0_85] : memref<20x32xf32, #tpu.memory_space<vmem>>, vector<20x32xf32>
      tpu.vector_store %arg18[%c0_84, %c0_85], %185 {strides = array<i32>} : memref<20x32xf32, #tpu.memory_space<vmem>>, vector<20x32xf32>,
    } else {
    }
    return
  }
  func.func @transform_0(%arg0: i32) -> (i32, i32) {
    %c0_i32 = arith.constant 0 : i32
    %c0_i32_0 = arith.constant 0 : i32
    %c0_i32_1 = arith.constant 0 : i32
    return %c0_i32, %c0_i32_0 : i32, i32
  }
  func.func @transform_1(%arg0: i32) -> (i32, i32) {
    %c0_i32 = arith.constant 0 : i32
    %c0_i32_0 = arith.constant 0 : i32
    %c0_i32_1 = arith.constant 0 : i32
    return %c0_i32, %c0_i32_0 : i32, i32
  }
  func.func @transform_2(%arg0: i32) -> (i32, i32) {
    %c0_i32 = arith.constant 0 : i32
    %c0_i32_0 = arith.constant 0 : i32
    %c0_i32_1 = arith.constant 0 : i32
    return %c0_i32, %c0_i32_0 : i32, i32
  }
  func.func @transform_3(%arg0: i32) -> (i32, i32) {
    %c0_i32 = arith.constant 0 : i32
    %c0_i32_0 = arith.constant 0 : i32
    %c0_i32_1 = arith.constant 0 : i32
    return %c0_i32, %c0_i32_0 : i32, i32
  }
  func.func @transform_4(%arg0: i32) -> (i32, i32) {
    %c0_i32 = arith.constant 0 : i32
    %c0_i32_0 = arith.constant 0 : i32
    %c0_i32_1 = arith.constant 0 : i32
    return %c0_i32, %c0_i32_0 : i32, i32
  }
  func.func @transform_5(%arg0: i32) -> (i32, i32, i32) {
    %c0_i32 = arith.constant 0 : i32
    %c0_i32_0 = arith.constant 0 : i32
    %c0_i32_1 = arith.constant 0 : i32
    return %arg0, %c0_i32, %c0_i32_0 : i32, i32, i32
  }
  func.func @transform_6(%arg0: i32) -> (i32, i32, i32) {
    %c0_i32 = arith.constant 0 : i32
    %c0_i32_0 = arith.constant 0 : i32
    %c0_i32_1 = arith.constant 0 : i32
    return %arg0, %c0_i32, %c0_i32_0 : i32, i32, i32
  }
  func.func @transform_7(%arg0: i32) -> (i32, i32, i32) {
    %c0_i32 = arith.constant 0 : i32
    %c0_i32_0 = arith.constant 0 : i32
    %c0_i32_1 = arith.constant 0 : i32
    return %arg0, %c0_i32, %c0_i32_0 : i32, i32, i32
  }
  func.func @transform_8(%arg0: i32) -> (i32, i32, i32) {
    %c0_i32 = arith.constant 0 : i32
    %c0_i32_0 = arith.constant 0 : i32
    %c0_i32_1 = arith.constant 0 : i32
    return %arg0, %c0_i32, %c0_i32_0 : i32, i32, i32
  }
  func.func @transform_9(%arg0: i32) -> (i32, i32, i32) {
    %c0_i32 = arith.constant 0 : i32
    %c0_i32_0 = arith.constant 0 : i32
    %c0_i32_1 = arith.constant 0 : i32
    return %arg0, %c0_i32, %c0_i32_0 : i32, i32, i32
  }
  func.func @transform_10(%arg0: i32) -> (i32, i32, i32) {
    %c0_i32 = arith.constant 0 : i32
    %c0_i32_0 = arith.constant 0 : i32
    %c0_i32_1 = arith.constant 0 : i32
    return %arg0, %c0_i32, %c0_i32_0 : i32, i32, i32
  }
  func.func @transform_11(%arg0: i32) -> (i32, i32, i32) {
    %c0_i32 = arith.constant 0 : i32
    %c0_i32_0 = arith.constant 0 : i32
    %c0_i32_1 = arith.constant 0 : i32
    return %arg0, %c0_i32, %c0_i32_0 : i32, i32, i32
  }
  func.func @transform_12(%arg0: i32) -> (i32, i32, i32) {
    %c0_i32 = arith.constant 0 : i32
    %c0_i32_0 = arith.constant 0 : i32
    %c0_i32_1 = arith.constant 0 : i32
    return %arg0, %c0_i32, %c0_i32_0 : i32, i32, i32
  }
  func.func @transform_13(%arg0: i32) -> (i32, i32, i32) {
    %c0_i32 = arith.constant 0 : i32
    %c0_i32_0 = arith.constant 0 : i32
    %c0_i32_1 = arith.constant 0 : i32
    return %arg0, %c0_i32, %c0_i32_0 : i32, i32, i32
  }
  func.func @transform_14(%arg0: i32) -> (i32, i32, i32) {
    %c0_i32 = arith.constant 0 : i32
    %c0_i32_0 = arith.constant 0 : i32
    %c0_i32_1 = arith.constant 0 : i32
    return %arg0, %c0_i32, %c0_i32_0 : i32, i32, i32
  }
  func.func @transform_15(%arg0: i32) -> (i32, i32, i32) {
    %c0_i32 = arith.constant 0 : i32
    %c0_i32_0 = arith.constant 0 : i32
    %c0_i32_1 = arith.constant 0 : i32
    return %arg0, %c0_i32, %c0_i32_0 : i32, i32, i32
  }
  func.func @transform_16(%arg0: i32) -> (i32, i32, i32) {
    %c0_i32 = arith.constant 0 : i32
    %c0_i32_0 = arith.constant 0 : i32
    %c0_i32_1 = arith.constant 0 : i32
    return %arg0, %c0_i32, %c0_i32_0 : i32, i32, i32
  }
  func.func @transform_17(%arg0: i32) -> (i32, i32) {
    %c0_i32 = arith.constant 0 : i32
    %c0_i32_0 = arith.constant 0 : i32
    %c0_i32_1 = arith.constant 0 : i32
    return %c0_i32, %c0_i32_0 : i32, i32
  }
}

</mosaic_0001>

<llo_original>
// kernel: mini_transformer.1
$region0: #{mini_transformer.1}
  #allocation0 [shape = 'u32[]', space=smem, size = 0x4, offset = 0x4, fixed_abs, tag = 'smem constant byte address 0x4 - core index']
  #allocation1 [shape = 'u32[144,128]{1,0:T(1,128)}', space=vmem, size = 0x12000, scoped, tag = 'internal scratch']
  #allocation2 [shape = 'f32[20,32]{1,0:T(8,128)}', space=vmem, size = 0x3000, scoped, tag = 'scratch operand']
  %s0 = inlined_call_operand.vmem [shape: s32[20,1], index: 0, kind: input, shape index: {}]
  %s1 = inlined_call_operand.vmem [shape: bf16[1000,32], index: 1, kind: input, shape index: {}]
  %s2 = inlined_call_operand.vmem [shape: f32[20,32], index: 2, kind: input, shape index: {}]
  %s3 = inlined_call_operand.vmem [shape: f32[20,20], index: 3, kind: input, shape index: {}]
  %s4 = inlined_call_operand.vmem [shape: f32[4,32], index: 4, kind: input, shape index: {}]
  %s5 = inlined_call_operand.vmem [shape: f32[2,32,96], index: 5, kind: input, shape index: {}]
  %s6 = inlined_call_operand.vmem [shape: f32[2,1,96], index: 6, kind: input, shape index: {}]
  %s7 = inlined_call_operand.vmem [shape: f32[2,32,32], index: 7, kind: input, shape index: {}]
  %s8 = inlined_call_operand.vmem [shape: f32[2,1,32], index: 8, kind: input, shape index: {}]
  %s9 = inlined_call_operand.vmem [shape: f32[2,1,32], index: 9, kind: input, shape index: {}]
  %s10 = inlined_call_operand.vmem [shape: f32[2,1,32], index: 10, kind: input, shape index: {}]
  %s11 = inlined_call_operand.vmem [shape: bf16[2,32,2048], index: 11, kind: input, shape index: {}]
  %s12 = inlined_call_operand.vmem [shape: f32[2,1,2048], index: 12, kind: input, shape index: {}]
  %s13 = inlined_call_operand.vmem [shape: bf16[2,2048,32], index: 13, kind: input, shape index: {}]
  %s14 = inlined_call_operand.vmem [shape: f32[2,1,32], index: 14, kind: input, shape index: {}]
  %s15 = inlined_call_operand.vmem [shape: f32[2,1,32], index: 15, kind: input, shape index: {}]
  %s16 = inlined_call_operand.vmem [shape: f32[2,1,32], index: 16, kind: input, shape index: {}]
  %s17 = inlined_call_operand.vmem [shape: f32[20,32], index: 17, kind: output, shape index: {}]
  %s18 = sld [smem:[#allocation0]]
  $region109: #{mini_transformer.1} parent=0
    _
  %s20 = ssub.s32 1, %s18
  %s21 = scalar_select 0, %s20, %s18
  loop: start=0, step=1, limit=4
  $region2: #{mini_transformer.1} parent=0 // loop_pre_header
    _
  $region3: #{mini_transformer.1} parent=0 // loop_header
    %s23 = sphi 0, %s27
    %p24 = scmp.ge.s32.totalorder %s23, 4
    %s31 = sphi 0, %s31
    %s33 = sphi 0, %s31
    %s34 = sphi 0, %s33
    %s48 = sphi 0, %s34
    %s52 = sphi 0, %s52
    %s54 = sphi 0, %s52
    %s55 = sphi 0, %s54
    %s69 = sphi 0, %s55
    %s73 = sphi 0, %s73
    %s75 = sphi 0, %s73
    %s76 = sphi 0, %s75
    %s90 = sphi 0, %s76
    %s94 = sphi 0, %s94
    %s96 = sphi 0, %s94
    %s97 = sphi 0, %s96
    %s111 = sphi 0, %s97
    %s115 = sphi 0, %s115
    %s117 = sphi 0, %s115
    %s118 = sphi 0, %s117
    %s132 = sphi 0, %s118
    %s138 = sphi 0, %s140
    %s141 = sphi 0, %s138
    %s142 = sphi 0, %s141
    %s158 = sphi 0, %s142
    %s164 = sphi 0, %s166
    %s167 = sphi 0, %s164
    %s168 = sphi 0, %s167
    %s184 = sphi 0, %s168
    %s190 = sphi 0, %s192
    %s193 = sphi 0, %s190
    %s194 = sphi 0, %s193
    %s210 = sphi 0, %s194
    %s216 = sphi 0, %s218
    %s219 = sphi 0, %s216
    %s220 = sphi 0, %s219
    %s236 = sphi 0, %s220
    %s242 = sphi 0, %s244
    %s245 = sphi 0, %s242
    %s246 = sphi 0, %s245
    %s262 = sphi 0, %s246
    %s268 = sphi 0, %s270
    %s271 = sphi 0, %s268
    %s272 = sphi 0, %s271
    %s288 = sphi 0, %s272
    %s294 = sphi 0, %s296
    %s297 = sphi 0, %s294
    %s298 = sphi 0, %s297
    %s314 = sphi 0, %s298
    %s320 = sphi 0, %s322
    %s323 = sphi 0, %s320
    %s324 = sphi 0, %s323
    %s340 = sphi 0, %s324
    %s346 = sphi 0, %s348
    %s349 = sphi 0, %s346
    %s350 = sphi 0, %s349
    %s366 = sphi 0, %s350
    %s372 = sphi 0, %s374
    %s375 = sphi 0, %s372
    %s376 = sphi 0, %s375
    %s392 = sphi 0, %s376
    %s398 = sphi 0, %s400
    %s401 = sphi 0, %s398
    %s402 = sphi 0, %s401
    %s418 = sphi 0, %s402
    %s424 = sphi 0, %s426
    %s427 = sphi 0, %s424
    %s428 = sphi 0, %s427
    %s444 = sphi 0, %s428
    %s448 = sphi 0, %s448
    %s450 = sphi 0, %s448
    %s451 = sphi 0, %s450
    %s465 = sphi 0, %s451
  $region4: #{mini_transformer.1} parent=0 // loop_header_branch
    %26 = sbr.rel (%p24) target = $region8
  $region5: #{mini_transformer.1} parent=0 // loop_body
    %s28 = ssub.s32 %s23, 1
    %s29 = ssub.s32 %s23, 2
    %s30 = sadd.s32 %s23, 1
    %s32 = sadd.s32 %s31, 1
    %p35 = scmp.eq.s32.totalorder %s23, 1
    %p36 = scmp.ne.s32.totalorder %s31, %s33
    %p37 = scmp.eq.s32.totalorder %s23, 0
    %p38 = por %p36, %p37
    %p39 = scmp.ne.s32.totalorder %s31, %s33
    %p40 = scmp.eq.s32.totalorder %s28, 1
    %p41 = por %p39, %p40
    %p42 = scmp.ne.s32.totalorder %s33, %s34
    %p43 = scmp.eq.s32.totalorder %s28, 0
    %p44 = por %p42, %p43
    %p45 = scmp.ne.s32.totalorder %s33, %s34
    %p46 = scmp.eq.s32.totalorder %s29, 1
    %p47 = por %p45, %p46
    %p49 = scmp.ne.s32.totalorder %s34, %s48
    %p50 = scmp.eq.s32.totalorder %s29, 0
    %p51 = por %p49, %p50
    %s53 = sadd.s32 %s52, 1
    %p56 = scmp.eq.s32.totalorder %s23, 1
    %p57 = scmp.ne.s32.totalorder %s52, %s54
    %p58 = scmp.eq.s32.totalorder %s23, 0
    %p59 = por %p57, %p58
    %p60 = scmp.ne.s32.totalorder %s52, %s54
    %p61 = scmp.eq.s32.totalorder %s28, 1
    %p62 = por %p60, %p61
    %p63 = scmp.ne.s32.totalorder %s54, %s55
    %p64 = scmp.eq.s32.totalorder %s28, 0
    %p65 = por %p63, %p64
    %p66 = scmp.ne.s32.totalorder %s54, %s55
    %p67 = scmp.eq.s32.totalorder %s29, 1
    %p68 = por %p66, %p67
    %p70 = scmp.ne.s32.totalorder %s55, %s69
    %p71 = scmp.eq.s32.totalorder %s29, 0
    %p72 = por %p70, %p71
    %s74 = sadd.s32 %s73, 1
    %p77 = scmp.eq.s32.totalorder %s23, 1
    %p78 = scmp.ne.s32.totalorder %s73, %s75
    %p79 = scmp.eq.s32.totalorder %s23, 0
    %p80 = por %p78, %p79
    %p81 = scmp.ne.s32.totalorder %s73, %s75
    %p82 = scmp.eq.s32.totalorder %s28, 1
    %p83 = por %p81, %p82
    %p84 = scmp.ne.s32.totalorder %s75, %s76
    %p85 = scmp.eq.s32.totalorder %s28, 0
    %p86 = por %p84, %p85
    %p87 = scmp.ne.s32.totalorder %s75, %s76
    %p88 = scmp.eq.s32.totalorder %s29, 1
    %p89 = por %p87, %p88
    %p91 = scmp.ne.s32.totalorder %s76, %s90
    %p92 = scmp.eq.s32.totalorder %s29, 0
    %p93 = por %p91, %p92
    %s95 = sadd.s32 %s94, 1
    %p98 = scmp.eq.s32.totalorder %s23, 1
    %p99 = scmp.ne.s32.totalorder %s94, %s96
    %p100 = scmp.eq.s32.totalorder %s23, 0
    %p101 = por %p99, %p100
    %p102 = scmp.ne.s32.totalorder %s94, %s96
    %p103 = scmp.eq.s32.totalorder %s28, 1
    %p104 = por %p102, %p103
    %p105 = scmp.ne.s32.totalorder %s96, %s97
    %p106 = scmp.eq.s32.totalorder %s28, 0
    %p107 = por %p105, %p106
    %p108 = scmp.ne.s32.totalorder %s96, %s97
    %p109 = scmp.eq.s32.totalorder %s29, 1
    %p110 = por %p108, %p109
    %p112 = scmp.ne.s32.totalorder %s97, %s111
    %p113 = scmp.eq.s32.totalorder %s29, 0
    %p114 = por %p112, %p113
    %s116 = sadd.s32 %s115, 1
    %p119 = scmp.eq.s32.totalorder %s23, 1
    %p120 = scmp.ne.s32.totalorder %s115, %s117
    %p121 = scmp.eq.s32.totalorder %s23, 0
    %p122 = por %p120, %p121
    %p123 = scmp.ne.s32.totalorder %s115, %s117
    %p124 = scmp.eq.s32.totalorder %s28, 1
    %p125 = por %p123, %p124
    %p126 = scmp.ne.s32.totalorder %s117, %s118
    %p127 = scmp.eq.s32.totalorder %s28, 0
    %p128 = por %p126, %p127
    %p129 = scmp.ne.s32.totalorder %s117, %s118
    %p130 = scmp.eq.s32.totalorder %s29, 1
    %p131 = por %p129, %p130
    %p133 = scmp.ne.s32.totalorder %s118, %s132
    %p134 = scmp.eq.s32.totalorder %s29, 0
    %p135 = por %p133, %p134
    %s136 = ssub.s32 %s23, %s30
    %p137 = scmp.eq.s32.totalorder %s136, 0
    %s139 = sadd.s32 %s138, 1
    %s140 = scalar_select %p137, %s138, %s139
    %p143 = pneg %p137
    %p144 = scmp.eq.s32.totalorder %s23, 1
    %p145 = por %p143, %p144
    %p146 = scmp.ne.s32.totalorder %s138, %s141
    %p147 = scmp.eq.s32.totalorder %s23, 0
    %p148 = por %p146, %p147
    %p149 = scmp.ne.s32.totalorder %s138, %s141
    %p150 = scmp.eq.s32.totalorder %s28, 1
    %p151 = por %p149, %p150
    %p152 = scmp.ne.s32.totalorder %s141, %s142
    %p153 = scmp.eq.s32.totalorder %s28, 0
    %p154 = por %p152, %p153
    %p155 = scmp.ne.s32.totalorder %s141, %s142
    %p156 = scmp.eq.s32.totalorder %s29, 1
    %p157 = por %p155, %p156
    %p159 = scmp.ne.s32.totalorder %s142, %s158
    %p160 = scmp.eq.s32.totalorder %s29, 0
    %p161 = por %p159, %p160
    %s162 = ssub.s32 %s23, %s30
    %p163 = scmp.eq.s32.totalorder %s162, 0
    %s165 = sadd.s32 %s164, 1
    %s166 = scalar_select %p163, %s164, %s165
    %p169 = pneg %p163
    %p170 = scmp.eq.s32.totalorder %s23, 1
    %p171 = por %p169, %p170
    %p172 = scmp.ne.s32.totalorder %s164, %s167
    %p173 = scmp.eq.s32.totalorder %s23, 0
    %p174 = por %p172, %p173
    %p175 = scmp.ne.s32.totalorder %s164, %s167
    %p176 = scmp.eq.s32.totalorder %s28, 1
    %p177 = por %p175, %p176
    %p178 = scmp.ne.s32.totalorder %s167, %s168
    %p179 = scmp.eq.s32.totalorder %s28, 0
    %p180 = por %p178, %p179
    %p181 = scmp.ne.s32.totalorder %s167, %s168
    %p182 = scmp.eq.s32.totalorder %s29, 1
    %p183 = por %p181, %p182
    %p185 = scmp.ne.s32.totalorder %s168, %s184
    %p186 = scmp.eq.s32.totalorder %s29, 0
    %p187 = por %p185, %p186
    %s188 = ssub.s32 %s23, %s30
    %p189 = scmp.eq.s32.totalorder %s188, 0
    %s191 = sadd.s32 %s190, 1
    %s192 = scalar_select %p189, %s190, %s191
    %p195 = pneg %p189
    %p196 = scmp.eq.s32.totalorder %s23, 1
    %p197 = por %p195, %p196
    %p198 = scmp.ne.s32.totalorder %s190, %s193
    %p199 = scmp.eq.s32.totalorder %s23, 0
    %p200 = por %p198, %p199
    %p201 = scmp.ne.s32.totalorder %s190, %s193
    %p202 = scmp.eq.s32.totalorder %s28, 1
    %p203 = por %p201, %p202
    %p204 = scmp.ne.s32.totalorder %s193, %s194
    %p205 = scmp.eq.s32.totalorder %s28, 0
    %p206 = por %p204, %p205
    %p207 = scmp.ne.s32.totalorder %s193, %s194
    %p208 = scmp.eq.s32.totalorder %s29, 1
    %p209 = por %p207, %p208
    %p211 = scmp.ne.s32.totalorder %s194, %s210
    %p212 = scmp.eq.s32.totalorder %s29, 0
    %p213 = por %p211, %p212
    %s214 = ssub.s32 %s23, %s30
    %p215 = scmp.eq.s32.totalorder %s214, 0
    %s217 = sadd.s32 %s216, 1
    %s218 = scalar_select %p215, %s216, %s217
    %p221 = pneg %p215
    %p222 = scmp.eq.s32.totalorder %s23, 1
    %p223 = por %p221, %p222
    %p224 = scmp.ne.s32.totalorder %s216, %s219
    %p225 = scmp.eq.s32.totalorder %s23, 0
    %p226 = por %p224, %p225
    %p227 = scmp.ne.s32.totalorder %s216, %s219
    %p228 = scmp.eq.s32.totalorder %s28, 1
    %p229 = por %p227, %p228
    %p230 = scmp.ne.s32.totalorder %s219, %s220
    %p231 = scmp.eq.s32.totalorder %s28, 0
    %p232 = por %p230, %p231
    %p233 = scmp.ne.s32.totalorder %s219, %s220
    %p234 = scmp.eq.s32.totalorder %s29, 1
    %p235 = por %p233, %p234
    %p237 = scmp.ne.s32.totalorder %s220, %s236
    %p238 = scmp.eq.s32.totalorder %s29, 0
    %p239 = por %p237, %p238
    %s240 = ssub.s32 %s23, %s30
    %p241 = scmp.eq.s32.totalorder %s240, 0
    %s243 = sadd.s32 %s242, 1
    %s244 = scalar_select %p241, %s242, %s243
    %p247 = pneg %p241
    %p248 = scmp.eq.s32.totalorder %s23, 1
    %p249 = por %p247, %p248
    %p250 = scmp.ne.s32.totalorder %s242, %s245
    %p251 = scmp.eq.s32.totalorder %s23, 0
    %p252 = por %p250, %p251
    %p253 = scmp.ne.s32.totalorder %s242, %s245
    %p254 = scmp.eq.s32.totalorder %s28, 1
    %p255 = por %p253, %p254
    %p256 = scmp.ne.s32.totalorder %s245, %s246
    %p257 = scmp.eq.s32.totalorder %s28, 0
    %p258 = por %p256, %p257
    %p259 = scmp.ne.s32.totalorder %s245, %s246
    %p260 = scmp.eq.s32.totalorder %s29, 1
    %p261 = por %p259, %p260
    %p263 = scmp.ne.s32.totalorder %s246, %s262
    %p264 = scmp.eq.s32.totalorder %s29, 0
    %p265 = por %p263, %p264
    %s266 = ssub.s32 %s23, %s30
    %p267 = scmp.eq.s32.totalorder %s266, 0
    %s269 = sadd.s32 %s268, 1
    %s270 = scalar_select %p267, %s268, %s269
    %p273 = pneg %p267
    %p274 = scmp.eq.s32.totalorder %s23, 1
    %p275 = por %p273, %p274
    %p276 = scmp.ne.s32.totalorder %s268, %s271
    %p277 = scmp.eq.s32.totalorder %s23, 0
    %p278 = por %p276, %p277
    %p279 = scmp.ne.s32.totalorder %s268, %s271
    %p280 = scmp.eq.s32.totalorder %s28, 1
    %p281 = por %p279, %p280
    %p282 = scmp.ne.s32.totalorder %s271, %s272
    %p283 = scmp.eq.s32.totalorder %s28, 0
    %p284 = por %p282, %p283
    %p285 = scmp.ne.s32.totalorder %s271, %s272
    %p286 = scmp.eq.s32.totalorder %s29, 1
    %p287 = por %p285, %p286
    %p289 = scmp.ne.s32.totalorder %s272, %s288
    %p290 = scmp.eq.s32.totalorder %s29, 0
    %p291 = por %p289, %p290
    %s292 = ssub.s32 %s23, %s30
    %p293 = scmp.eq.s32.totalorder %s292, 0
    %s295 = sadd.s32 %s294, 1
    %s296 = scalar_select %p293, %s294, %s295
    %p299 = pneg %p293
    %p300 = scmp.eq.s32.totalorder %s23, 1
    %p301 = por %p299, %p300
    %p302 = scmp.ne.s32.totalorder %s294, %s297
    %p303 = scmp.eq.s32.totalorder %s23, 0
    %p304 = por %p302, %p303
    %p305 = scmp.ne.s32.totalorder %s294, %s297
    %p306 = scmp.eq.s32.totalorder %s28, 1
    %p307 = por %p305, %p306
    %p308 = scmp.ne.s32.totalorder %s297, %s298
    %p309 = scmp.eq.s32.totalorder %s28, 0
    %p310 = por %p308, %p309
    %p311 = scmp.ne.s32.totalorder %s297, %s298
    %p312 = scmp.eq.s32.totalorder %s29, 1
    %p313 = por %p311, %p312
    %p315 = scmp.ne.s32.totalorder %s298, %s314
    %p316 = scmp.eq.s32.totalorder %s29, 0
    %p317 = por %p315, %p316
    %s318 = ssub.s32 %s23, %s30
    %p319 = scmp.eq.s32.totalorder %s318, 0
    %s321 = sadd.s32 %s320, 1
    %s322 = scalar_select %p319, %s320, %s321
    %p325 = pneg %p319
    %p326 = scmp.eq.s32.totalorder %s23, 1
    %p327 = por %p325, %p326
    %p328 = scmp.ne.s32.totalorder %s320, %s323
    %p329 = scmp.eq.s32.totalorder %s23, 0
    %p330 = por %p328, %p329
    %p331 = scmp.ne.s32.totalorder %s320, %s323
    %p332 = scmp.eq.s32.totalorder %s28, 1
    %p333 = por %p331, %p332
    %p334 = scmp.ne.s32.totalorder %s323, %s324
    %p335 = scmp.eq.s32.totalorder %s28, 0
    %p336 = por %p334, %p335
    %p337 = scmp.ne.s32.totalorder %s323, %s324
    %p338 = scmp.eq.s32.totalorder %s29, 1
    %p339 = por %p337, %p338
    %p341 = scmp.ne.s32.totalorder %s324, %s340
    %p342 = scmp.eq.s32.totalorder %s29, 0
    %p343 = por %p341, %p342
    %s344 = ssub.s32 %s23, %s30
    %p345 = scmp.eq.s32.totalorder %s344, 0
    %s347 = sadd.s32 %s346, 1
    %s348 = scalar_select %p345, %s346, %s347
    %p351 = pneg %p345
    %p352 = scmp.eq.s32.totalorder %s23, 1
    %p353 = por %p351, %p352
    %p354 = scmp.ne.s32.totalorder %s346, %s349
    %p355 = scmp.eq.s32.totalorder %s23, 0
    %p356 = por %p354, %p355
    %p357 = scmp.ne.s32.totalorder %s346, %s349
    %p358 = scmp.eq.s32.totalorder %s28, 1
    %p359 = por %p357, %p358
    %p360 = scmp.ne.s32.totalorder %s349, %s350
    %p361 = scmp.eq.s32.totalorder %s28, 0
    %p362 = por %p360, %p361
    %p363 = scmp.ne.s32.totalorder %s349, %s350
    %p364 = scmp.eq.s32.totalorder %s29, 1
    %p365 = por %p363, %p364
    %p367 = scmp.ne.s32.totalorder %s350, %s366
    %p368 = scmp.eq.s32.totalorder %s29, 0
    %p369 = por %p367, %p368
    %s370 = ssub.s32 %s23, %s30
    %p371 = scmp.eq.s32.totalorder %s370, 0
    %s373 = sadd.s32 %s372, 1
    %s374 = scalar_select %p371, %s372, %s373
    %p377 = pneg %p371
    %p378 = scmp.eq.s32.totalorder %s23, 1
    %p379 = por %p377, %p378
    %p380 = scmp.ne.s32.totalorder %s372, %s375
    %p381 = scmp.eq.s32.totalorder %s23, 0
    %p382 = por %p380, %p381
    %p383 = scmp.ne.s32.totalorder %s372, %s375
    %p384 = scmp.eq.s32.totalorder %s28, 1
    %p385 = por %p383, %p384
    %p386 = scmp.ne.s32.totalorder %s375, %s376
    %p387 = scmp.eq.s32.totalorder %s28, 0
    %p388 = por %p386, %p387
    %p389 = scmp.ne.s32.totalorder %s375, %s376
    %p390 = scmp.eq.s32.totalorder %s29, 1
    %p391 = por %p389, %p390
    %p393 = scmp.ne.s32.totalorder %s376, %s392
    %p394 = scmp.eq.s32.totalorder %s29, 0
    %p395 = por %p393, %p394
    %s396 = ssub.s32 %s23, %s30
    %p397 = scmp.eq.s32.totalorder %s396, 0
    %s399 = sadd.s32 %s398, 1
    %s400 = scalar_select %p397, %s398, %s399
    %p403 = pneg %p397
    %p404 = scmp.eq.s32.totalorder %s23, 1
    %p405 = por %p403, %p404
    %p406 = scmp.ne.s32.totalorder %s398, %s401
    %p407 = scmp.eq.s32.totalorder %s23, 0
    %p408 = por %p406, %p407
    %p409 = scmp.ne.s32.totalorder %s398, %s401
    %p410 = scmp.eq.s32.totalorder %s28, 1
    %p411 = por %p409, %p410
    %p412 = scmp.ne.s32.totalorder %s401, %s402
    %p413 = scmp.eq.s32.totalorder %s28, 0
    %p414 = por %p412, %p413
    %p415 = scmp.ne.s32.totalorder %s401, %s402
    %p416 = scmp.eq.s32.totalorder %s29, 1
    %p417 = por %p415, %p416
    %p419 = scmp.ne.s32.totalorder %s402, %s418
    %p420 = scmp.eq.s32.totalorder %s29, 0
    %p421 = por %p419, %p420
    %s422 = ssub.s32 %s23, %s30
    %p423 = scmp.eq.s32.totalorder %s422, 0
    %s425 = sadd.s32 %s424, 1
    %s426 = scalar_select %p423, %s424, %s425
    %p429 = pneg %p423
    %p430 = scmp.eq.s32.totalorder %s23, 1
    %p431 = por %p429, %p430
    %p432 = scmp.ne.s32.totalorder %s424, %s427
    %p433 = scmp.eq.s32.totalorder %s23, 0
    %p434 = por %p432, %p433
    %p435 = scmp.ne.s32.totalorder %s424, %s427
    %p436 = scmp.eq.s32.totalorder %s28, 1
    %p437 = por %p435, %p436
    %p438 = scmp.ne.s32.totalorder %s427, %s428
    %p439 = scmp.eq.s32.totalorder %s28, 0
    %p440 = por %p438, %p439
    %p441 = scmp.ne.s32.totalorder %s427, %s428
    %p442 = scmp.eq.s32.totalorder %s29, 1
    %p443 = por %p441, %p442
    %p445 = scmp.ne.s32.totalorder %s428, %s444
    %p446 = scmp.eq.s32.totalorder %s29, 0
    %p447 = por %p445, %p446
    %s449 = sadd.s32 %s448, 1
    %p452 = scmp.eq.s32.totalorder %s23, 1
    %p453 = scmp.ne.s32.totalorder %s448, %s450
    %p454 = scmp.eq.s32.totalorder %s23, 0
    %p455 = por %p453, %p454
    %p456 = scmp.ne.s32.totalorder %s448, %s450
    %p457 = scmp.eq.s32.totalorder %s28, 1
    %p458 = por %p456, %p457
    %p459 = scmp.ne.s32.totalorder %s450, %s451
    %p460 = scmp.eq.s32.totalorder %s28, 0
    %p461 = por %p459, %p460
    %p462 = scmp.ne.s32.totalorder %s450, %s451
    %p463 = scmp.eq.s32.totalorder %s29, 1
    %p464 = por %p462, %p463
    %p466 = scmp.ne.s32.totalorder %s451, %s465
    %p467 = scmp.eq.s32.totalorder %s29, 0
    %p468 = por %p466, %p467
    %p469 = scmp.le.s32.totalorder 1, %s23
    %p470 = scmp.lt.s32.totalorder %s23, 3
    %p471 = pnand %p469, %p470
    %p472 = pneg %p471
    // Predicated region
    $region9: #{mini_transformer.1} parent=5 // pred_check
      _
    $region10: #{mini_transformer.1} parent=5 // pred_check_branch
      %474 = sbr.rel (%p471) target = $region12
    $region11: #{mini_transformer.1} parent=5 // pred_region
      %s475 = ssub.s32 %s23, 1
      // Predicated region
      $region13: #{mini_transformer.1} parent=11 // pred_check
        %p476 = pneg %p44
      $region14: #{mini_transformer.1} parent=11 // pred_check_branch
        %478 = sbr.rel (%p476) target = $region16
      $region15: #{mini_transformer.1} parent=11 // pred_region
        _
      $region16: #{mini_transformer.1} parent=11 // pred_fallthru
        _
      // Predicated region
      $region17: #{mini_transformer.1} parent=11 // pred_check
        %p479 = pneg %p65
      $region18: #{mini_transformer.1} parent=11 // pred_check_branch
        %481 = sbr.rel (%p479) target = $region20
      $region19: #{mini_transformer.1} parent=11 // pred_region
        _
      $region20: #{mini_transformer.1} parent=11 // pred_fallthru
        _
      // Predicated region
      $region21: #{mini_transformer.1} parent=11 // pred_check
        %p482 = pneg %p86
      $region22: #{mini_transformer.1} parent=11 // pred_check_branch
        %484 = sbr.rel (%p482) target = $region24
      $region23: #{mini_transformer.1} parent=11 // pred_region
        _
      $region24: #{mini_transformer.1} parent=11 // pred_fallthru
        _
      // Predicated region
      $region25: #{mini_transformer.1} parent=11 // pred_check
        %p485 = pneg %p107
      $region26: #{mini_transformer.1} parent=11 // pred_check_branch
        %487 = sbr.rel (%p485) target = $region28
      $region27: #{mini_transformer.1} parent=11 // pred_region
        _
      $region28: #{mini_transformer.1} parent=11 // pred_fallthru
        _
      // Predicated region
      $region29: #{mini_transformer.1} parent=11 // pred_check
        %p488 = pneg %p128
      $region30: #{mini_transformer.1} parent=11 // pred_check_branch
        %490 = sbr.rel (%p488) target = $region32
      $region31: #{mini_transformer.1} parent=11 // pred_region
        _
      $region32: #{mini_transformer.1} parent=11 // pred_fallthru
        _
    $region12: #{mini_transformer.1} parent=5 // pred_fallthru
      _
    %p491 = scmp.lt.s32.totalorder %s23, 2
    // Predicated region
    $region33: #{mini_transformer.1} parent=5 // pred_check
      %p492 = pneg %p491
    $region34: #{mini_transformer.1} parent=5 // pred_check_branch
      %494 = sbr.rel (%p492) target = $region36
    $region35: #{mini_transformer.1} parent=5 // pred_region
      // Predicated region
      $region37: #{mini_transformer.1} parent=35 // pred_check
        %p495 = pneg %p148
      $region38: #{mini_transformer.1} parent=35 // pred_check_branch
        %497 = sbr.rel (%p495) target = $region40
      $region39: #{mini_transformer.1} parent=35 // pred_region
        %p498 = scmp.lt.s32.totalorder %s23, 1
        %s499 = scalar_select %p498, %s23, 1
        %s500 = smul.addr %s499, 4
        %s501 = smul.addr %s500, 8
        %s502 = scalar_lea.vmem %s5, %s501
      $region40: #{mini_transformer.1} parent=35 // pred_fallthru
        _
      // Predicated region
      $region41: #{mini_transformer.1} parent=35 // pred_check
        %p503 = pneg %p174
      $region42: #{mini_transformer.1} parent=35 // pred_check_branch
        %505 = sbr.rel (%p503) target = $region44
      $region43: #{mini_transformer.1} parent=35 // pred_region
        %p506 = scmp.lt.s32.totalorder %s23, 1
        %s507 = scalar_select %p506, %s23, 1
        %s508 = scalar_lea.vmem %s6, %s507
      $region44: #{mini_transformer.1} parent=35 // pred_fallthru
        _
      // Predicated region
      $region45: #{mini_transformer.1} parent=35 // pred_check
        %p509 = pneg %p200
      $region46: #{mini_transformer.1} parent=35 // pred_check_branch
        %511 = sbr.rel (%p509) target = $region48
      $region47: #{mini_transformer.1} parent=35 // pred_region
        %p512 = scmp.lt.s32.totalorder %s23, 1
        %s513 = scalar_select %p512, %s23, 1
        %s514 = smul.addr %s513, 4
        %s515 = smul.addr %s514, 8
        %s516 = scalar_lea.vmem %s7, %s515
      $region48: #{mini_transformer.1} parent=35 // pred_fallthru
        _
      // Predicated region
      $region49: #{mini_transformer.1} parent=35 // pred_check
        %p517 = pneg %p226
      $region50: #{mini_transformer.1} parent=35 // pred_check_branch
        %519 = sbr.rel (%p517) target = $region52
      $region51: #{mini_transformer.1} parent=35 // pred_region
        %p520 = scmp.lt.s32.totalorder %s23, 1
        %s521 = scalar_select %p520, %s23, 1
        %s522 = scalar_lea.vmem %s8, %s521
      $region52: #{mini_transformer.1} parent=35 // pred_fallthru
        _
      // Predicated region
      $region53: #{mini_transformer.1} parent=35 // pred_check
        %p523 = pneg %p252
      $region54: #{mini_transformer.1} parent=35 // pred_check_branch
        %525 = sbr.rel (%p523) target = $region56
      $region55: #{mini_transformer.1} parent=35 // pred_region
        %p526 = scmp.lt.s32.totalorder %s23, 1
        %s527 = scalar_select %p526, %s23, 1
        %s528 = scalar_lea.vmem %s9, %s527
      $region56: #{mini_transformer.1} parent=35 // pred_fallthru
        _
      // Predicated region
      $region57: #{mini_transformer.1} parent=35 // pred_check
        %p529 = pneg %p278
      $region58: #{mini_transformer.1} parent=35 // pred_check_branch
        %531 = sbr.rel (%p529) target = $region60
      $region59: #{mini_transformer.1} parent=35 // pred_region
        %p532 = scmp.lt.s32.totalorder %s23, 1
        %s533 = scalar_select %p532, %s23, 1
        %s534 = scalar_lea.vmem %s10, %s533
      $region60: #{mini_transformer.1} parent=35 // pred_fallthru
        _
      // Predicated region
      $region61: #{mini_transformer.1} parent=35 // pred_check
        %p535 = pneg %p304
      $region62: #{mini_transformer.1} parent=35 // pred_check_branch
        %537 = sbr.rel (%p535) target = $region64
      $region63: #{mini_transformer.1} parent=35 // pred_region
        %p538 = scmp.lt.s32.totalorder %s23, 1
        %s539 = scalar_select %p538, %s23, 1
        %s540 = smul.addr %s539, 64
        %s541 = smul.addr %s540, 4
        %s542 = scalar_lea.vmem %s11, %s541
      $region64: #{mini_transformer.1} parent=35 // pred_fallthru
        _
      // Predicated region
      $region65: #{mini_transformer.1} parent=35 // pred_check
        %p543 = pneg %p330
      $region66: #{mini_transformer.1} parent=35 // pred_check_branch
        %545 = sbr.rel (%p543) target = $region68
      $region67: #{mini_transformer.1} parent=35 // pred_region
        %p546 = scmp.lt.s32.totalorder %s23, 1
        %s547 = scalar_select %p546, %s23, 1
        %s548 = smul.addr %s547, 16
        %s549 = scalar_lea.vmem %s12, %s548
      $region68: #{mini_transformer.1} parent=35 // pred_fallthru
        _
      // Predicated region
      $region69: #{mini_transformer.1} parent=35 // pred_check
        %p550 = pneg %p356
      $region70: #{mini_transformer.1} parent=35 // pred_check_branch
        %552 = sbr.rel (%p550) target = $region72
      $region71: #{mini_transformer.1} parent=35 // pred_region
        %p553 = scmp.lt.s32.totalorder %s23, 1
        %s554 = scalar_select %p553, %s23, 1
        %s555 = smul.addr %s554, 256
        %s556 = smul.addr %s555, 4
        %s557 = scalar_lea.vmem %s13, %s556
      $region72: #{mini_transformer.1} parent=35 // pred_fallthru
        _
      // Predicated region
      $region73: #{mini_transformer.1} parent=35 // pred_check
        %p558 = pneg %p382
      $region74: #{mini_transformer.1} parent=35 // pred_check_branch
        %560 = sbr.rel (%p558) target = $region76
      $region75: #{mini_transformer.1} parent=35 // pred_region
        %p561 = scmp.lt.s32.totalorder %s23, 1
        %s562 = scalar_select %p561, %s23, 1
        %s563 = scalar_lea.vmem %s14, %s562
      $region76: #{mini_transformer.1} parent=35 // pred_fallthru
        _
      // Predicated region
      $region77: #{mini_transformer.1} parent=35 // pred_check
        %p564 = pneg %p408
      $region78: #{mini_transformer.1} parent=35 // pred_check_branch
        %566 = sbr.rel (%p564) target = $region80
      $region79: #{mini_transformer.1} parent=35 // pred_region
        %p567 = scmp.lt.s32.totalorder %s23, 1
        %s568 = scalar_select %p567, %s23, 1
        %s569 = scalar_lea.vmem %s15, %s568
      $region80: #{mini_transformer.1} parent=35 // pred_fallthru
        _
      // Predicated region
      $region81: #{mini_transformer.1} parent=35 // pred_check
        %p570 = pneg %p434
      $region82: #{mini_transformer.1} parent=35 // pred_check_branch
        %572 = sbr.rel (%p570) target = $region84
      $region83: #{mini_transformer.1} parent=35 // pred_region
        %p573 = scmp.lt.s32.totalorder %s23, 1
        %s574 = scalar_select %p573, %s23, 1
        %s575 = scalar_lea.vmem %s16, %s574
      $region84: #{mini_transformer.1} parent=35 // pred_fallthru
        _
    $region36: #{mini_transformer.1} parent=5 // pred_fallthru
      _
    %p576 = scmp.le.s32.totalorder 1, %s23
    %p577 = scmp.lt.s32.totalorder %s23, 3
    %p578 = pnand %p576, %p577
    %p579 = pneg %p578
    // Predicated region
    $region85: #{mini_transformer.1} parent=5 // pred_check
      _
    $region86: #{mini_transformer.1} parent=5 // pred_check_branch
      %581 = sbr.rel (%p578) target = $region88
    $region87: #{mini_transformer.1} parent=5 // pred_region
      %s582 = ssub.s32 %s23, 1
      %p583 = pneg %p44
      %p584 = pneg %p41
      %p585 = pneg %p65
      %p586 = pneg %p62
      %p587 = pneg %p86
      %p588 = pneg %p83
      %p589 = pneg %p107
      %p590 = pneg %p104
      %p591 = pneg %p128
      %p592 = pneg %p125
      %p593 = scmp.lt.s32.totalorder %s28, 1
      %s594 = scalar_select %p593, %s28, 1
      %s595 = smul.addr %s594, 4
      %s596 = smul.addr %s595, 8
      %s597 = scalar_lea.vmem %s5, %s596
      %p598 = pneg %p154
      %p599 = pneg %p151
      %p600 = scmp.lt.s32.totalorder %s28, 1
      %s601 = scalar_select %p600, %s28, 1
      %s602 = scalar_lea.vmem %s6, %s601
      %p603 = pneg %p180
      %p604 = pneg %p177
      %p605 = scmp.lt.s32.totalorder %s28, 1
      %s606 = scalar_select %p605, %s28, 1
      %s607 = smul.addr %s606, 4
      %s608 = smul.addr %s607, 8
      %s609 = scalar_lea.vmem %s7, %s608
      %p610 = pneg %p206
      %p611 = pneg %p203
      %p612 = scmp.lt.s32.totalorder %s28, 1
      %s613 = scalar_select %p612, %s28, 1
      %s614 = scalar_lea.vmem %s8, %s613
      %p615 = pneg %p232
      %p616 = pneg %p229
      %p617 = scmp.lt.s32.totalorder %s28, 1
      %s618 = scalar_select %p617, %s28, 1
      %s619 = scalar_lea.vmem %s9, %s618
      %p620 = pneg %p258
      %p621 = pneg %p255
      %p622 = scmp.lt.s32.totalorder %s28, 1
      %s623 = scalar_select %p622, %s28, 1
      %s624 = scalar_lea.vmem %s10, %s623
      %p625 = pneg %p284
      %p626 = pneg %p281
      %p627 = scmp.lt.s32.totalorder %s28, 1
      %s628 = scalar_select %p627, %s28, 1
      %s629 = smul.addr %s628, 64
      %s630 = smul.addr %s629, 4
      %s631 = scalar_lea.vmem %s11, %s630
      %p632 = pneg %p310
      %p633 = pneg %p307
      %p634 = scmp.lt.s32.totalorder %s28, 1
      %s635 = scalar_select %p634, %s28, 1
      %s636 = smul.addr %s635, 16
      %s637 = scalar_lea.vmem %s12, %s636
      %p638 = pneg %p336
      %p639 = pneg %p333
      %p640 = scmp.lt.s32.totalorder %s28, 1
      %s641 = scalar_select %p640, %s28, 1
      %s642 = smul.addr %s641, 256
      %s643 = smul.addr %s642, 4
      %s644 = scalar_lea.vmem %s13, %s643
      %p645 = pneg %p362
      %p646 = pneg %p359
      %p647 = scmp.lt.s32.totalorder %s28, 1
      %s648 = scalar_select %p647, %s28, 1
      %s649 = scalar_lea.vmem %s14, %s648
      %p650 = pneg %p388
      %p651 = pneg %p385
      %p652 = scmp.lt.s32.totalorder %s28, 1
      %s653 = scalar_select %p652, %s28, 1
      %s654 = scalar_lea.vmem %s15, %s653
      %p655 = pneg %p414
      %p656 = pneg %p411
      %p657 = scmp.lt.s32.totalorder %s28, 1
      %s658 = scalar_select %p657, %s28, 1
      %s659 = scalar_lea.vmem %s16, %s658
      %p660 = pneg %p440
      %p661 = pneg %p437
      %p662 = pneg %p461
      %p663 = pneg %p458
      %p664 = scmp.lt.s32.totalorder %s28, 1
      %s665 = scalar_select %p664, %s28, 1
      %s666 = smul.addr %s665, 4
      %s667 = smul.addr %s666, 8
      %s668 = scalar_lea.vmem %s5, %s667
      %p669 = scmp.lt.s32.totalorder %s28, 1
      %s670 = scalar_select %p669, %s28, 1
      %s671 = scalar_lea.vmem %s6, %s670
      %p672 = scmp.lt.s32.totalorder %s28, 1
      %s673 = scalar_select %p672, %s28, 1
      %s674 = smul.addr %s673, 4
      %s675 = smul.addr %s674, 8
      %s676 = scalar_lea.vmem %s7, %s675
      %p677 = scmp.lt.s32.totalorder %s28, 1
      %s678 = scalar_select %p677, %s28, 1
      %s679 = scalar_lea.vmem %s8, %s678
      %p680 = scmp.lt.s32.totalorder %s28, 1
      %s681 = scalar_select %p680, %s28, 1
      %s682 = scalar_lea.vmem %s9, %s681
      %p683 = scmp.lt.s32.totalorder %s28, 1
      %s684 = scalar_select %p683, %s28, 1
      %s685 = scalar_lea.vmem %s10, %s684
      %p686 = scmp.lt.s32.totalorder %s28, 1
      %s687 = scalar_select %p686, %s28, 1
      %s688 = smul.addr %s687, 64
      %s689 = smul.addr %s688, 4
      %s690 = scalar_lea.vmem %s11, %s689
      %p691 = scmp.lt.s32.totalorder %s28, 1
      %s692 = scalar_select %p691, %s28, 1
      %s693 = smul.addr %s692, 16
      %s694 = scalar_lea.vmem %s12, %s693
      %p695 = scmp.lt.s32.totalorder %s28, 1
      %s696 = scalar_select %p695, %s28, 1
      %s697 = smul.addr %s696, 256
      %s698 = smul.addr %s697, 4
      %s699 = scalar_lea.vmem %s13, %s698
      %p700 = scmp.lt.s32.totalorder %s28, 1
      %s701 = scalar_select %p700, %s28, 1
      %s702 = scalar_lea.vmem %s14, %s701
      %p703 = scmp.lt.s32.totalorder %s28, 1
      %s704 = scalar_select %p703, %s28, 1
      %s705 = scalar_lea.vmem %s15, %s704
      %p706 = scmp.lt.s32.totalorder %s28, 1
      %s707 = scalar_select %p706, %s28, 1
      %s708 = scalar_lea.vmem %s16, %s707
      %p710 = scmp.eq.s32.totalorder %s28, 0
      // Predicated region
      $region89: #{mini_transformer.1} parent=87 // pred_check
        %p711 = pneg %p710
      $region90: #{mini_transformer.1} parent=87 // pred_check_branch
        %713 = sbr.rel (%p711) target = $region92
      $region91: #{mini_transformer.1} parent=87 // pred_region
        %v714 = vlaneseq
        %v715 = vand.u32 %v714, 127
        %v716 = vadd.s32 %v715, 128
        %v717 = vadd.s32 %v715, 256
        %v718 = vadd.s32 %v715, 384
        %v719 = vadd.s32 %v715, 512
        %v720 = vadd.s32 %v715, 640
        %v721 = vadd.s32 %v715, 768
        %v722 = vadd.s32 %v715, 896
        %v723 = vld [vmem:[%s0] sm:$0xff]
        %v724 = vld [vmem:[%s0 + $0x8] sm:$0xff]
        %v725 = vld [vmem:[%s0 + $0x10] sm:$0xf]
        %726 = vset.pattern.permute.xlu0 0
        %727 = vperm.xlu0 %726, %v723
        %v728 = vpop.permute.xlu0 %727
        %729 = vset.pattern.permute.xlu0 0
        %730 = vperm.xlu0 %729, %v724
        %v731 = vpop.permute.xlu0 %730
        %732 = vset.pattern.permute.xlu0 0
        %733 = vperm.xlu0 %732, %v725
        %v734 = vpop.permute.xlu0 %733
        %vm735 = vcmp.eq.s32.totalorder %v728, %v715
        %vm736 = vcmp.eq.s32.totalorder %v728, %v716
        %vm737 = vcmp.eq.s32.totalorder %v728, %v717
        %vm738 = vcmp.eq.s32.totalorder %v728, %v718
        %vm739 = vcmp.eq.s32.totalorder %v728, %v719
        %vm740 = vcmp.eq.s32.totalorder %v728, %v720
        %vm741 = vcmp.eq.s32.totalorder %v728, %v721
        %vm742 = vcmp.eq.s32.totalorder %v728, %v722
        %vm743 = vcmp.eq.s32.totalorder %v731, %v715
        %vm744 = vcmp.eq.s32.totalorder %v731, %v716
        %vm745 = vcmp.eq.s32.totalorder %v731, %v717
        %vm746 = vcmp.eq.s32.totalorder %v731, %v718
        %vm747 = vcmp.eq.s32.totalorder %v731, %v719
        %vm748 = vcmp.eq.s32.totalorder %v731, %v720
        %vm749 = vcmp.eq.s32.totalorder %v731, %v721
        %vm750 = vcmp.eq.s32.totalorder %v731, %v722
        %vm751 = vcmp.eq.s32.totalorder %v734, %v715
        %vm752 = vcmp.eq.s32.totalorder %v734, %v716
        %vm753 = vcmp.eq.s32.totalorder %v734, %v717
        %vm754 = vcmp.eq.s32.totalorder %v734, %v718
        %vm755 = vcmp.eq.s32.totalorder %v734, %v719
        %vm756 = vcmp.eq.s32.totalorder %v734, %v720
        %vm757 = vcmp.eq.s32.totalorder %v734, %v721
        %vm758 = vcmp.eq.s32.totalorder %v734, %v722
        %v759 = vsel %vm735, 1, 0
        %v760 = vsel %vm736, 1, 0
        %v761 = vsel %vm737, 1, 0
        %v762 = vsel %vm738, 1, 0
        %v763 = vsel %vm739, 1, 0
        %v764 = vsel %vm740, 1, 0
        %v765 = vsel %vm741, 1, 0
        %v766 = vsel %vm742, 1, 0
        %v767 = vsel %vm743, 1, 0
        %v768 = vsel %vm744, 1, 0
        %v769 = vsel %vm745, 1, 0
        %v770 = vsel %vm746, 1, 0
        %v771 = vsel %vm747, 1, 0
        %v772 = vsel %vm748, 1, 0
        %v773 = vsel %vm749, 1, 0
        %v774 = vsel %vm750, 1, 0
        %v775 = vsel %vm751, 1, 0
        %v776 = vsel %vm752, 1, 0
        %v777 = vsel %vm753, 1, 0
        %v778 = vsel %vm754, 1, 0
        %v779 = vsel %vm755, 1, 0
        %v780 = vsel %vm756, 1, 0
        %v781 = vsel %vm757, 1, 0
        %v782 = vsel %vm758, 1, 0
        %v783 = vcvt.s32.f32 %v759
        %v784 = vcvt.s32.f32 %v760
        %v785 = vcvt.s32.f32 %v761
        %v786 = vcvt.s32.f32 %v762
        %v787 = vcvt.s32.f32 %v763
        %v788 = vcvt.s32.f32 %v764
        %v789 = vcvt.s32.f32 %v765
        %v790 = vcvt.s32.f32 %v766
        %v791 = vcvt.s32.f32 %v767
        %v792 = vcvt.s32.f32 %v768
        %v793 = vcvt.s32.f32 %v769
        %v794 = vcvt.s32.f32 %v770
        %v795 = vcvt.s32.f32 %v771
        %v796 = vcvt.s32.f32 %v772
        %v797 = vcvt.s32.f32 %v773
        %v798 = vcvt.s32.f32 %v774
        %v799 = vcvt.s32.f32 %v775
        %v800 = vcvt.s32.f32 %v776
        %v801 = vcvt.s32.f32 %v777
        %v802 = vcvt.s32.f32 %v778
        %v803 = vcvt.s32.f32 %v779
        %v804 = vcvt.s32.f32 %v780
        %v805 = vcvt.s32.f32 %v781
        %v806 = vcvt.s32.f32 %v782
        %v807 = vpack.c.bf16 %v791, %v783
        %v808 = vpack.c.bf16 %v792, %v784
        %v809 = vpack.c.bf16 %v793, %v785
        %v810 = vpack.c.bf16 %v794, %v786
        %v811 = vpack.c.bf16 %v795, %v787
        %v812 = vpack.c.bf16 %v796, %v788
        %v813 = vpack.c.bf16 %v797, %v789
        %v814 = vpack.c.bf16 %v798, %v790
        %v815 = vpack.c.bf16 %v799, %v799
        %v816 = vpack.c.bf16 %v800, %v800
        %v817 = vpack.c.bf16 %v801, %v801
        %v818 = vpack.c.bf16 %v802, %v802
        %v819 = vpack.c.bf16 %v803, %v803
        %v820 = vpack.c.bf16 %v804, %v804
        %v821 = vpack.c.bf16 %v805, %v805
        %v822 = vpack.c.bf16 %v806, %v806
        %v823 = vld [vmem:[%s1] sm:$0xf]
        %v824 = vld [vmem:[%s1 + $0x4] sm:$0xf]
        %v825 = vld [vmem:[%s1 + $0x8] sm:$0xf]
        %v826 = vld [vmem:[%s1 + $0xc] sm:$0xf]
        %v827 = vld [vmem:[%s1 + $0x10] sm:$0xf]
        %v828 = vld [vmem:[%s1 + $0x14] sm:$0xf]
        %v829 = vld [vmem:[%s1 + $0x18] sm:$0xf]
        %v830 = vld [vmem:[%s1 + $0x1c] sm:$0xf]
        %v831 = vld [vmem:[%s1 + $0x20] sm:$0xf]
        %v832 = vld [vmem:[%s1 + $0x24] sm:$0xf]
        %v833 = vld [vmem:[%s1 + $0x28] sm:$0xf]
        %v834 = vld [vmem:[%s1 + $0x2c] sm:$0xf]
        %v835 = vld [vmem:[%s1 + $0x30] sm:$0xf]
        %v836 = vld [vmem:[%s1 + $0x34] sm:$0xf]
        %v837 = vld [vmem:[%s1 + $0x38] sm:$0xf]
        %v838 = vld [vmem:[%s1 + $0x3c] sm:$0xf]
        %v839 = vld [vmem:[%s1 + $0x40] sm:$0xf]
        %v840 = vld [vmem:[%s1 + $0x44] sm:$0xf]
        %v841 = vld [vmem:[%s1 + $0x48] sm:$0xf]
        %v842 = vld [vmem:[%s1 + $0x4c] sm:$0xf]
        %v843 = vld [vmem:[%s1 + $0x50] sm:$0xf]
        %v844 = vld [vmem:[%s1 + $0x54] sm:$0xf]
        %v845 = vld [vmem:[%s1 + $0x58] sm:$0xf]
        %v846 = vld [vmem:[%s1 + $0x5c] sm:$0xf]
        %v847 = vld [vmem:[%s1 + $0x60] sm:$0xf]
        %v848 = vld [vmem:[%s1 + $0x64] sm:$0xf]
        %v849 = vld [vmem:[%s1 + $0x68] sm:$0xf]
        %v850 = vld [vmem:[%s1 + $0x6c] sm:$0xf]
        %v851 = vld [vmem:[%s1 + $0x70] sm:$0xf]
        %v852 = vld [vmem:[%s1 + $0x74] sm:$0xf]
        %v853 = vld [vmem:[%s1 + $0x78] sm:$0xf]
        %v854 = vld [vmem:[%s1 + $0x7c] sm:$0xf]
        %v855 = vld [vmem:[%s1 + $0x80] sm:$0xf]
        %v856 = vld [vmem:[%s1 + $0x84] sm:$0xf]
        %v857 = vld [vmem:[%s1 + $0x88] sm:$0xf]
        %v858 = vld [vmem:[%s1 + $0x8c] sm:$0xf]
        %v859 = vld [vmem:[%s1 + $0x90] sm:$0xf]
        %v860 = vld [vmem:[%s1 + $0x94] sm:$0xf]
        %v861 = vld [vmem:[%s1 + $0x98] sm:$0xf]
        %v862 = vld [vmem:[%s1 + $0x9c] sm:$0xf]
        %v863 = vld [vmem:[%s1 + $0xa0] sm:$0xf]
        %v864 = vld [vmem:[%s1 + $0xa4] sm:$0xf]
        %v865 = vld [vmem:[%s1 + $0xa8] sm:$0xf]
        %v866 = vld [vmem:[%s1 + $0xac] sm:$0xf]
        %v867 = vld [vmem:[%s1 + $0xb0] sm:$0xf]
        %v868 = vld [vmem:[%s1 + $0xb4] sm:$0xf]
        %v869 = vld [vmem:[%s1 + $0xb8] sm:$0xf]
        %v870 = vld [vmem:[%s1 + $0xbc] sm:$0xf]
        %v871 = vld [vmem:[%s1 + $0xc0] sm:$0xf]
        %v872 = vld [vmem:[%s1 + $0xc4] sm:$0xf]
        %v873 = vld [vmem:[%s1 + $0xc8] sm:$0xf]
        %v874 = vld [vmem:[%s1 + $0xcc] sm:$0xf]
        %v875 = vld [vmem:[%s1 + $0xd0] sm:$0xf]
        %v876 = vld [vmem:[%s1 + $0xd4] sm:$0xf]
        %v877 = vld [vmem:[%s1 + $0xd8] sm:$0xf]
        %v878 = vld [vmem:[%s1 + $0xdc] sm:$0xf]
        %v879 = vld [vmem:[%s1 + $0xe0] sm:$0xf]
        %v880 = vld [vmem:[%s1 + $0xe4] sm:$0xf]
        %v881 = vld [vmem:[%s1 + $0xe8] sm:$0xf]
        %v882 = vld [vmem:[%s1 + $0xec] sm:$0xf]
        %v883 = vld [vmem:[%s1 + $0xf0] sm:$0xf]
        %v884 = vld [vmem:[%s1 + $0xf4] sm:$0xf]
        %v885 = vld [vmem:[%s1 + $0xf8] sm:$0xf]
        %v886 = vld [vmem:[%s1 + $0xfc] sm:$0xf]
        %v887 = vld [vmem:[%s1 + $0x100] sm:$0xf]
        %v888 = vld [vmem:[%s1 + $0x104] sm:$0xf]
        %v889 = vld [vmem:[%s1 + $0x108] sm:$0xf]
        %v890 = vld [vmem:[%s1 + $0x10c] sm:$0xf]
        %v891 = vld [vmem:[%s1 + $0x110] sm:$0xf]
        %v892 = vld [vmem:[%s1 + $0x114] sm:$0xf]
        %v893 = vld [vmem:[%s1 + $0x118] sm:$0xf]
        %v894 = vld [vmem:[%s1 + $0x11c] sm:$0xf]
        %v895 = vld [vmem:[%s1 + $0x120] sm:$0xf]
        %v896 = vld [vmem:[%s1 + $0x124] sm:$0xf]
        %v897 = vld [vmem:[%s1 + $0x128] sm:$0xf]
        %v898 = vld [vmem:[%s1 + $0x12c] sm:$0xf]
        %v899 = vld [vmem:[%s1 + $0x130] sm:$0xf]
        %v900 = vld [vmem:[%s1 + $0x134] sm:$0xf]
        %v901 = vld [vmem:[%s1 + $0x138] sm:$0xf]
        %v902 = vld [vmem:[%s1 + $0x13c] sm:$0xf]
        %v903 = vld [vmem:[%s1 + $0x140] sm:$0xf]
        %v904 = vld [vmem:[%s1 + $0x144] sm:$0xf]
        %v905 = vld [vmem:[%s1 + $0x148] sm:$0xf]
        %v906 = vld [vmem:[%s1 + $0x14c] sm:$0xf]
        %v907 = vld [vmem:[%s1 + $0x150] sm:$0xf]
        %v908 = vld [vmem:[%s1 + $0x154] sm:$0xf]
        %v909 = vld [vmem:[%s1 + $0x158] sm:$0xf]
        %v910 = vld [vmem:[%s1 + $0x15c] sm:$0xf]
        %v911 = vld [vmem:[%s1 + $0x160] sm:$0xf]
        %v912 = vld [vmem:[%s1 + $0x164] sm:$0xf]
        %v913 = vld [vmem:[%s1 + $0x168] sm:$0xf]
        %v914 = vld [vmem:[%s1 + $0x16c] sm:$0xf]
        %v915 = vld [vmem:[%s1 + $0x170] sm:$0xf]
        %v916 = vld [vmem:[%s1 + $0x174] sm:$0xf]
        %v917 = vld [vmem:[%s1 + $0x178] sm:$0xf]
        %v918 = vld [vmem:[%s1 + $0x17c] sm:$0xf]
        %v919 = vld [vmem:[%s1 + $0x180] sm:$0xf]
        %v920 = vld [vmem:[%s1 + $0x184] sm:$0xf]
        %v921 = vld [vmem:[%s1 + $0x188] sm:$0xf]
        %v922 = vld [vmem:[%s1 + $0x18c] sm:$0xf]
        %v923 = vld [vmem:[%s1 + $0x190] sm:$0xf]
        %v924 = vld [vmem:[%s1 + $0x194] sm:$0xf]
        %v925 = vld [vmem:[%s1 + $0x198] sm:$0xf]
        %v926 = vld [vmem:[%s1 + $0x19c] sm:$0xf]
        %v927 = vld [vmem:[%s1 + $0x1a0] sm:$0xf]
        %v928 = vld [vmem:[%s1 + $0x1a4] sm:$0xf]
        %v929 = vld [vmem:[%s1 + $0x1a8] sm:$0xf]
        %v930 = vld [vmem:[%s1 + $0x1ac] sm:$0xf]
        %v931 = vld [vmem:[%s1 + $0x1b0] sm:$0xf]
        %v932 = vld [vmem:[%s1 + $0x1b4] sm:$0xf]
        %v933 = vld [vmem:[%s1 + $0x1b8] sm:$0xf]
        %v934 = vld [vmem:[%s1 + $0x1bc] sm:$0xf]
        %v935 = vld [vmem:[%s1 + $0x1c0] sm:$0xf]
        %v936 = vld [vmem:[%s1 + $0x1c4] sm:$0xf]
        %v937 = vld [vmem:[%s1 + $0x1c8] sm:$0xf]
        %v938 = vld [vmem:[%s1 + $0x1cc] sm:$0xf]
        %v939 = vld [vmem:[%s1 + $0x1d0] sm:$0xf]
        %v940 = vld [vmem:[%s1 + $0x1d4] sm:$0xf]
        %v941 = vld [vmem:[%s1 + $0x1d8] sm:$0xf]
        %v942 = vld [vmem:[%s1 + $0x1dc] sm:$0xf]
        %v943 = vld [vmem:[%s1 + $0x1e0] sm:$0xf]
        %v944 = vld [vmem:[%s1 + $0x1e4] sm:$0xf]
        %v945 = vld [vmem:[%s1 + $0x1e8] sm:$0xf]
        %v946 = vld [vmem:[%s1 + $0x1ec] sm:$0xf]
        %v947 = vld [vmem:[%s1 + $0x1f0] sm:$0xf]
        %v948 = vld [vmem:[%s2] sm:$0xff]
        %v949 = vld [vmem:[%s2 + $0x8] sm:$0xff]
        %v950 = vld [vmem:[%s2 + $0x10] sm:$0xf]
        %v1076 = vunpack.c.l.b16 %v823
        %v1077 = vunpack.c.l.b16 %v824
        %v1078 = vunpack.c.l.b16 %v825
        %v1079 = vunpack.c.l.b16 %v826
        %v1080 = vunpack.c.l.b16 %v827
        %v1081 = vunpack.c.l.b16 %v828
        %v1082 = vunpack.c.l.b16 %v829
        %v1083 = vunpack.c.l.b16 %v830
        %v1084 = vunpack.c.l.b16 %v831
        %v1085 = vunpack.c.l.b16 %v832
        %v1086 = vunpack.c.l.b16 %v833
        %v1087 = vunpack.c.l.b16 %v834
        %v1088 = vunpack.c.l.b16 %v835
        %v1089 = vunpack.c.l.b16 %v836
        %v1090 = vunpack.c.l.b16 %v837
        %v1091 = vunpack.c.l.b16 %v838
        %v1092 = vunpack.c.l.b16 %v839
        %v1093 = vunpack.c.l.b16 %v840
        %v1094 = vunpack.c.l.b16 %v841
        %v1095 = vunpack.c.l.b16 %v842
        %v1096 = vunpack.c.l.b16 %v843
        %v1097 = vunpack.c.l.b16 %v844
        %v1098 = vunpack.c.l.b16 %v845
        %v1099 = vunpack.c.l.b16 %v846
        %v1100 = vunpack.c.l.b16 %v847
        %v1101 = vunpack.c.l.b16 %v848
        %v1102 = vunpack.c.l.b16 %v849
        %v1103 = vunpack.c.l.b16 %v850
        %v1104 = vunpack.c.l.b16 %v851
        %v1105 = vunpack.c.l.b16 %v852
        %v1106 = vunpack.c.l.b16 %v853
        %v1107 = vunpack.c.l.b16 %v854
        %v1108 = vunpack.c.l.b16 %v855
        %v1109 = vunpack.c.l.b16 %v856
        %v1110 = vunpack.c.l.b16 %v857
        %v1111 = vunpack.c.l.b16 %v858
        %v1112 = vunpack.c.l.b16 %v859
        %v1113 = vunpack.c.l.b16 %v860
        %v1114 = vunpack.c.l.b16 %v861
        %v1115 = vunpack.c.l.b16 %v862
        %v1116 = vunpack.c.l.b16 %v863
        %v1117 = vunpack.c.l.b16 %v864
        %v1118 = vunpack.c.l.b16 %v865
        %v1119 = vunpack.c.l.b16 %v866
        %v1120 = vunpack.c.l.b16 %v867
        %v1121 = vunpack.c.l.b16 %v868
        %v1122 = vunpack.c.l.b16 %v869
        %v1123 = vunpack.c.l.b16 %v870
        %v1124 = vunpack.c.l.b16 %v871
        %v1125 = vunpack.c.l.b16 %v872
        %v1126 = vunpack.c.l.b16 %v873
        %v1127 = vunpack.c.l.b16 %v874
        %v1128 = vunpack.c.l.b16 %v875
        %v1129 = vunpack.c.l.b16 %v876
        %v1130 = vunpack.c.l.b16 %v877
        %v1131 = vunpack.c.l.b16 %v878
        %v1132 = vunpack.c.l.b16 %v879
        %v1133 = vunpack.c.l.b16 %v880
        %v1134 = vunpack.c.l.b16 %v881
        %v1135 = vunpack.c.l.b16 %v882
        %v1136 = vunpack.c.l.b16 %v883
        %v1137 = vunpack.c.l.b16 %v884
        %v1138 = vunpack.c.l.b16 %v885
        %v1139 = vunpack.c.l.b16 %v886
        %v1140 = vunpack.c.l.b16 %v887
        %v1141 = vunpack.c.l.b16 %v888
        %v1142 = vunpack.c.l.b16 %v889
        %v1143 = vunpack.c.l.b16 %v890
        %v1144 = vunpack.c.l.b16 %v891
        %v1145 = vunpack.c.l.b16 %v892
        %v1146 = vunpack.c.l.b16 %v893
        %v1147 = vunpack.c.l.b16 %v894
        %v1148 = vunpack.c.l.b16 %v895
        %v1149 = vunpack.c.l.b16 %v896
        %v1150 = vunpack.c.l.b16 %v897
        %v1151 = vunpack.c.l.b16 %v898
        %v1152 = vunpack.c.l.b16 %v899
        %v1153 = vunpack.c.l.b16 %v900
        %v1154 = vunpack.c.l.b16 %v901
        %v1155 = vunpack.c.l.b16 %v902
        %v1156 = vunpack.c.l.b16 %v903
        %v1157 = vunpack.c.l.b16 %v904
        %v1158 = vunpack.c.l.b16 %v905
        %v1159 = vunpack.c.l.b16 %v906
        %v1160 = vunpack.c.l.b16 %v907
        %v1161 = vunpack.c.l.b16 %v908
        %v1162 = vunpack.c.l.b16 %v909
        %v1163 = vunpack.c.l.b16 %v910
        %v1164 = vunpack.c.l.b16 %v911
        %v1165 = vunpack.c.l.b16 %v912
        %v1166 = vunpack.c.l.b16 %v913
        %v1167 = vunpack.c.l.b16 %v914
        %v1168 = vunpack.c.l.b16 %v915
        %v1169 = vunpack.c.l.b16 %v916
        %v1170 = vunpack.c.l.b16 %v917
        %v1171 = vunpack.c.l.b16 %v918
        %v1172 = vunpack.c.l.b16 %v919
        %v1173 = vunpack.c.l.b16 %v920
        %v1174 = vunpack.c.l.b16 %v921
        %v1175 = vunpack.c.l.b16 %v922
        %v1176 = vunpack.c.l.b16 %v923
        %v1177 = vunpack.c.l.b16 %v924
        %v1178 = vunpack.c.l.b16 %v925
        %v1179 = vunpack.c.l.b16 %v926
        %v1180 = vunpack.c.l.b16 %v927
        %v1181 = vunpack.c.l.b16 %v928
        %v1182 = vunpack.c.l.b16 %v929
        %v1183 = vunpack.c.l.b16 %v930
        %v1184 = vunpack.c.l.b16 %v931
        %v1185 = vunpack.c.l.b16 %v932
        %v1186 = vunpack.c.l.b16 %v933
        %v1187 = vunpack.c.l.b16 %v934
        %v1188 = vunpack.c.l.b16 %v935
        %v1189 = vunpack.c.l.b16 %v936
        %v1190 = vunpack.c.l.b16 %v937
        %v1191 = vunpack.c.l.b16 %v938
        %v1192 = vunpack.c.l.b16 %v939
        %v1193 = vunpack.c.l.b16 %v940
        %v1194 = vunpack.c.l.b16 %v941
        %v1195 = vunpack.c.l.b16 %v942
        %v1196 = vunpack.c.l.b16 %v943
        %v1197 = vunpack.c.l.b16 %v944
        %v1198 = vunpack.c.l.b16 %v945
        %v1199 = vunpack.c.l.b16 %v946
        %v1200 = vunpack.c.l.b16 %v947
        %v1201 = vpack.c.b16 %v1077, %v1076
        %v1202 = vpack.c.b16 %v1079, %v1078
        %v1203 = vpack.c.b16 %v1081, %v1080
        %v1204 = vpack.c.b16 %v1083, %v1082
        %v1205 = vpack.c.b16 %v1085, %v1084
        %v1206 = vpack.c.b16 %v1087, %v1086
        %v1207 = vpack.c.b16 %v1089, %v1088
        %v1208 = vpack.c.b16 %v1091, %v1090
        %v1209 = vpack.c.b16 %v1093, %v1092
        %v1210 = vpack.c.b16 %v1095, %v1094
        %v1211 = vpack.c.b16 %v1097, %v1096
        %v1212 = vpack.c.b16 %v1099, %v1098
        %v1213 = vpack.c.b16 %v1101, %v1100
        %v1214 = vpack.c.b16 %v1103, %v1102
        %v1215 = vpack.c.b16 %v1105, %v1104
        %v1216 = vpack.c.b16 %v1107, %v1106
        %v1217 = vpack.c.b16 %v1109, %v1108
        %v1218 = vpack.c.b16 %v1111, %v1110
        %v1219 = vpack.c.b16 %v1113, %v1112
        %v1220 = vpack.c.b16 %v1115, %v1114
        %v1221 = vpack.c.b16 %v1117, %v1116
        %v1222 = vpack.c.b16 %v1119, %v1118
        %v1223 = vpack.c.b16 %v1121, %v1120
        %v1224 = vpack.c.b16 %v1123, %v1122
        %v1225 = vpack.c.b16 %v1125, %v1124
        %v1226 = vpack.c.b16 %v1127, %v1126
        %v1227 = vpack.c.b16 %v1129, %v1128
        %v1228 = vpack.c.b16 %v1131, %v1130
        %v1229 = vpack.c.b16 %v1133, %v1132
        %v1230 = vpack.c.b16 %v1135, %v1134
        %v1231 = vpack.c.b16 %v1137, %v1136
        %v1232 = vpack.c.b16 %v1139, %v1138
        %v1233 = vpack.c.b16 %v1141, %v1140
        %v1234 = vpack.c.b16 %v1143, %v1142
        %v1235 = vpack.c.b16 %v1145, %v1144
        %v1236 = vpack.c.b16 %v1147, %v1146
        %v1237 = vpack.c.b16 %v1149, %v1148
        %v1238 = vpack.c.b16 %v1151, %v1150
        %v1239 = vpack.c.b16 %v1153, %v1152
        %v1240 = vpack.c.b16 %v1155, %v1154
        %v1241 = vpack.c.b16 %v1157, %v1156
        %v1242 = vpack.c.b16 %v1159, %v1158
        %v1243 = vpack.c.b16 %v1161, %v1160
        %v1244 = vpack.c.b16 %v1163, %v1162
        %v1245 = vpack.c.b16 %v1165, %v1164
        %v1246 = vpack.c.b16 %v1167, %v1166
        %v1247 = vpack.c.b16 %v1169, %v1168
        %v1248 = vpack.c.b16 %v1171, %v1170
        %v1249 = vpack.c.b16 %v1173, %v1172
        %v1250 = vpack.c.b16 %v1175, %v1174
        %v1251 = vpack.c.b16 %v1177, %v1176
        %v1252 = vpack.c.b16 %v1179, %v1178
        %v1253 = vpack.c.b16 %v1181, %v1180
        %v1254 = vpack.c.b16 %v1183, %v1182
        %v1255 = vpack.c.b16 %v1185, %v1184
        %v1256 = vpack.c.b16 %v1187, %v1186
        %v1257 = vpack.c.b16 %v1189, %v1188
        %v1258 = vpack.c.b16 %v1191, %v1190
        %v1259 = vpack.c.b16 %v1193, %v1192
        %v1260 = vpack.c.b16 %v1195, %v1194
        %v1261 = vpack.c.b16 %v1197, %v1196
        %v1262 = vpack.c.b16 %v1199, %v1198
        %v1263 = vpack.c.b16 %v1200, %v1200
        %vm1326 = vcmask 850944
        %v1328 = vsel %vm1326, %v814, 0
        %v1331 = vsel %vm1326, %v822, 0
        %vm1333 = vcmask 1043456
        %v1335 = vsel %vm1333, %v1263, 0
        %1337 = vmatprep.subr.bf16.mxu0 0
        %1338 = vmatpush1.bf16.msra.mxu0 %v1201
        %1339 = vmatprep.subr.bf16.mxu0 0
        %1340 = vmatpush1.bf16.msra.mxu0 %v1202
        %1341 = vmatprep.subr.bf16.mxu0 0
        %1342 = vmatpush1.bf16.msra.mxu0 %v1203
        %1343 = vmatprep.subr.bf16.mxu0 0
        %1344 = vmatpush1.bf16.msra.mxu0 %v1204
        %1345 = vmatprep.subr.bf16.mxu0 0
        %1346 = vmatpush1.bf16.msra.mxu0 %v1205
        %1347 = vmatprep.subr.bf16.mxu0 0
        %1348 = vmatpush1.bf16.msra.mxu0 %v1206
        %1349 = vmatprep.subr.bf16.mxu0 0
        %1350 = vmatpush1.bf16.msra.mxu0 %v1207
        %1351 = vmatprep.subr.bf16.mxu0 0
        %1352 = vmatpush1.bf16.msra.mxu0 %v1208
        %1353 = vmatprep.subr.bf16.mxu0 0
        %1354 = vmatpush1.bf16.msra.mxu0 %v1209
        %1355 = vmatprep.subr.bf16.mxu0 0
        %1356 = vmatpush1.bf16.msra.mxu0 %v1210
        %1357 = vmatprep.subr.bf16.mxu0 0
        %1358 = vmatpush1.bf16.msra.mxu0 %v1211
        %1359 = vmatprep.subr.bf16.mxu0 0
        %1360 = vmatpush1.bf16.msra.mxu0 %v1212
        %1361 = vmatprep.subr.bf16.mxu0 0
        %1362 = vmatpush1.bf16.msra.mxu0 %v1213
        %1363 = vmatprep.subr.bf16.mxu0 0
        %1364 = vmatpush1.bf16.msra.mxu0 %v1214
        %1365 = vmatprep.subr.bf16.mxu0 0
        %1366 = vmatpush1.bf16.msra.mxu0 %v1215
        %1367 = vmatprep.subr.bf16.mxu0 0
        %1368 = vmatpush1.bf16.msra.mxu0 %v1216
        %1369 = vmatprep.mubr.bf16.mxu0 %v808
        %1370 = vmatmul.mubr.bf16.gmra.mrb[0].mxu0 %v807
        %v1371 = vpop.f32.mrb[0].mxu0
        %v1372 = vadd.f32 %v948, %v1371
        %v1373 = vpop.f32.mrb[0].mxu0
        %v1374 = vpop.f32.mrb[0].mxu0
        %v1375 = vadd.f32 %v949, %v1374
        %v1376 = vpop.f32.mrb[0].mxu0
        %1377 = vmatprep.mubr.bf16.mxu0 %v816
        %1378 = vmatmul.mubr.bf16.gmra.mrb[0].mxu0 %v815
        %v1379 = vpop.f32.mrb[0].mxu0
        %v1380 = vadd.f32 %v950, %v1379
        %v1381 = vpop.f32.mrb[0].mxu0
        %v1382 = vpop.f32.mrb[0].mxu0
        %v1383 = vpop.f32.mrb[0].mxu0
        %1384 = vdwg.mxu0
        %1385 = vmatprep.subr.bf16.mxu0 0
        %1386 = vmatpush1.bf16.msra.mxu0 %v1217
        %1387 = vmatprep.subr.bf16.mxu0 0
        %1388 = vmatpush1.bf16.msra.mxu0 %v1218
        %1389 = vmatprep.subr.bf16.mxu0 0
        %1390 = vmatpush1.bf16.msra.mxu0 %v1219
        %1391 = vmatprep.subr.bf16.mxu0 0
        %1392 = vmatpush1.bf16.msra.mxu0 %v1220
        %1393 = vmatprep.subr.bf16.mxu0 0
        %1394 = vmatpush1.bf16.msra.mxu0 %v1221
        %1395 = vmatprep.subr.bf16.mxu0 0
        %1396 = vmatpush1.bf16.msra.mxu0 %v1222
        %1397 = vmatprep.subr.bf16.mxu0 0
        %1398 = vmatpush1.bf16.msra.mxu0 %v1223
        %1399 = vmatprep.subr.bf16.mxu0 0
        %1400 = vmatpush1.bf16.msra.mxu0 %v1224
        %1401 = vmatprep.subr.bf16.mxu0 0
        %1402 = vmatpush1.bf16.msra.mxu0 %v1225
        %1403 = vmatprep.subr.bf16.mxu0 0
        %1404 = vmatpush1.bf16.msra.mxu0 %v1226
        %1405 = vmatprep.subr.bf16.mxu0 0
        %1406 = vmatpush1.bf16.msra.mxu0 %v1227
        %1407 = vmatprep.subr.bf16.mxu0 0
        %1408 = vmatpush1.bf16.msra.mxu0 %v1228
        %1409 = vmatprep.subr.bf16.mxu0 0
        %1410 = vmatpush1.bf16.msra.mxu0 %v1229
        %1411 = vmatprep.subr.bf16.mxu0 0
        %1412 = vmatpush1.bf16.msra.mxu0 %v1230
        %1413 = vmatprep.subr.bf16.mxu0 0
        %1414 = vmatpush1.bf16.msra.mxu0 %v1231
        %1415 = vmatprep.subr.bf16.mxu0 0
        %1416 = vmatpush1.bf16.msra.mxu0 %v1232
        %1417 = vmatprep.mubr.bf16.mxu0 %v810
        %1418 = vmatmul.mubr.bf16.gmra.mrb[0].mxu0 %v809
        %v1419 = vpop.f32.mrb[0].mxu0
        %v1420 = vadd.f32 %v1372, %v1419
        %v1421 = vpop.f32.mrb[0].mxu0
        %v1422 = vpop.f32.mrb[0].mxu0
        %v1423 = vadd.f32 %v1375, %v1422
        %v1424 = vpop.f32.mrb[0].mxu0
        %1425 = vmatprep.mubr.bf16.mxu0 %v818
        %1426 = vmatmul.mubr.bf16.gmra.mrb[0].mxu0 %v817
        %v1427 = vpop.f32.mrb[0].mxu0
        %v1428 = vadd.f32 %v1380, %v1427
        %v1429 = vpop.f32.mrb[0].mxu0
        %v1430 = vpop.f32.mrb[0].mxu0
        %v1431 = vpop.f32.mrb[0].mxu0
        %1432 = vdwg.mxu0
        %1433 = vmatprep.subr.bf16.mxu0 0
        %1434 = vmatpush1.bf16.msra.mxu0 %v1233
        %1435 = vmatprep.subr.bf16.mxu0 0
        %1436 = vmatpush1.bf16.msra.mxu0 %v1234
        %1437 = vmatprep.subr.bf16.mxu0 0
        %1438 = vmatpush1.bf16.msra.mxu0 %v1235
        %1439 = vmatprep.subr.bf16.mxu0 0
        %1440 = vmatpush1.bf16.msra.mxu0 %v1236
        %1441 = vmatprep.subr.bf16.mxu0 0
        %1442 = vmatpush1.bf16.msra.mxu0 %v1237
        %1443 = vmatprep.subr.bf16.mxu0 0
        %1444 = vmatpush1.bf16.msra.mxu0 %v1238
        %1445 = vmatprep.subr.bf16.mxu0 0
        %1446 = vmatpush1.bf16.msra.mxu0 %v1239
        %1447 = vmatprep.subr.bf16.mxu0 0
        %1448 = vmatpush1.bf16.msra.mxu0 %v1240
        %1449 = vmatprep.subr.bf16.mxu0 0
        %1450 = vmatpush1.bf16.msra.mxu0 %v1241
        %1451 = vmatprep.subr.bf16.mxu0 0
        %1452 = vmatpush1.bf16.msra.mxu0 %v1242
        %1453 = vmatprep.subr.bf16.mxu0 0
        %1454 = vmatpush1.bf16.msra.mxu0 %v1243
        %1455 = vmatprep.subr.bf16.mxu0 0
        %1456 = vmatpush1.bf16.msra.mxu0 %v1244
        %1457 = vmatprep.subr.bf16.mxu0 0
        %1458 = vmatpush1.bf16.msra.mxu0 %v1245
        %1459 = vmatprep.subr.bf16.mxu0 0
        %1460 = vmatpush1.bf16.msra.mxu0 %v1246
        %1461 = vmatprep.subr.bf16.mxu0 0
        %1462 = vmatpush1.bf16.msra.mxu0 %v1247
        %1463 = vmatprep.subr.bf16.mxu0 0
        %1464 = vmatpush1.bf16.msra.mxu0 %v1248
        %1465 = vmatprep.mubr.bf16.mxu0 %v812
        %1466 = vmatmul.mubr.bf16.gmra.mrb[0].mxu0 %v811
        %v1467 = vpop.f32.mrb[0].mxu0
        %v1468 = vadd.f32 %v1420, %v1467
        %v1469 = vpop.f32.mrb[0].mxu0
        %v1470 = vpop.f32.mrb[0].mxu0
        %v1471 = vadd.f32 %v1423, %v1470
        %v1472 = vpop.f32.mrb[0].mxu0
        %1473 = vmatprep.mubr.bf16.mxu0 %v820
        %1474 = vmatmul.mubr.bf16.gmra.mrb[0].mxu0 %v819
        %v1475 = vpop.f32.mrb[0].mxu0
        %v1476 = vadd.f32 %v1428, %v1475
        %v1477 = vpop.f32.mrb[0].mxu0
        %v1478 = vpop.f32.mrb[0].mxu0
        %v1479 = vpop.f32.mrb[0].mxu0
        %1480 = vdwg.mxu0
        %1481 = vmatprep.subr.bf16.mxu0 0
        %1482 = vmatpush1.bf16.msra.mxu0 %v1249
        %1483 = vmatprep.subr.bf16.mxu0 0
        %1484 = vmatpush1.bf16.msra.mxu0 %v1250
        %1485 = vmatprep.subr.bf16.mxu0 0
        %1486 = vmatpush1.bf16.msra.mxu0 %v1251
        %1487 = vmatprep.subr.bf16.mxu0 0
        %1488 = vmatpush1.bf16.msra.mxu0 %v1252
        %1489 = vmatprep.subr.bf16.mxu0 0
        %1490 = vmatpush1.bf16.msra.mxu0 %v1253
        %1491 = vmatprep.subr.bf16.mxu0 0
        %1492 = vmatpush1.bf16.msra.mxu0 %v1254
        %1493 = vmatprep.subr.bf16.mxu0 0
        %1494 = vmatpush1.bf16.msra.mxu0 %v1255
        %1495 = vmatprep.subr.bf16.mxu0 0
        %1496 = vmatpush1.bf16.msra.mxu0 %v1256
        %1497 = vmatprep.subr.bf16.mxu0 0
        %1498 = vmatpush1.bf16.msra.mxu0 %v1257
        %1499 = vmatprep.subr.bf16.mxu0 0
        %1500 = vmatpush1.bf16.msra.mxu0 %v1258
        %1501 = vmatprep.subr.bf16.mxu0 0
        %1502 = vmatpush1.bf16.msra.mxu0 %v1259
        %1503 = vmatprep.subr.bf16.mxu0 0
        %1504 = vmatpush1.bf16.msra.mxu0 %v1260
        %1505 = vmatprep.subr.bf16.mxu0 0
        %1506 = vmatpush1.bf16.msra.mxu0 %v1261
        %1507 = vmatprep.subr.bf16.mxu0 0
        %1508 = vmatpush1.bf16.msra.mxu0 %v1262
        %1509 = vmatprep.subr.bf16.mxu0 0
        %1510 = vmatpush1.bf16.msra.mxu0 %v1335
        %1511 = vmatprep.subr.bf16.mxu0 0
        %1512 = vmatpush1.bf16.msra.mxu0 0
        %1513 = vmatprep.mubr.bf16.mxu0 %v1328
        %1514 = vmatmul.mubr.bf16.gmra.mrb[0].mxu0 %v813
        %v1515 = vpop.f32.mrb[0].mxu0
        %v1516 = vadd.f32 %v1468, %v1515
        %v1517 = vpop.f32.mrb[0].mxu0
        %v1518 = vpop.f32.mrb[0].mxu0
        %v1519 = vadd.f32 %v1471, %v1518
        %v1520 = vpop.f32.mrb[0].mxu0
        %1521 = vmatprep.mubr.bf16.mxu0 %v1331
        %1522 = vmatmul.mubr.bf16.gmra.mrb[0].mxu0 %v821
        %v1523 = vpop.f32.mrb[0].mxu0
        %v1524 = vadd.f32 %v1476, %v1523
        %v1525 = vpop.f32.mrb[0].mxu0
        %v1526 = vpop.f32.mrb[0].mxu0
        %v1527 = vpop.f32.mrb[0].mxu0
        %1528 = vdwg.mxu0
        %vm1529 = vcmask 261120
        %1530 = vst.msk [vmem:[#allocation2] sm:$0xff] %vm1529, %v1516
        %1531 = vst.msk [vmem:[#allocation2 + $0x8] sm:$0xff] %vm1529, %v1519
        %vm1532 = vcmask 257024
        %1533 = vst.msk [vmem:[#allocation2 + $0x10] sm:$0xf] %vm1532, %v1524
      $region92: #{mini_transformer.1} parent=87 // pred_fallthru
        _
      %v1534 = vld [vmem:[#allocation2] sm:$0xff]
      %v1535 = vld [vmem:[#allocation2 + $0x8] sm:$0xff]
      %v1536 = vld [vmem:[#allocation2 + $0x10] sm:$0xf]
      %v1537 = vld [vmem:[%s3] sm:$0xff]
      %v1538 = vld [vmem:[%s3 + $0x8] sm:$0xff]
      %v1539 = vld [vmem:[%s3 + $0x10] sm:$0xf]
      %v1540 = vld [vmem:[%s668] sm:$0xff]
      %v1541 = vld [vmem:[%s668 + $0x8] sm:$0xff]
      %v1542 = vld [vmem:[%s668 + $0x10] sm:$0xff]
      %v1543 = vld [vmem:[%s668 + $0x18] sm:$0xff]
      %v1544 = vld [vmem:[%s671] sm:$0x1]
      %v1546 = vlaneseq
      %v1547 = vshrl.u32 %v1546, 7
      %v1548 = vsub.s32 0, %v1547
      %v1549 = vrot.slane %v1544, %v1548
      %vm1551 = vcmask 261120
      %v1553 = vsel %vm1551, %v1534, 0
      %v1556 = vsel %vm1551, %v1535, 0
      %v1559 = vsel %vm1551, %v1536, 0
      %1561 = vmatprep.subr.mxu0 0.0
      %1562 = vmatpush1.msra.mxu0 %v1540
      %1563 = vmatprep.subr.mxu0 0.0
      %1564 = vmatpush1.msra.mxu0 %v1541
      %1565 = vmatprep.subr.mxu0 0.0
      %1566 = vmatpush1.msra.mxu0 %v1542
      %1567 = vmatprep.subr.mxu0 0.0
      %1568 = vmatpush1.msra.mxu0 %v1543
      %1569 = vmatprep.subr.mxu0 0.0
      %1570 = vmatpush1.msra.mxu0 0.0
      %1571 = vmatprep.subr.mxu0 0.0
      %1572 = vmatpush1.msra.mxu0 0.0
      %1573 = vmatprep.subr.mxu0 0.0
      %1574 = vmatpush1.msra.mxu0 0.0
      %1575 = vmatprep.subr.mxu0 0.0
      %1576 = vmatpush1.msra.mxu0 0.0
      %1577 = vmatprep.subr.mxu0 0.0
      %1578 = vmatpush1.msra.mxu0 0.0
      %1579 = vmatprep.subr.mxu0 0.0
      %1580 = vmatpush1.msra.mxu0 0.0
      %1581 = vmatprep.subr.mxu0 0.0
      %1582 = vmatpush1.msra.mxu0 0.0
      %1583 = vmatprep.subr.mxu0 0.0
      %1584 = vmatpush1.msra.mxu0 0.0
      %1585 = vmatprep.subr.mxu0 0.0
      %1586 = vmatpush1.msra.mxu0 0.0
      %1587 = vmatprep.subr.mxu0 0.0
      %1588 = vmatpush1.msra.mxu0 0.0
      %1589 = vmatprep.subr.mxu0 0.0
      %1590 = vmatpush1.msra.mxu0 0.0
      %1591 = vmatprep.subr.mxu0 0.0
      %1592 = vmatpush1.msra.mxu0 0.0
      %1593 = vmatprep.subr.mxu0 0.0
      %1594 = vmatpush1.msra.mxu0 0.0
      %1595 = vmatprep.subr.mxu0 0.0
      %1596 = vmatpush1.msra.mxu0 0.0
      %1597 = vmatprep.subr.mxu0 0.0
      %1598 = vmatpush1.msra.mxu0 0.0
      %1599 = vmatprep.subr.mxu0 0.0
      %1600 = vmatpush1.msra.mxu0 0.0
      %1601 = vmatprep.subr.mxu0 0.0
      %1602 = vmatpush1.msra.mxu0 0.0
      %1603 = vmatprep.subr.mxu0 0.0
      %1604 = vmatpush1.msra.mxu0 0.0
      %1605 = vmatprep.subr.mxu0 0.0
      %1606 = vmatpush1.msra.mxu0 0.0
      %1607 = vmatprep.subr.mxu0 0.0
      %1608 = vmatpush1.msra.mxu0 0.0
      %1609 = vmatprep.subr.mxu0 0.0
      %1610 = vmatpush1.msra.mxu0 0.0
      %1611 = vmatprep.subr.mxu0 0.0
      %1612 = vmatpush1.msra.mxu0 0.0
      %1613 = vmatprep.subr.mxu0 0.0
      %1614 = vmatpush1.msra.mxu0 0.0
      %1615 = vmatprep.subr.mxu0 0.0
      %1616 = vmatpush1.msra.mxu0 0.0
      %1617 = vmatprep.subr.mxu0 0.0
      %1618 = vmatpush1.msra.mxu0 0.0
      %1619 = vmatprep.subr.mxu0 0.0
      %1620 = vmatpush1.msra.mxu0 0.0
      %1621 = vmatprep.subr.mxu0 0.0
      %1622 = vmatpush1.msra.mxu0 0.0
      %1623 = vmatprep.subr.mxu0 0.0
      %1624 = vmatpush1.msra.mxu0 0.0
      %1625 = vmatprep.mubr.f32.mxu0 0.0
      %1626 = vmatmul.mubr.f32.gmra.mrb[0].mxu0 %v1553
      %v1627 = vpop.f32.mrb[0].mxu0
      %v1628 = vadd.f32 %v1549, %v1627
      %v1629 = vpop.f32.mrb[0].mxu0
      %1630 = vmatprep.mubr.f32.mxu0 0.0
      %1631 = vmatmul.mubr.f32.gmra.mrb[0].mxu0 %v1556
      %v1632 = vpop.f32.mrb[0].mxu0
      %v1633 = vadd.f32 %v1549, %v1632
      %v1634 = vpop.f32.mrb[0].mxu0
      %1635 = vmatprep.mubr.f32.mxu0 0.0
      %1636 = vmatmul.mubr.f32.gmra.mrb[0].mxu0 %v1559
      %v1637 = vpop.f32.mrb[0].mxu0
      %v1638 = vadd.f32 %v1549, %v1637
      %v1639 = vpop.f32.mrb[0].mxu0
      %1640 = vdwg.mxu0
      %v1641 = vld [vmem:[%s4] sm:$0x1]
      %v1642 = vlaneseq
      %v1643 = vshrl.u32 %v1642, 7
      %v1644 = vsub.s32 0, %v1643
      %v1645 = vrot.slane %v1641, %v1644
      %v1646 = vmul.f32 %v1628, %v1645
      %v1647 = vmul.f32 %v1633, %v1645
      %v1648 = vmul.f32 %v1638, %v1645
      %1652 = vrot.lane.b32.xlu0 %v1628, 96
      %v1653 = vpop.permute.xlu0 %1652
      %1654 = vrot.lane.b32.xlu0 %v1633, 96
      %v1655 = vpop.permute.xlu0 %1654
      %1656 = vrot.lane.b32.xlu0 %v1638, 96
      %v1657 = vpop.permute.xlu0 %1656
      %v1659 = vsel %vm1551, %v1646, 0
      %v1662 = vsel %vm1551, %v1647, 0
      %v1665 = vsel %vm1551, %v1648, 0
      %v1667 = vsel %vm1551, %v1653, 0
      %v1669 = vsel %vm1551, %v1655, 0
      %v1671 = vsel %vm1551, %v1657, 0
      %1673 = vmatprep.subr.mxu0 0.0
      %1674 = vmatpush1.xpose.msra.mxu0 %v1667
      %1675 = vmatprep.subr.mxu0 0.0
      %1676 = vmatpush1.xpose.msra.mxu0 %v1669
      %1677 = vmatprep.subr.mxu0 0.0
      %1678 = vmatpush1.xpose.msra.mxu0 %v1671
      %1679 = vmatprep.subr.mxu0 0.0
      %1680 = vmatpush1.xpose.msra.mxu0 0.0
      %1681 = vmatprep.subr.mxu0 0.0
      %1682 = vmatpush1.xpose.msra.mxu0 0.0
      %1683 = vmatprep.subr.mxu0 0.0
      %1684 = vmatpush1.xpose.msra.mxu0 0.0
      %1685 = vmatprep.subr.mxu0 0.0
      %1686 = vmatpush1.xpose.msra.mxu0 0.0
      %1687 = vmatprep.subr.mxu0 0.0
      %1688 = vmatpush1.xpose.msra.mxu0 0.0
      %1689 = vmatprep.subr.mxu0 0.0
      %1690 = vmatpush1.xpose.msra.mxu0 0.0
      %1691 = vmatprep.subr.mxu0 0.0
      %1692 = vmatpush1.xpose.msra.mxu0 0.0
      %1693 = vmatprep.subr.mxu0 0.0
      %1694 = vmatpush1.xpose.msra.mxu0 0.0
      %1695 = vmatprep.subr.mxu0 0.0
      %1696 = vmatpush1.xpose.msra.mxu0 0.0
      %1697 = vmatprep.subr.mxu0 0.0
      %1698 = vmatpush1.xpose.msra.mxu0 0.0
      %1699 = vmatprep.subr.mxu0 0.0
      %1700 = vmatpush1.xpose.msra.mxu0 0.0
      %1701 = vmatprep.subr.mxu0 0.0
      %1702 = vmatpush1.xpose.msra.mxu0 0.0
      %1703 = vmatprep.subr.mxu0 0.0
      %1704 = vmatpush1.xpose.msra.mxu0 0.0
      %1705 = vmatprep.subr.mxu0 0.0
      %1706 = vmatpush1.xpose.msra.mxu0 0.0
      %1707 = vmatprep.subr.mxu0 0.0
      %1708 = vmatpush1.xpose.msra.mxu0 0.0
      %1709 = vmatprep.subr.mxu0 0.0
      %1710 = vmatpush1.xpose.msra.mxu0 0.0
      %1711 = vmatprep.subr.mxu0 0.0
      %1712 = vmatpush1.xpose.msra.mxu0 0.0
      %1713 = vmatprep.subr.mxu0 0.0
      %1714 = vmatpush1.xpose.msra.mxu0 0.0
      %1715 = vmatprep.subr.mxu0 0.0
      %1716 = vmatpush1.xpose.msra.mxu0 0.0
      %1717 = vmatprep.subr.mxu0 0.0
      %1718 = vmatpush1.xpose.msra.mxu0 0.0
      %1719 = vmatprep.subr.mxu0 0.0
      %1720 = vmatpush1.xpose.msra.mxu0 0.0
      %1721 = vmatprep.subr.mxu0 0.0
      %1722 = vmatpush1.xpose.msra.mxu0 0.0
      %1723 = vmatprep.subr.mxu0 0.0
      %1724 = vmatpush1.xpose.msra.mxu0 0.0
      %1725 = vmatprep.subr.mxu0 0.0
      %1726 = vmatpush1.xpose.msra.mxu0 0.0
      %1727 = vmatprep.subr.mxu0 0.0
      %1728 = vmatpush1.xpose.msra.mxu0 0.0
      %1729 = vmatprep.subr.mxu0 0.0
      %1730 = vmatpush1.xpose.msra.mxu0 0.0
      %1731 = vmatprep.subr.mxu0 0.0
      %1732 = vmatpush1.xpose.msra.mxu0 0.0
      %1733 = vmatprep.subr.mxu0 0.0
      %1734 = vmatpush1.xpose.msra.mxu0 0.0
      %1735 = vmatprep.subr.mxu0 0.0
      %1736 = vmatpush1.xpose.msra.mxu0 0.0
      %1737 = vmatprep.mubr.f32.mxu0 0.0
      %1738 = vmatmul.mubr.f32.gmra.mrb[0].mxu0 %v1659
      %v1739 = vpop.f32.mrb[0].mxu0
      %v1740 = vadd.f32 0.0, %v1739
      %v1741 = vpop.f32.mrb[0].mxu0
      %1742 = vmatprep.mubr.f32.mxu0 0.0
      %1743 = vmatmul.mubr.f32.gmra.mrb[0].mxu0 %v1662
      %v1744 = vpop.f32.mrb[0].mxu0
      %v1745 = vadd.f32 0.0, %v1744
      %v1746 = vpop.f32.mrb[0].mxu0
      %1747 = vmatprep.mubr.f32.mxu0 0.0
      %1748 = vmatmul.mubr.f32.gmra.mrb[0].mxu0 %v1665
      %v1749 = vpop.f32.mrb[0].mxu0
      %v1750 = vadd.f32 0.0, %v1749
      %v1751 = vpop.f32.mrb[0].mxu0
      %1752 = vdwg.mxu0
      %v1753 = vmul.f32 %v1740, 0.35355338
      %v1754 = vmul.f32 %v1745, 0.35355338
      %v1755 = vmul.f32 %v1750, 0.35355338
      %v1756 = vadd.f32 %v1753, %v1537
      %v1757 = vadd.f32 %v1754, %v1538
      %v1758 = vadd.f32 %v1755, %v1539
      %vm1759 = vcmask 162816
      %v1760 = vsel %vm1759, %v1756, -inf
      %1761 = vmax.xlane.f32.xlu0 %v1760
      %v1762 = vpop.xlane.xlu0 %1761
      %v1763 = vsel %vm1759, %v1757, -inf
      %1764 = vmax.xlane.f32.xlu0 %v1763
      %v1765 = vpop.xlane.xlu0 %1764
      %vm1766 = vcmask 158720
      %v1767 = vsel %vm1766, %v1758, -inf
      %1768 = vmax.xlane.f32.xlu0 %v1767
      %v1769 = vpop.xlane.xlu0 %1768
      %v1770 = vsub.f32 %v1756, %v1762
      %v1771 = vsub.f32 %v1757, %v1765
      %v1772 = vsub.f32 %v1758, %v1769
      %v1773 = vmul.f32 %v1770, 1.442695
      %v1774 = vpow.pop %v1773
      %v1775 = vmul.f32 %v1771, 1.442695
      %v1776 = vpow.pop %v1775
      %v1777 = vmul.f32 %v1772, 1.442695
      %v1778 = vpow.pop %v1777
      %1780 = vrot.lane.b32.xlu0 %v1645, 64
      %v1781 = vpop.permute.xlu0 %1780
      %v1783 = vmul.f32 %v1628, %v1781
      %v1784 = vmul.f32 %v1633, %v1781
      %v1785 = vmul.f32 %v1638, %v1781
      %v1786 = vsel %vm1759, %v1774, 0.0
      %1787 = vadd.xlane.f32.xlu0 %v1786
      %v1788 = vpop.xlane.xlu0 %1787
      %v1789 = vsel %vm1759, %v1776, 0.0
      %1790 = vadd.xlane.f32.xlu0 %v1789
      %v1791 = vpop.xlane.xlu0 %1790
      %v1792 = vsel %vm1766, %v1778, 0.0
      %1793 = vadd.xlane.f32.xlu0 %v1792
      %v1794 = vpop.xlane.xlu0 %1793
      %v1795 = vmul.f32 %v1788, %v1645
      %v1796 = vmul.f32 %v1791, %v1645
      %v1797 = vmul.f32 %v1794, %v1645
      %v1798 = vadd.f32 %v1795, 0.0
      %v1799 = vadd.f32 %v1796, 0.0
      %v1800 = vadd.f32 %v1797, 0.0
      %v1801 = vld [vmem:[%s4 + $0x1] sm:$0x1]
      %v1802 = vlaneseq
      %v1803 = vshrl.u32 %v1802, 7
      %v1804 = vsub.s32 0, %v1803
      %v1805 = vrot.slane %v1801, %v1804
      %v1806 = vmul.f32 %v1628, %v1805
      %v1807 = vmul.f32 %v1633, %v1805
      %v1808 = vmul.f32 %v1638, %v1805
      %v1810 = vsel %vm1551, %v1806, 0
      %v1813 = vsel %vm1551, %v1807, 0
      %v1816 = vsel %vm1551, %v1808, 0
      %1818 = vmatprep.subr.mxu0 0.0
      %1819 = vmatpush1.xpose.msra.mxu0 %v1667
      %1820 = vmatprep.subr.mxu0 0.0
      %1821 = vmatpush1.xpose.msra.mxu0 %v1669
      %1822 = vmatprep.subr.mxu0 0.0
      %1823 = vmatpush1.xpose.msra.mxu0 %v1671
      %1824 = vmatprep.subr.mxu0 0.0
      %1825 = vmatpush1.xpose.msra.mxu0 0.0
      %1826 = vmatprep.subr.mxu0 0.0
      %1827 = vmatpush1.xpose.msra.mxu0 0.0
      %1828 = vmatprep.subr.mxu0 0.0
      %1829 = vmatpush1.xpose.msra.mxu0 0.0
      %1830 = vmatprep.subr.mxu0 0.0
      %1831 = vmatpush1.xpose.msra.mxu0 0.0
      %1832 = vmatprep.subr.mxu0 0.0
      %1833 = vmatpush1.xpose.msra.mxu0 0.0
      %1834 = vmatprep.subr.mxu0 0.0
      %1835 = vmatpush1.xpose.msra.mxu0 0.0
      %1836 = vmatprep.subr.mxu0 0.0
      %1837 = vmatpush1.xpose.msra.mxu0 0.0
      %1838 = vmatprep.subr.mxu0 0.0
      %1839 = vmatpush1.xpose.msra.mxu0 0.0
      %1840 = vmatprep.subr.mxu0 0.0
      %1841 = vmatpush1.xpose.msra.mxu0 0.0
      %1842 = vmatprep.subr.mxu0 0.0
      %1843 = vmatpush1.xpose.msra.mxu0 0.0
      %1844 = vmatprep.subr.mxu0 0.0
      %1845 = vmatpush1.xpose.msra.mxu0 0.0
      %1846 = vmatprep.subr.mxu0 0.0
      %1847 = vmatpush1.xpose.msra.mxu0 0.0
      %1848 = vmatprep.subr.mxu0 0.0
      %1849 = vmatpush1.xpose.msra.mxu0 0.0
      %1850 = vmatprep.subr.mxu0 0.0
      %1851 = vmatpush1.xpose.msra.mxu0 0.0
      %1852 = vmatprep.subr.mxu0 0.0
      %1853 = vmatpush1.xpose.msra.mxu0 0.0
      %1854 = vmatprep.subr.mxu0 0.0
      %1855 = vmatpush1.xpose.msra.mxu0 0.0
      %1856 = vmatprep.subr.mxu0 0.0
      %1857 = vmatpush1.xpose.msra.mxu0 0.0
      %1858 = vmatprep.subr.mxu0 0.0
      %1859 = vmatpush1.xpose.msra.mxu0 0.0
      %1860 = vmatprep.subr.mxu0 0.0
      %1861 = vmatpush1.xpose.msra.mxu0 0.0
      %1862 = vmatprep.subr.mxu0 0.0
      %1863 = vmatpush1.xpose.msra.mxu0 0.0
      %1864 = vmatprep.subr.mxu0 0.0
      %1865 = vmatpush1.xpose.msra.mxu0 0.0
      %1866 = vmatprep.subr.mxu0 0.0
      %1867 = vmatpush1.xpose.msra.mxu0 0.0
      %1868 = vmatprep.subr.mxu0 0.0
      %1869 = vmatpush1.xpose.msra.mxu0 0.0
      %1870 = vmatprep.subr.mxu0 0.0
      %1871 = vmatpush1.xpose.msra.mxu0 0.0
      %1872 = vmatprep.subr.mxu0 0.0
      %1873 = vmatpush1.xpose.msra.mxu0 0.0
      %1874 = vmatprep.subr.mxu0 0.0
      %1875 = vmatpush1.xpose.msra.mxu0 0.0
      %1876 = vmatprep.subr.mxu0 0.0
      %1877 = vmatpush1.xpose.msra.mxu0 0.0
      %1878 = vmatprep.subr.mxu0 0.0
      %1879 = vmatpush1.xpose.msra.mxu0 0.0
      %1880 = vmatprep.subr.mxu0 0.0
      %1881 = vmatpush1.xpose.msra.mxu0 0.0
      %1882 = vmatprep.mubr.f32.mxu0 0.0
      %1883 = vmatmul.mubr.f32.gmra.mrb[0].mxu0 %v1810
      %v1884 = vpop.f32.mrb[0].mxu0
      %v1885 = vadd.f32 0.0, %v1884
      %v1886 = vpop.f32.mrb[0].mxu0
      %1887 = vmatprep.mubr.f32.mxu0 0.0
      %1888 = vmatmul.mubr.f32.gmra.mrb[0].mxu0 %v1813
      %v1889 = vpop.f32.mrb[0].mxu0
      %v1890 = vadd.f32 0.0, %v1889
      %v1891 = vpop.f32.mrb[0].mxu0
      %1892 = vmatprep.mubr.f32.mxu0 0.0
      %1893 = vmatmul.mubr.f32.gmra.mrb[0].mxu0 %v1816
      %v1894 = vpop.f32.mrb[0].mxu0
      %v1895 = vadd.f32 0.0, %v1894
      %v1896 = vpop.f32.mrb[0].mxu0
      %1897 = vdwg.mxu0
      %v1898 = vmul.f32 %v1885, 0.35355338
      %v1899 = vmul.f32 %v1890, 0.35355338
      %v1900 = vmul.f32 %v1895, 0.35355338
      %v1901 = vadd.f32 %v1898, %v1537
      %v1902 = vadd.f32 %v1899, %v1538
      %v1903 = vadd.f32 %v1900, %v1539
      %v1904 = vsel %vm1759, %v1901, -inf
      %1905 = vmax.xlane.f32.xlu0 %v1904
      %v1906 = vpop.xlane.xlu0 %1905
      %v1907 = vsel %vm1759, %v1902, -inf
      %1908 = vmax.xlane.f32.xlu0 %v1907
      %v1909 = vpop.xlane.xlu0 %1908
      %v1910 = vsel %vm1766, %v1903, -inf
      %1911 = vmax.xlane.f32.xlu0 %v1910
      %v1912 = vpop.xlane.xlu0 %1911
      %v1913 = vsub.f32 %v1901, %v1906
      %v1914 = vsub.f32 %v1902, %v1909
      %v1915 = vsub.f32 %v1903, %v1912
      %v1916 = vmul.f32 %v1913, 1.442695
      %v1917 = vpow.pop %v1916
      %v1918 = vmul.f32 %v1914, 1.442695
      %v1919 = vpow.pop %v1918
      %v1920 = vmul.f32 %v1915, 1.442695
      %v1921 = vpow.pop %v1920
      %1923 = vrot.lane.b32.xlu0 %v1805, 64
      %v1924 = vpop.permute.xlu0 %1923
      %v1926 = vmul.f32 %v1628, %v1924
      %v1927 = vmul.f32 %v1633, %v1924
      %v1928 = vmul.f32 %v1638, %v1924
      %1932 = vrot.lane.b32.xlu0 %v1926, 64
      %v1933 = vpop.permute.xlu0 %1932
      %1934 = vrot.lane.b32.xlu0 %v1927, 64
      %v1935 = vpop.permute.xlu0 %1934
      %1936 = vrot.lane.b32.xlu0 %v1928, 64
      %v1937 = vpop.permute.xlu0 %1936
      %v1941 = vsel %vm1759, %v1917, 0
      %v1944 = vsel %vm1759, %v1919, 0
      %v1947 = vsel %vm1759, %v1921, 0
      %vm1949 = vcmask 1043456
      %v1950 = vsel %vm1949, %v1937, 0
      %1952 = vmatprep.subr.mxu0 0.0
      %1953 = vmatpush1.msra.mxu0 %v1933
      %1954 = vmatprep.subr.mxu0 0.0
      %1955 = vmatpush1.msra.mxu0 %v1935
      %1956 = vmatprep.subr.mxu0 0.0
      %1957 = vmatpush1.msra.mxu0 %v1950
      %1958 = vmatprep.subr.mxu0 0.0
      %1959 = vmatpush1.msra.mxu0 0.0
      %1960 = vmatprep.subr.mxu0 0.0
      %1961 = vmatpush1.msra.mxu0 0.0
      %1962 = vmatprep.subr.mxu0 0.0
      %1963 = vmatpush1.msra.mxu0 0.0
      %1964 = vmatprep.subr.mxu0 0.0
      %1965 = vmatpush1.msra.mxu0 0.0
      %1966 = vmatprep.subr.mxu0 0.0
      %1967 = vmatpush1.msra.mxu0 0.0
      %1968 = vmatprep.subr.mxu0 0.0
      %1969 = vmatpush1.msra.mxu0 0.0
      %1970 = vmatprep.subr.mxu0 0.0
      %1971 = vmatpush1.msra.mxu0 0.0
      %1972 = vmatprep.subr.mxu0 0.0
      %1973 = vmatpush1.msra.mxu0 0.0
      %1974 = vmatprep.subr.mxu0 0.0
      %1975 = vmatpush1.msra.mxu0 0.0
      %1976 = vmatprep.subr.mxu0 0.0
      %1977 = vmatpush1.msra.mxu0 0.0
      %1978 = vmatprep.subr.mxu0 0.0
      %1979 = vmatpush1.msra.mxu0 0.0
      %1980 = vmatprep.subr.mxu0 0.0
      %1981 = vmatpush1.msra.mxu0 0.0
      %1982 = vmatprep.subr.mxu0 0.0
      %1983 = vmatpush1.msra.mxu0 0.0
      %1984 = vmatprep.subr.mxu0 0.0
      %1985 = vmatpush1.msra.mxu0 0.0
      %1986 = vmatprep.subr.mxu0 0.0
      %1987 = vmatpush1.msra.mxu0 0.0
      %1988 = vmatprep.subr.mxu0 0.0
      %1989 = vmatpush1.msra.mxu0 0.0
      %1990 = vmatprep.subr.mxu0 0.0
      %1991 = vmatpush1.msra.mxu0 0.0
      %1992 = vmatprep.subr.mxu0 0.0
      %1993 = vmatpush1.msra.mxu0 0.0
      %1994 = vmatprep.subr.mxu0 0.0
      %1995 = vmatpush1.msra.mxu0 0.0
      %1996 = vmatprep.subr.mxu0 0.0
      %1997 = vmatpush1.msra.mxu0 0.0
      %1998 = vmatprep.subr.mxu0 0.0
      %1999 = vmatpush1.msra.mxu0 0.0
      %2000 = vmatprep.subr.mxu0 0.0
      %2001 = vmatpush1.msra.mxu0 0.0
      %2002 = vmatprep.subr.mxu0 0.0
      %2003 = vmatpush1.msra.mxu0 0.0
      %2004 = vmatprep.subr.mxu0 0.0
      %2005 = vmatpush1.msra.mxu0 0.0
      %2006 = vmatprep.subr.mxu0 0.0
      %2007 = vmatpush1.msra.mxu0 0.0
      %2008 = vmatprep.subr.mxu0 0.0
      %2009 = vmatpush1.msra.mxu0 0.0
      %2010 = vmatprep.subr.mxu0 0.0
      %2011 = vmatpush1.msra.mxu0 0.0
      %2012 = vmatprep.subr.mxu0 0.0
      %2013 = vmatpush1.msra.mxu0 0.0
      %2014 = vmatprep.subr.mxu0 0.0
      %2015 = vmatpush1.msra.mxu0 0.0
      %2016 = vmatprep.mubr.f32.mxu0 0.0
      %2017 = vmatmul.mubr.f32.gmra.mrb[0].mxu0 %v1941
      %v2018 = vpop.f32.mrb[0].mxu0
      %v2019 = vadd.f32 0.0, %v2018
      %v2020 = vpop.f32.mrb[0].mxu0
      %2021 = vmatprep.mubr.f32.mxu0 0.0
      %2022 = vmatmul.mubr.f32.gmra.mrb[0].mxu0 %v1944
      %v2023 = vpop.f32.mrb[0].mxu0
      %v2024 = vadd.f32 0.0, %v2023
      %v2025 = vpop.f32.mrb[0].mxu0
      %2026 = vmatprep.mubr.f32.mxu0 0.0
      %2027 = vmatmul.mubr.f32.gmra.mrb[0].mxu0 %v1947
      %v2028 = vpop.f32.mrb[0].mxu0
      %v2029 = vadd.f32 0.0, %v2028
      %v2030 = vpop.f32.mrb[0].mxu0
      %2031 = vdwg.mxu0
      %2035 = vrot.lane.b32.xlu0 %v1783, 64
      %v2036 = vpop.permute.xlu0 %2035
      %2037 = vrot.lane.b32.xlu0 %v1784, 64
      %v2038 = vpop.permute.xlu0 %2037
      %2039 = vrot.lane.b32.xlu0 %v1785, 64
      %v2040 = vpop.permute.xlu0 %2039
      %v2044 = vsel %vm1759, %v1774, 0
      %v2047 = vsel %vm1759, %v1776, 0
      %v2050 = vsel %vm1759, %v1778, 0
      %v2052 = vsel %vm1949, %v2040, 0
      %2054 = vmatprep.subr.mxu0 0.0
      %2055 = vmatpush1.msra.mxu0 %v2036
      %2056 = vmatprep.subr.mxu0 0.0
      %2057 = vmatpush1.msra.mxu0 %v2038
      %2058 = vmatprep.subr.mxu0 0.0
      %2059 = vmatpush1.msra.mxu0 %v2052
      %2060 = vmatprep.subr.mxu0 0.0
      %2061 = vmatpush1.msra.mxu0 0.0
      %2062 = vmatprep.subr.mxu0 0.0
      %2063 = vmatpush1.msra.mxu0 0.0
      %2064 = vmatprep.subr.mxu0 0.0
      %2065 = vmatpush1.msra.mxu0 0.0
      %2066 = vmatprep.subr.mxu0 0.0
      %2067 = vmatpush1.msra.mxu0 0.0
      %2068 = vmatprep.subr.mxu0 0.0
      %2069 = vmatpush1.msra.mxu0 0.0
      %2070 = vmatprep.subr.mxu0 0.0
      %2071 = vmatpush1.msra.mxu0 0.0
      %2072 = vmatprep.subr.mxu0 0.0
      %2073 = vmatpush1.msra.mxu0 0.0
      %2074 = vmatprep.subr.mxu0 0.0
      %2075 = vmatpush1.msra.mxu0 0.0
      %2076 = vmatprep.subr.mxu0 0.0
      %2077 = vmatpush1.msra.mxu0 0.0
      %2078 = vmatprep.subr.mxu0 0.0
      %2079 = vmatpush1.msra.mxu0 0.0
      %2080 = vmatprep.subr.mxu0 0.0
      %2081 = vmatpush1.msra.mxu0 0.0
      %2082 = vmatprep.subr.mxu0 0.0
      %2083 = vmatpush1.msra.mxu0 0.0
      %2084 = vmatprep.subr.mxu0 0.0
      %2085 = vmatpush1.msra.mxu0 0.0
      %2086 = vmatprep.subr.mxu0 0.0
      %2087 = vmatpush1.msra.mxu0 0.0
      %2088 = vmatprep.subr.mxu0 0.0
      %2089 = vmatpush1.msra.mxu0 0.0
      %2090 = vmatprep.subr.mxu0 0.0
      %2091 = vmatpush1.msra.mxu0 0.0
      %2092 = vmatprep.subr.mxu0 0.0
      %2093 = vmatpush1.msra.mxu0 0.0
      %2094 = vmatprep.subr.mxu0 0.0
      %2095 = vmatpush1.msra.mxu0 0.0
      %2096 = vmatprep.subr.mxu0 0.0
      %2097 = vmatpush1.msra.mxu0 0.0
      %2098 = vmatprep.subr.mxu0 0.0
      %2099 = vmatpush1.msra.mxu0 0.0
      %2100 = vmatprep.subr.mxu0 0.0
      %2101 = vmatpush1.msra.mxu0 0.0
      %2102 = vmatprep.subr.mxu0 0.0
      %2103 = vmatpush1.msra.mxu0 0.0
      %2104 = vmatprep.subr.mxu0 0.0
      %2105 = vmatpush1.msra.mxu0 0.0
      %2106 = vmatprep.subr.mxu0 0.0
      %2107 = vmatpush1.msra.mxu0 0.0
      %2108 = vmatprep.subr.mxu0 0.0
      %2109 = vmatpush1.msra.mxu0 0.0
      %2110 = vmatprep.subr.mxu0 0.0
      %2111 = vmatpush1.msra.mxu0 0.0
      %2112 = vmatprep.subr.mxu0 0.0
      %2113 = vmatpush1.msra.mxu0 0.0
      %2114 = vmatprep.subr.mxu0 0.0
      %2115 = vmatpush1.msra.mxu0 0.0
      %2116 = vmatprep.subr.mxu0 0.0
      %2117 = vmatpush1.msra.mxu0 0.0
      %2118 = vmatprep.mubr.f32.mxu0 0.0
      %2119 = vmatmul.mubr.f32.gmra.mrb[0].mxu0 %v2044
      %v2120 = vpop.f32.mrb[0].mxu0
      %v2121 = vadd.f32 %v2019, %v2120
      %v2122 = vpop.f32.mrb[0].mxu0
      %2123 = vmatprep.mubr.f32.mxu0 0.0
      %2124 = vmatmul.mubr.f32.gmra.mrb[0].mxu0 %v2047
      %v2125 = vpop.f32.mrb[0].mxu0
      %v2126 = vadd.f32 %v2024, %v2125
      %v2127 = vpop.f32.mrb[0].mxu0
      %2128 = vmatprep.mubr.f32.mxu0 0.0
      %2129 = vmatmul.mubr.f32.gmra.mrb[0].mxu0 %v2050
      %v2130 = vpop.f32.mrb[0].mxu0
      %v2131 = vadd.f32 %v2029, %v2130
      %v2132 = vpop.f32.mrb[0].mxu0
      %2133 = vdwg.mxu0
      %v2134 = vsel %vm1759, %v1917, 0.0
      %2135 = vadd.xlane.f32.xlu0 %v2134
      %v2136 = vpop.xlane.xlu0 %2135
      %v2137 = vsel %vm1759, %v1919, 0.0
      %2138 = vadd.xlane.f32.xlu0 %v2137
      %v2139 = vpop.xlane.xlu0 %2138
      %v2140 = vsel %vm1766, %v1921, 0.0
      %2141 = vadd.xlane.f32.xlu0 %v2140
      %v2142 = vpop.xlane.xlu0 %2141
      %v2143 = vmul.f32 %v2136, %v1805
      %v2144 = vmul.f32 %v2139, %v1805
      %v2145 = vmul.f32 %v2142, %v1805
      %v2146 = vadd.f32 %v1798, %v2143
      %v2147 = vadd.f32 %v1799, %v2144
      %v2148 = vadd.f32 %v1800, %v2145
      %v2149 = vld [vmem:[%s4 + $0x2] sm:$0x1]
      %v2150 = vlaneseq
      %v2151 = vshrl.u32 %v2150, 7
      %v2152 = vsub.s32 0, %v2151
      %v2153 = vrot.slane %v2149, %v2152
      %v2154 = vmul.f32 %v1628, %v2153
      %v2155 = vmul.f32 %v1633, %v2153
      %v2156 = vmul.f32 %v1638, %v2153
      %v2158 = vsel %vm1551, %v2154, 0
      %v2161 = vsel %vm1551, %v2155, 0
      %v2164 = vsel %vm1551, %v2156, 0
      %2166 = vmatprep.subr.mxu0 0.0
      %2167 = vmatpush1.xpose.msra.mxu0 %v1667
      %2168 = vmatprep.subr.mxu0 0.0
      %2169 = vmatpush1.xpose.msra.mxu0 %v1669
      %2170 = vmatprep.subr.mxu0 0.0
      %2171 = vmatpush1.xpose.msra.mxu0 %v1671
      %2172 = vmatprep.subr.mxu0 0.0
      %2173 = vmatpush1.xpose.msra.mxu0 0.0
      %2174 = vmatprep.subr.mxu0 0.0
      %2175 = vmatpush1.xpose.msra.mxu0 0.0
      %2176 = vmatprep.subr.mxu0 0.0
      %2177 = vmatpush1.xpose.msra.mxu0 0.0
      %2178 = vmatprep.subr.mxu0 0.0
      %2179 = vmatpush1.xpose.msra.mxu0 0.0
      %2180 = vmatprep.subr.mxu0 0.0
      %2181 = vmatpush1.xpose.msra.mxu0 0.0
      %2182 = vmatprep.subr.mxu0 0.0
      %2183 = vmatpush1.xpose.msra.mxu0 0.0
      %2184 = vmatprep.subr.mxu0 0.0
      %2185 = vmatpush1.xpose.msra.mxu0 0.0
      %2186 = vmatprep.subr.mxu0 0.0
      %2187 = vmatpush1.xpose.msra.mxu0 0.0
      %2188 = vmatprep.subr.mxu0 0.0
      %2189 = vmatpush1.xpose.msra.mxu0 0.0
      %2190 = vmatprep.subr.mxu0 0.0
      %2191 = vmatpush1.xpose.msra.mxu0 0.0
      %2192 = vmatprep.subr.mxu0 0.0
      %2193 = vmatpush1.xpose.msra.mxu0 0.0
      %2194 = vmatprep.subr.mxu0 0.0
      %2195 = vmatpush1.xpose.msra.mxu0 0.0
      %2196 = vmatprep.subr.mxu0 0.0
      %2197 = vmatpush1.xpose.msra.mxu0 0.0
      %2198 = vmatprep.subr.mxu0 0.0
      %2199 = vmatpush1.xpose.msra.mxu0 0.0
      %2200 = vmatprep.subr.mxu0 0.0
      %2201 = vmatpush1.xpose.msra.mxu0 0.0
      %2202 = vmatprep.subr.mxu0 0.0
      %2203 = vmatpush1.xpose.msra.mxu0 0.0
      %2204 = vmatprep.subr.mxu0 0.0
      %2205 = vmatpush1.xpose.msra.mxu0 0.0
      %2206 = vmatprep.subr.mxu0 0.0
      %2207 = vmatpush1.xpose.msra.mxu0 0.0
      %2208 = vmatprep.subr.mxu0 0.0
      %2209 = vmatpush1.xpose.msra.mxu0 0.0
      %2210 = vmatprep.subr.mxu0 0.0
      %2211 = vmatpush1.xpose.msra.mxu0 0.0
      %2212 = vmatprep.subr.mxu0 0.0
      %2213 = vmatpush1.xpose.msra.mxu0 0.0
      %2214 = vmatprep.subr.mxu0 0.0
      %2215 = vmatpush1.xpose.msra.mxu0 0.0
      %2216 = vmatprep.subr.mxu0 0.0
      %2217 = vmatpush1.xpose.msra.mxu0 0.0
      %2218 = vmatprep.subr.mxu0 0.0
      %2219 = vmatpush1.xpose.msra.mxu0 0.0
      %2220 = vmatprep.subr.mxu0 0.0
      %2221 = vmatpush1.xpose.msra.mxu0 0.0
      %2222 = vmatprep.subr.mxu0 0.0
      %2223 = vmatpush1.xpose.msra.mxu0 0.0
      %2224 = vmatprep.subr.mxu0 0.0
      %2225 = vmatpush1.xpose.msra.mxu0 0.0
      %2226 = vmatprep.subr.mxu0 0.0
      %2227 = vmatpush1.xpose.msra.mxu0 0.0
      %2228 = vmatprep.subr.mxu0 0.0
      %2229 = vmatpush1.xpose.msra.mxu0 0.0
      %2230 = vmatprep.mubr.f32.mxu0 0.0
      %2231 = vmatmul.mubr.f32.gmra.mrb[0].mxu0 %v2158
      %v2232 = vpop.f32.mrb[0].mxu0
      %v2233 = vadd.f32 0.0, %v2232
      %v2234 = vpop.f32.mrb[0].mxu0
      %2235 = vmatprep.mubr.f32.mxu0 0.0
      %2236 = vmatmul.mubr.f32.gmra.mrb[0].mxu0 %v2161
      %v2237 = vpop.f32.mrb[0].mxu0
      %v2238 = vadd.f32 0.0, %v2237
      %v2239 = vpop.f32.mrb[0].mxu0
      %2240 = vmatprep.mubr.f32.mxu0 0.0
      %2241 = vmatmul.mubr.f32.gmra.mrb[0].mxu0 %v2164
      %v2242 = vpop.f32.mrb[0].mxu0
      %v2243 = vadd.f32 0.0, %v2242
      %v2244 = vpop.f32.mrb[0].mxu0
      %2245 = vdwg.mxu0
      %v2246 = vmul.f32 %v2233, 0.35355338
      %v2247 = vmul.f32 %v2238, 0.35355338
      %v2248 = vmul.f32 %v2243, 0.35355338
      %v2249 = vadd.f32 %v2246, %v1537
      %v2250 = vadd.f32 %v2247, %v1538
      %v2251 = vadd.f32 %v2248, %v1539
      %v2252 = vsel %vm1759, %v2249, -inf
      %2253 = vmax.xlane.f32.xlu0 %v2252
      %v2254 = vpop.xlane.xlu0 %2253
      %v2255 = vsel %vm1759, %v2250, -inf
      %2256 = vmax.xlane.f32.xlu0 %v2255
      %v2257 = vpop.xlane.xlu0 %2256
      %v2258 = vsel %vm1766, %v2251, -inf
      %2259 = vmax.xlane.f32.xlu0 %v2258
      %v2260 = vpop.xlane.xlu0 %2259
      %v2261 = vsub.f32 %v2249, %v2254
      %v2262 = vsub.f32 %v2250, %v2257
      %v2263 = vsub.f32 %v2251, %v2260
      %v2264 = vmul.f32 %v2261, 1.442695
      %v2265 = vpow.pop %v2264
      %v2266 = vmul.f32 %v2262, 1.442695
      %v2267 = vpow.pop %v2266
      %v2268 = vmul.f32 %v2263, 1.442695
      %v2269 = vpow.pop %v2268
      %2271 = vrot.lane.b32.xlu0 %v2153, 64
      %v2272 = vpop.permute.xlu0 %2271
      %v2274 = vmul.f32 %v1628, %v2272
      %v2275 = vmul.f32 %v1633, %v2272
      %v2276 = vmul.f32 %v1638, %v2272
      %2280 = vrot.lane.b32.xlu0 %v2274, 64
      %v2281 = vpop.permute.xlu0 %2280
      %2282 = vrot.lane.b32.xlu0 %v2275, 64
      %v2283 = vpop.permute.xlu0 %2282
      %2284 = vrot.lane.b32.xlu0 %v2276, 64
      %v2285 = vpop.permute.xlu0 %2284
      %v2289 = vsel %vm1759, %v2265, 0
      %v2292 = vsel %vm1759, %v2267, 0
      %v2295 = vsel %vm1759, %v2269, 0
      %v2297 = vsel %vm1949, %v2285, 0
      %2299 = vmatprep.subr.mxu0 0.0
      %2300 = vmatpush1.msra.mxu0 %v2281
      %2301 = vmatprep.subr.mxu0 0.0
      %2302 = vmatpush1.msra.mxu0 %v2283
      %2303 = vmatprep.subr.mxu0 0.0
      %2304 = vmatpush1.msra.mxu0 %v2297
      %2305 = vmatprep.subr.mxu0 0.0
      %2306 = vmatpush1.msra.mxu0 0.0
      %2307 = vmatprep.subr.mxu0 0.0
      %2308 = vmatpush1.msra.mxu0 0.0
      %2309 = vmatprep.subr.mxu0 0.0
      %2310 = vmatpush1.msra.mxu0 0.0
      %2311 = vmatprep.subr.mxu0 0.0
      %2312 = vmatpush1.msra.mxu0 0.0
      %2313 = vmatprep.subr.mxu0 0.0
      %2314 = vmatpush1.msra.mxu0 0.0
      %2315 = vmatprep.subr.mxu0 0.0
      %2316 = vmatpush1.msra.mxu0 0.0
      %2317 = vmatprep.subr.mxu0 0.0
      %2318 = vmatpush1.msra.mxu0 0.0
      %2319 = vmatprep.subr.mxu0 0.0
      %2320 = vmatpush1.msra.mxu0 0.0
      %2321 = vmatprep.subr.mxu0 0.0
      %2322 = vmatpush1.msra.mxu0 0.0
      %2323 = vmatprep.subr.mxu0 0.0
      %2324 = vmatpush1.msra.mxu0 0.0
      %2325 = vmatprep.subr.mxu0 0.0
      %2326 = vmatpush1.msra.mxu0 0.0
      %2327 = vmatprep.subr.mxu0 0.0
      %2328 = vmatpush1.msra.mxu0 0.0
      %2329 = vmatprep.subr.mxu0 0.0
      %2330 = vmatpush1.msra.mxu0 0.0
      %2331 = vmatprep.subr.mxu0 0.0
      %2332 = vmatpush1.msra.mxu0 0.0
      %2333 = vmatprep.subr.mxu0 0.0
      %2334 = vmatpush1.msra.mxu0 0.0
      %2335 = vmatprep.subr.mxu0 0.0
      %2336 = vmatpush1.msra.mxu0 0.0
      %2337 = vmatprep.subr.mxu0 0.0
      %2338 = vmatpush1.msra.mxu0 0.0
      %2339 = vmatprep.subr.mxu0 0.0
      %2340 = vmatpush1.msra.mxu0 0.0
      %2341 = vmatprep.subr.mxu0 0.0
      %2342 = vmatpush1.msra.mxu0 0.0
      %2343 = vmatprep.subr.mxu0 0.0
      %2344 = vmatpush1.msra.mxu0 0.0
      %2345 = vmatprep.subr.mxu0 0.0
      %2346 = vmatpush1.msra.mxu0 0.0
      %2347 = vmatprep.subr.mxu0 0.0
      %2348 = vmatpush1.msra.mxu0 0.0
      %2349 = vmatprep.subr.mxu0 0.0
      %2350 = vmatpush1.msra.mxu0 0.0
      %2351 = vmatprep.subr.mxu0 0.0
      %2352 = vmatpush1.msra.mxu0 0.0
      %2353 = vmatprep.subr.mxu0 0.0
      %2354 = vmatpush1.msra.mxu0 0.0
      %2355 = vmatprep.subr.mxu0 0.0
      %2356 = vmatpush1.msra.mxu0 0.0
      %2357 = vmatprep.subr.mxu0 0.0
      %2358 = vmatpush1.msra.mxu0 0.0
      %2359 = vmatprep.subr.mxu0 0.0
      %2360 = vmatpush1.msra.mxu0 0.0
      %2361 = vmatprep.subr.mxu0 0.0
      %2362 = vmatpush1.msra.mxu0 0.0
      %2363 = vmatprep.mubr.f32.mxu0 0.0
      %2364 = vmatmul.mubr.f32.gmra.mrb[0].mxu0 %v2289
      %v2365 = vpop.f32.mrb[0].mxu0
      %v2366 = vadd.f32 0.0, %v2365
      %v2367 = vpop.f32.mrb[0].mxu0
      %2368 = vmatprep.mubr.f32.mxu0 0.0
      %2369 = vmatmul.mubr.f32.gmra.mrb[0].mxu0 %v2292
      %v2370 = vpop.f32.mrb[0].mxu0
      %v2371 = vadd.f32 0.0, %v2370
      %v2372 = vpop.f32.mrb[0].mxu0
      %2373 = vmatprep.mubr.f32.mxu0 0.0
      %2374 = vmatmul.mubr.f32.gmra.mrb[0].mxu0 %v2295
      %v2375 = vpop.f32.mrb[0].mxu0
      %v2376 = vadd.f32 0.0, %v2375
      %v2377 = vpop.f32.mrb[0].mxu0
      %2378 = vdwg.mxu0
      %v2379 = vadd.f32 %v2121, %v2366
      %v2380 = vadd.f32 %v2126, %v2371
      %v2381 = vadd.f32 %v2131, %v2376
      %v2382 = vsel %vm1759, %v2265, 0.0
      %2383 = vadd.xlane.f32.xlu0 %v2382
      %v2384 = vpop.xlane.xlu0 %2383
      %v2385 = vsel %vm1759, %v2267, 0.0
      %2386 = vadd.xlane.f32.xlu0 %v2385
      %v2387 = vpop.xlane.xlu0 %2386
      %v2388 = vsel %vm1766, %v2269, 0.0
      %2389 = vadd.xlane.f32.xlu0 %v2388
      %v2390 = vpop.xlane.xlu0 %2389
      %v2391 = vmul.f32 %v2384, %v2153
      %v2392 = vmul.f32 %v2387, %v2153
      %v2393 = vmul.f32 %v2390, %v2153
      %v2394 = vadd.f32 %v2146, %v2391
      %v2395 = vadd.f32 %v2147, %v2392
      %v2396 = vadd.f32 %v2148, %v2393
      %v2397 = vld [vmem:[%s4 + $0x3] sm:$0x1]
      %v2398 = vlaneseq
      %v2399 = vshrl.u32 %v2398, 7
      %v2400 = vsub.s32 0, %v2399
      %v2401 = vrot.slane %v2397, %v2400
      %v2402 = vmul.f32 %v1628, %v2401
      %v2403 = vmul.f32 %v1633, %v2401
      %v2404 = vmul.f32 %v1638, %v2401
      %v2406 = vsel %vm1551, %v2402, 0
      %v2409 = vsel %vm1551, %v2403, 0
      %v2412 = vsel %vm1551, %v2404, 0
      %2414 = vmatprep.subr.mxu0 0.0
      %2415 = vmatpush1.xpose.msra.mxu0 %v1667
      %2416 = vmatprep.subr.mxu0 0.0
      %2417 = vmatpush1.xpose.msra.mxu0 %v1669
      %2418 = vmatprep.subr.mxu0 0.0
      %2419 = vmatpush1.xpose.msra.mxu0 %v1671
      %2420 = vmatprep.subr.mxu0 0.0
      %2421 = vmatpush1.xpose.msra.mxu0 0.0
      %2422 = vmatprep.subr.mxu0 0.0
      %2423 = vmatpush1.xpose.msra.mxu0 0.0
      %2424 = vmatprep.subr.mxu0 0.0
      %2425 = vmatpush1.xpose.msra.mxu0 0.0
      %2426 = vmatprep.subr.mxu0 0.0
      %2427 = vmatpush1.xpose.msra.mxu0 0.0
      %2428 = vmatprep.subr.mxu0 0.0
      %2429 = vmatpush1.xpose.msra.mxu0 0.0
      %2430 = vmatprep.subr.mxu0 0.0
      %2431 = vmatpush1.xpose.msra.mxu0 0.0
      %2432 = vmatprep.subr.mxu0 0.0
      %2433 = vmatpush1.xpose.msra.mxu0 0.0
      %2434 = vmatprep.subr.mxu0 0.0
      %2435 = vmatpush1.xpose.msra.mxu0 0.0
      %2436 = vmatprep.subr.mxu0 0.0
      %2437 = vmatpush1.xpose.msra.mxu0 0.0
      %2438 = vmatprep.subr.mxu0 0.0
      %2439 = vmatpush1.xpose.msra.mxu0 0.0
      %2440 = vmatprep.subr.mxu0 0.0
      %2441 = vmatpush1.xpose.msra.mxu0 0.0
      %2442 = vmatprep.subr.mxu0 0.0
      %2443 = vmatpush1.xpose.msra.mxu0 0.0
      %2444 = vmatprep.subr.mxu0 0.0
      %2445 = vmatpush1.xpose.msra.mxu0 0.0
      %2446 = vmatprep.subr.mxu0 0.0
      %2447 = vmatpush1.xpose.msra.mxu0 0.0
      %2448 = vmatprep.subr.mxu0 0.0
      %2449 = vmatpush1.xpose.msra.mxu0 0.0
      %2450 = vmatprep.subr.mxu0 0.0
      %2451 = vmatpush1.xpose.msra.mxu0 0.0
      %2452 = vmatprep.subr.mxu0 0.0
      %2453 = vmatpush1.xpose.msra.mxu0 0.0
      %2454 = vmatprep.subr.mxu0 0.0
      %2455 = vmatpush1.xpose.msra.mxu0 0.0
      %2456 = vmatprep.subr.mxu0 0.0
      %2457 = vmatpush1.xpose.msra.mxu0 0.0
      %2458 = vmatprep.subr.mxu0 0.0
      %2459 = vmatpush1.xpose.msra.mxu0 0.0
      %2460 = vmatprep.subr.mxu0 0.0
      %2461 = vmatpush1.xpose.msra.mxu0 0.0
      %2462 = vmatprep.subr.mxu0 0.0
      %2463 = vmatpush1.xpose.msra.mxu0 0.0
      %2464 = vmatprep.subr.mxu0 0.0
      %2465 = vmatpush1.xpose.msra.mxu0 0.0
      %2466 = vmatprep.subr.mxu0 0.0
      %2467 = vmatpush1.xpose.msra.mxu0 0.0
      %2468 = vmatprep.subr.mxu0 0.0
      %2469 = vmatpush1.xpose.msra.mxu0 0.0
      %2470 = vmatprep.subr.mxu0 0.0
      %2471 = vmatpush1.xpose.msra.mxu0 0.0
      %2472 = vmatprep.subr.mxu0 0.0
      %2473 = vmatpush1.xpose.msra.mxu0 0.0
      %2474 = vmatprep.subr.mxu0 0.0
      %2475 = vmatpush1.xpose.msra.mxu0 0.0
      %2476 = vmatprep.subr.mxu0 0.0
      %2477 = vmatpush1.xpose.msra.mxu0 0.0
      %2478 = vmatprep.mubr.f32.mxu0 0.0
      %2479 = vmatmul.mubr.f32.gmra.mrb[0].mxu0 %v2406
      %v2480 = vpop.f32.mrb[0].mxu0
      %v2481 = vadd.f32 0.0, %v2480
      %v2482 = vpop.f32.mrb[0].mxu0
      %2483 = vmatprep.mubr.f32.mxu0 0.0
      %2484 = vmatmul.mubr.f32.gmra.mrb[0].mxu0 %v2409
      %v2485 = vpop.f32.mrb[0].mxu0
      %v2486 = vadd.f32 0.0, %v2485
      %v2487 = vpop.f32.mrb[0].mxu0
      %2488 = vmatprep.mubr.f32.mxu0 0.0
      %2489 = vmatmul.mubr.f32.gmra.mrb[0].mxu0 %v2412
      %v2490 = vpop.f32.mrb[0].mxu0
      %v2491 = vadd.f32 0.0, %v2490
      %v2492 = vpop.f32.mrb[0].mxu0
      %2493 = vdwg.mxu0
      %v2494 = vmul.f32 %v2481, 0.35355338
      %v2495 = vmul.f32 %v2486, 0.35355338
      %v2496 = vmul.f32 %v2491, 0.35355338
      %v2497 = vadd.f32 %v2494, %v1537
      %v2498 = vadd.f32 %v2495, %v1538
      %v2499 = vadd.f32 %v2496, %v1539
      %v2500 = vsel %vm1759, %v2497, -inf
      %2501 = vmax.xlane.f32.xlu0 %v2500
      %v2502 = vpop.xlane.xlu0 %2501
      %v2503 = vsel %vm1759, %v2498, -inf
      %2504 = vmax.xlane.f32.xlu0 %v2503
      %v2505 = vpop.xlane.xlu0 %2504
      %v2506 = vsel %vm1766, %v2499, -inf
      %2507 = vmax.xlane.f32.xlu0 %v2506
      %v2508 = vpop.xlane.xlu0 %2507
      %v2509 = vsub.f32 %v2497, %v2502
      %v2510 = vsub.f32 %v2498, %v2505
      %v2511 = vsub.f32 %v2499, %v2508
      %v2512 = vmul.f32 %v2509, 1.442695
      %v2513 = vpow.pop %v2512
      %v2514 = vmul.f32 %v2510, 1.442695
      %v2515 = vpow.pop %v2514
      %v2516 = vmul.f32 %v2511, 1.442695
      %v2517 = vpow.pop %v2516
      %2519 = vrot.lane.b32.xlu0 %v2401, 64
      %v2520 = vpop.permute.xlu0 %2519
      %v2522 = vmul.f32 %v1628, %v2520
      %v2523 = vmul.f32 %v1633, %v2520
      %v2524 = vmul.f32 %v1638, %v2520
      %2528 = vrot.lane.b32.xlu0 %v2522, 64
      %v2529 = vpop.permute.xlu0 %2528
      %2530 = vrot.lane.b32.xlu0 %v2523, 64
      %v2531 = vpop.permute.xlu0 %2530
      %2532 = vrot.lane.b32.xlu0 %v2524, 64
      %v2533 = vpop.permute.xlu0 %2532
      %v2537 = vsel %vm1759, %v2513, 0
      %v2540 = vsel %vm1759, %v2515, 0
      %v2543 = vsel %vm1759, %v2517, 0
      %v2545 = vsel %vm1949, %v2533, 0
      %2547 = vmatprep.subr.mxu0 0.0
      %2548 = vmatpush1.msra.mxu0 %v2529
      %2549 = vmatprep.subr.mxu0 0.0
      %2550 = vmatpush1.msra.mxu0 %v2531
      %2551 = vmatprep.subr.mxu0 0.0
      %2552 = vmatpush1.msra.mxu0 %v2545
      %2553 = vmatprep.subr.mxu0 0.0
      %2554 = vmatpush1.msra.mxu0 0.0
      %2555 = vmatprep.subr.mxu0 0.0
      %2556 = vmatpush1.msra.mxu0 0.0
      %2557 = vmatprep.subr.mxu0 0.0
      %2558 = vmatpush1.msra.mxu0 0.0
      %2559 = vmatprep.subr.mxu0 0.0
      %2560 = vmatpush1.msra.mxu0 0.0
      %2561 = vmatprep.subr.mxu0 0.0
      %2562 = vmatpush1.msra.mxu0 0.0
      %2563 = vmatprep.subr.mxu0 0.0
      %2564 = vmatpush1.msra.mxu0 0.0
      %2565 = vmatprep.subr.mxu0 0.0
      %2566 = vmatpush1.msra.mxu0 0.0
      %2567 = vmatprep.subr.mxu0 0.0
      %2568 = vmatpush1.msra.mxu0 0.0
      %2569 = vmatprep.subr.mxu0 0.0
      %2570 = vmatpush1.msra.mxu0 0.0
      %2571 = vmatprep.subr.mxu0 0.0
      %2572 = vmatpush1.msra.mxu0 0.0
      %2573 = vmatprep.subr.mxu0 0.0
      %2574 = vmatpush1.msra.mxu0 0.0
      %2575 = vmatprep.subr.mxu0 0.0
      %2576 = vmatpush1.msra.mxu0 0.0
      %2577 = vmatprep.subr.mxu0 0.0
      %2578 = vmatpush1.msra.mxu0 0.0
      %2579 = vmatprep.subr.mxu0 0.0
      %2580 = vmatpush1.msra.mxu0 0.0
      %2581 = vmatprep.subr.mxu0 0.0
      %2582 = vmatpush1.msra.mxu0 0.0
      %2583 = vmatprep.subr.mxu0 0.0
      %2584 = vmatpush1.msra.mxu0 0.0
      %2585 = vmatprep.subr.mxu0 0.0
      %2586 = vmatpush1.msra.mxu0 0.0
      %2587 = vmatprep.subr.mxu0 0.0
      %2588 = vmatpush1.msra.mxu0 0.0
      %2589 = vmatprep.subr.mxu0 0.0
      %2590 = vmatpush1.msra.mxu0 0.0
      %2591 = vmatprep.subr.mxu0 0.0
      %2592 = vmatpush1.msra.mxu0 0.0
      %2593 = vmatprep.subr.mxu0 0.0
      %2594 = vmatpush1.msra.mxu0 0.0
      %2595 = vmatprep.subr.mxu0 0.0
      %2596 = vmatpush1.msra.mxu0 0.0
      %2597 = vmatprep.subr.mxu0 0.0
      %2598 = vmatpush1.msra.mxu0 0.0
      %2599 = vmatprep.subr.mxu0 0.0
      %2600 = vmatpush1.msra.mxu0 0.0
      %2601 = vmatprep.subr.mxu0 0.0
      %2602 = vmatpush1.msra.mxu0 0.0
      %2603 = vmatprep.subr.mxu0 0.0
      %2604 = vmatpush1.msra.mxu0 0.0
      %2605 = vmatprep.subr.mxu0 0.0
      %2606 = vmatpush1.msra.mxu0 0.0
      %2607 = vmatprep.subr.mxu0 0.0
      %2608 = vmatpush1.msra.mxu0 0.0
      %2609 = vmatprep.subr.mxu0 0.0
      %2610 = vmatpush1.msra.mxu0 0.0
      %2611 = vmatprep.mubr.f32.mxu0 0.0
      %2612 = vmatmul.mubr.f32.gmra.mrb[0].mxu0 %v2537
      %v2613 = vpop.f32.mrb[0].mxu0
      %v2614 = vadd.f32 0.0, %v2613
      %v2615 = vpop.f32.mrb[0].mxu0
      %2616 = vmatprep.mubr.f32.mxu0 0.0
      %2617 = vmatmul.mubr.f32.gmra.mrb[0].mxu0 %v2540
      %v2618 = vpop.f32.mrb[0].mxu0
      %v2619 = vadd.f32 0.0, %v2618
      %v2620 = vpop.f32.mrb[0].mxu0
      %2621 = vmatprep.mubr.f32.mxu0 0.0
      %2622 = vmatmul.mubr.f32.gmra.mrb[0].mxu0 %v2543
      %v2623 = vpop.f32.mrb[0].mxu0
      %v2624 = vadd.f32 0.0, %v2623
      %v2625 = vpop.f32.mrb[0].mxu0
      %2626 = vdwg.mxu0
      %v2627 = vadd.f32 %v2379, %v2614
      %v2628 = vadd.f32 %v2380, %v2619
      %v2629 = vadd.f32 %v2381, %v2624
      %v2630 = vsel %vm1759, %v2513, 0.0
      %2631 = vadd.xlane.f32.xlu0 %v2630
      %v2632 = vpop.xlane.xlu0 %2631
      %v2633 = vsel %vm1759, %v2515, 0.0
      %2634 = vadd.xlane.f32.xlu0 %v2633
      %v2635 = vpop.xlane.xlu0 %2634
      %v2636 = vsel %vm1766, %v2517, 0.0
      %2637 = vadd.xlane.f32.xlu0 %v2636
      %v2638 = vpop.xlane.xlu0 %2637
      %v2639 = vmul.f32 %v2632, %v2401
      %v2640 = vmul.f32 %v2635, %v2401
      %v2641 = vmul.f32 %v2638, %v2401
      %v2642 = vadd.f32 %v2394, %v2639
      %v2643 = vadd.f32 %v2395, %v2640
      %v2644 = vadd.f32 %v2396, %v2641
      %v2645 = vrcp.pop %v2642
      %v2646 = vrcp.pop %v2643
      %v2647 = vrcp.pop %v2644
      %v2648 = vmul.f32 %v2627, %v2645
      %v2649 = vmul.f32 %v2628, %v2646
      %v2650 = vmul.f32 %v2629, %v2647
      %v2651 = vld [vmem:[%s676] sm:$0xff]
      %v2652 = vld [vmem:[%s676 + $0x8] sm:$0xff]
      %v2653 = vld [vmem:[%s676 + $0x10] sm:$0xff]
      %v2654 = vld [vmem:[%s676 + $0x18] sm:$0xff]
      %v2655 = vld [vmem:[%s679] sm:$0x1]
      %v2657 = vlaneseq
      %v2658 = vshrl.u32 %v2657, 7
      %v2659 = vsub.s32 0, %v2658
      %v2660 = vrot.slane %v2655, %v2659
      %v2663 = vsel %vm1551, %v2648, 0
      %v2666 = vsel %vm1551, %v2649, 0
      %v2669 = vsel %vm1551, %v2650, 0
      %2671 = vmatprep.subr.mxu0 0.0
      %2672 = vmatpush1.msra.mxu0 %v2651
      %2673 = vmatprep.subr.mxu0 0.0
      %2674 = vmatpush1.msra.mxu0 %v2652
      %2675 = vmatprep.subr.mxu0 0.0
      %2676 = vmatpush1.msra.mxu0 %v2653
      %2677 = vmatprep.subr.mxu0 0.0
      %2678 = vmatpush1.msra.mxu0 %v2654
      %2679 = vmatprep.subr.mxu0 0.0
      %2680 = vmatpush1.msra.mxu0 0.0
      %2681 = vmatprep.subr.mxu0 0.0
      %2682 = vmatpush1.msra.mxu0 0.0
      %2683 = vmatprep.subr.mxu0 0.0
      %2684 = vmatpush1.msra.mxu0 0.0
      %2685 = vmatprep.subr.mxu0 0.0
      %2686 = vmatpush1.msra.mxu0 0.0
      %2687 = vmatprep.subr.mxu0 0.0
      %2688 = vmatpush1.msra.mxu0 0.0
      %2689 = vmatprep.subr.mxu0 0.0
      %2690 = vmatpush1.msra.mxu0 0.0
      %2691 = vmatprep.subr.mxu0 0.0
      %2692 = vmatpush1.msra.mxu0 0.0
      %2693 = vmatprep.subr.mxu0 0.0
      %2694 = vmatpush1.msra.mxu0 0.0
      %2695 = vmatprep.subr.mxu0 0.0
      %2696 = vmatpush1.msra.mxu0 0.0
      %2697 = vmatprep.subr.mxu0 0.0
      %2698 = vmatpush1.msra.mxu0 0.0
      %2699 = vmatprep.subr.mxu0 0.0
      %2700 = vmatpush1.msra.mxu0 0.0
      %2701 = vmatprep.subr.mxu0 0.0
      %2702 = vmatpush1.msra.mxu0 0.0
      %2703 = vmatprep.subr.mxu0 0.0
      %2704 = vmatpush1.msra.mxu0 0.0
      %2705 = vmatprep.subr.mxu0 0.0
      %2706 = vmatpush1.msra.mxu0 0.0
      %2707 = vmatprep.subr.mxu0 0.0
      %2708 = vmatpush1.msra.mxu0 0.0
      %2709 = vmatprep.subr.mxu0 0.0
      %2710 = vmatpush1.msra.mxu0 0.0
      %2711 = vmatprep.subr.mxu0 0.0
      %2712 = vmatpush1.msra.mxu0 0.0
      %2713 = vmatprep.subr.mxu0 0.0
      %2714 = vmatpush1.msra.mxu0 0.0
      %2715 = vmatprep.subr.mxu0 0.0
      %2716 = vmatpush1.msra.mxu0 0.0
      %2717 = vmatprep.subr.mxu0 0.0
      %2718 = vmatpush1.msra.mxu0 0.0
      %2719 = vmatprep.subr.mxu0 0.0
      %2720 = vmatpush1.msra.mxu0 0.0
      %2721 = vmatprep.subr.mxu0 0.0
      %2722 = vmatpush1.msra.mxu0 0.0
      %2723 = vmatprep.subr.mxu0 0.0
      %2724 = vmatpush1.msra.mxu0 0.0
      %2725 = vmatprep.subr.mxu0 0.0
      %2726 = vmatpush1.msra.mxu0 0.0
      %2727 = vmatprep.subr.mxu0 0.0
      %2728 = vmatpush1.msra.mxu0 0.0
      %2729 = vmatprep.subr.mxu0 0.0
      %2730 = vmatpush1.msra.mxu0 0.0
      %2731 = vmatprep.subr.mxu0 0.0
      %2732 = vmatpush1.msra.mxu0 0.0
      %2733 = vmatprep.subr.mxu0 0.0
      %2734 = vmatpush1.msra.mxu0 0.0
      %2735 = vmatprep.mubr.f32.mxu0 0.0
      %2736 = vmatmul.mubr.f32.gmra.mrb[0].mxu0 %v2663
      %v2737 = vpop.f32.mrb[0].mxu0
      %v2738 = vadd.f32 %v2660, %v2737
      %v2739 = vpop.f32.mrb[0].mxu0
      %2740 = vmatprep.mubr.f32.mxu0 0.0
      %2741 = vmatmul.mubr.f32.gmra.mrb[0].mxu0 %v2666
      %v2742 = vpop.f32.mrb[0].mxu0
      %v2743 = vadd.f32 %v2660, %v2742
      %v2744 = vpop.f32.mrb[0].mxu0
      %2745 = vmatprep.mubr.f32.mxu0 0.0
      %2746 = vmatmul.mubr.f32.gmra.mrb[0].mxu0 %v2669
      %v2747 = vpop.f32.mrb[0].mxu0
      %v2748 = vadd.f32 %v2660, %v2747
      %v2749 = vpop.f32.mrb[0].mxu0
      %2750 = vdwg.mxu0
      %v2751 = vadd.f32 %v1534, %v2738
      %v2752 = vadd.f32 %v1535, %v2743
      %v2753 = vadd.f32 %v1536, %v2748
      %v2754 = vld [vmem:[%s682] sm:$0x1]
      %v2755 = vld [vmem:[%s685] sm:$0x1]
      %v2756 = vsel %vm1551, %v2751, 0.0
      %2757 = vadd.xlane.f32.xlu0 %v2756
      %v2758 = vpop.xlane.xlu0 %2757
      %v2759 = vsel %vm1551, %v2752, 0.0
      %2760 = vadd.xlane.f32.xlu0 %v2759
      %v2761 = vpop.xlane.xlu0 %2760
      %vm2762 = vcmask 257024
      %v2763 = vsel %vm2762, %v2753, 0.0
      %2764 = vadd.xlane.f32.xlu0 %v2763
      %v2765 = vpop.xlane.xlu0 %2764
      %v2766 = vrcp.pop 32.0
      %v2767 = vmul.f32 %v2758, %v2766
      %v2768 = vmul.f32 %v2761, %v2766
      %v2769 = vmul.f32 %v2765, %v2766
      %v2770 = vsub.f32 %v2751, %v2767
      %v2771 = vsub.f32 %v2752, %v2768
      %v2772 = vsub.f32 %v2753, %v2769
      %v2773 = vmul.f32 %v2770, %v2770
      %v2774 = vmul.f32 %v2771, %v2771
      %v2775 = vmul.f32 %v2772, %v2772
      %v2776 = vsel %vm1551, %v2773, 0.0
      %2777 = vadd.xlane.f32.xlu0 %v2776
      %v2778 = vpop.xlane.xlu0 %2777
      %v2779 = vsel %vm1551, %v2774, 0.0
      %2780 = vadd.xlane.f32.xlu0 %v2779
      %v2781 = vpop.xlane.xlu0 %2780
      %v2782 = vsel %vm2762, %v2775, 0.0
      %2783 = vadd.xlane.f32.xlu0 %v2782
      %v2784 = vpop.xlane.xlu0 %2783
      %v2785 = vmul.f32 %v2778, %v2766
      %v2786 = vmul.f32 %v2781, %v2766
      %v2787 = vmul.f32 %v2784, %v2766
      %v2788 = vadd.f32 %v2785, 1e-05
      %v2789 = vadd.f32 %v2786, 1e-05
      %v2790 = vadd.f32 %v2787, 1e-05
      %v2791 = vrsqrt.pop %v2788
      %v2792 = vrsqrt.pop %v2789
      %v2793 = vrsqrt.pop %v2790
      %v2794 = vmul.f32 %v2770, %v2791
      %v2795 = vmul.f32 %v2771, %v2792
      %v2796 = vmul.f32 %v2772, %v2793
      %v2798 = vlaneseq
      %v2799 = vshrl.u32 %v2798, 7
      %v2800 = vsub.s32 0, %v2799
      %v2801 = vrot.slane %v2754, %v2800
      %v2803 = vmul.f32 %v2794, %v2801
      %v2804 = vmul.f32 %v2795, %v2801
      %v2805 = vmul.f32 %v2796, %v2801
      %v2807 = vlaneseq
      %v2808 = vshrl.u32 %v2807, 7
      %v2809 = vsub.s32 0, %v2808
      %v2810 = vrot.slane %v2755, %v2809
      %v2812 = vadd.f32 %v2803, %v2810
      %v2813 = vadd.f32 %v2804, %v2810
      %v2814 = vadd.f32 %v2805, %v2810
      %v2815 = vpack.c.bf16 %v2813, %v2812
      %v2816 = vpack.c.bf16 %v2814, %v2814
      %v2817 = vld [vmem:[%s690] sm:$0xff]
      %v2818 = vld [vmem:[%s690 + $0x8] sm:$0xff]
      %v2819 = vld [vmem:[%s690 + $0x10] sm:$0xff]
      %v2820 = vld [vmem:[%s690 + $0x18] sm:$0xff]
      %v2821 = vld [vmem:[%s690 + $0x20] sm:$0xff]
      %v2822 = vld [vmem:[%s690 + $0x28] sm:$0xff]
      %v2823 = vld [vmem:[%s690 + $0x30] sm:$0xff]
      %v2824 = vld [vmem:[%s690 + $0x38] sm:$0xff]
      %v2825 = vld [vmem:[%s690 + $0x40] sm:$0xff]
      %v2826 = vld [vmem:[%s690 + $0x48] sm:$0xff]
      %v2827 = vld [vmem:[%s690 + $0x50] sm:$0xff]
      %v2828 = vld [vmem:[%s690 + $0x58] sm:$0xff]
      %v2829 = vld [vmem:[%s690 + $0x60] sm:$0xff]
      %v2830 = vld [vmem:[%s690 + $0x68] sm:$0xff]
      %v2831 = vld [vmem:[%s690 + $0x70] sm:$0xff]
      %v2832 = vld [vmem:[%s690 + $0x78] sm:$0xff]
      %v2833 = vld [vmem:[%s690 + $0x80] sm:$0xff]
      %v2834 = vld [vmem:[%s690 + $0x88] sm:$0xff]
      %v2835 = vld [vmem:[%s690 + $0x90] sm:$0xff]
      %v2836 = vld [vmem:[%s690 + $0x98] sm:$0xff]
      %v2837 = vld [vmem:[%s690 + $0xa0] sm:$0xff]
      %v2838 = vld [vmem:[%s690 + $0xa8] sm:$0xff]
      %v2839 = vld [vmem:[%s690 + $0xb0] sm:$0xff]
      %v2840 = vld [vmem:[%s690 + $0xb8] sm:$0xff]
      %v2841 = vld [vmem:[%s690 + $0xc0] sm:$0xff]
      %v2842 = vld [vmem:[%s690 + $0xc8] sm:$0xff]
      %v2843 = vld [vmem:[%s690 + $0xd0] sm:$0xff]
      %v2844 = vld [vmem:[%s690 + $0xd8] sm:$0xff]
      %v2845 = vld [vmem:[%s690 + $0xe0] sm:$0xff]
      %v2846 = vld [vmem:[%s690 + $0xe8] sm:$0xff]
      %v2847 = vld [vmem:[%s690 + $0xf0] sm:$0xff]
      %v2848 = vld [vmem:[%s690 + $0xf8] sm:$0xff]
      %v2849 = vld [vmem:[%s694] sm:$0xff]
      %v2850 = vld [vmem:[%s694 + $0x8] sm:$0xff]
      %v2853 = vlaneseq
      %v2854 = vshrl.u32 %v2853, 7
      %v2855 = vsub.s32 0, %v2854
      %v2856 = vrot.slane %v2849, %v2855
      %v2857 = vlaneseq
      %v2858 = vshrl.u32 %v2857, 7
      %v2859 = vsub.s32 1, %v2858
      %v2860 = vrot.slane %v2849, %v2859
      %v2861 = vlaneseq
      %v2862 = vshrl.u32 %v2861, 7
      %v2863 = vsub.s32 2, %v2862
      %v2864 = vrot.slane %v2849, %v2863
      %v2865 = vlaneseq
      %v2866 = vshrl.u32 %v2865, 7
      %v2867 = vsub.s32 3, %v2866
      %v2868 = vrot.slane %v2849, %v2867
      %v2869 = vlaneseq
      %v2870 = vshrl.u32 %v2869, 7
      %v2871 = vsub.s32 4, %v2870
      %v2872 = vrot.slane %v2849, %v2871
      %v2873 = vlaneseq
      %v2874 = vshrl.u32 %v2873, 7
      %v2875 = vsub.s32 5, %v2874
      %v2876 = vrot.slane %v2849, %v2875
      %v2877 = vlaneseq
      %v2878 = vshrl.u32 %v2877, 7
      %v2879 = vsub.s32 6, %v2878
      %v2880 = vrot.slane %v2849, %v2879
      %v2881 = vlaneseq
      %v2882 = vshrl.u32 %v2881, 7
      %v2883 = vsub.s32 7, %v2882
      %v2884 = vrot.slane %v2849, %v2883
      %v2885 = vlaneseq
      %v2886 = vshrl.u32 %v2885, 7
      %v2887 = vsub.s32 0, %v2886
      %v2888 = vrot.slane %v2850, %v2887
      %v2889 = vlaneseq
      %v2890 = vshrl.u32 %v2889, 7
      %v2891 = vsub.s32 1, %v2890
      %v2892 = vrot.slane %v2850, %v2891
      %v2893 = vlaneseq
      %v2894 = vshrl.u32 %v2893, 7
      %v2895 = vsub.s32 2, %v2894
      %v2896 = vrot.slane %v2850, %v2895
      %v2897 = vlaneseq
      %v2898 = vshrl.u32 %v2897, 7
      %v2899 = vsub.s32 3, %v2898
      %v2900 = vrot.slane %v2850, %v2899
      %v2901 = vlaneseq
      %v2902 = vshrl.u32 %v2901, 7
      %v2903 = vsub.s32 4, %v2902
      %v2904 = vrot.slane %v2850, %v2903
      %v2905 = vlaneseq
      %v2906 = vshrl.u32 %v2905, 7
      %v2907 = vsub.s32 5, %v2906
      %v2908 = vrot.slane %v2850, %v2907
      %v2909 = vlaneseq
      %v2910 = vshrl.u32 %v2909, 7
      %v2911 = vsub.s32 6, %v2910
      %v2912 = vrot.slane %v2850, %v2911
      %v2913 = vlaneseq
      %v2914 = vshrl.u32 %v2913, 7
      %v2915 = vsub.s32 7, %v2914
      %v2916 = vrot.slane %v2850, %v2915
      %v2965 = vunpack.c.l.b16 %v2817
      %v2966 = vunpack.c.h.b16 %v2817
      %v2967 = vunpack.c.l.b16 %v2818
      %v2968 = vunpack.c.h.b16 %v2818
      %v2969 = vunpack.c.l.b16 %v2819
      %v2970 = vunpack.c.h.b16 %v2819
      %v2971 = vunpack.c.l.b16 %v2820
      %v2972 = vunpack.c.h.b16 %v2820
      %v2973 = vunpack.c.l.b16 %v2821
      %v2974 = vunpack.c.h.b16 %v2821
      %v2975 = vunpack.c.l.b16 %v2822
      %v2976 = vunpack.c.h.b16 %v2822
      %v2977 = vunpack.c.l.b16 %v2823
      %v2978 = vunpack.c.h.b16 %v2823
      %v2979 = vunpack.c.l.b16 %v2824
      %v2980 = vunpack.c.h.b16 %v2824
      %v2981 = vunpack.c.l.b16 %v2825
      %v2982 = vunpack.c.h.b16 %v2825
      %v2983 = vunpack.c.l.b16 %v2826
      %v2984 = vunpack.c.h.b16 %v2826
      %v2985 = vunpack.c.l.b16 %v2827
      %v2986 = vunpack.c.h.b16 %v2827
      %v2987 = vunpack.c.l.b16 %v2828
      %v2988 = vunpack.c.h.b16 %v2828
      %v2989 = vunpack.c.l.b16 %v2829
      %v2990 = vunpack.c.h.b16 %v2829
      %v2991 = vunpack.c.l.b16 %v2830
      %v2992 = vunpack.c.h.b16 %v2830
      %v2993 = vunpack.c.l.b16 %v2831
      %v2994 = vunpack.c.h.b16 %v2831
      %v2995 = vunpack.c.l.b16 %v2832
      %v2996 = vunpack.c.h.b16 %v2832
      %v2997 = vunpack.c.l.b16 %v2833
      %v2998 = vunpack.c.h.b16 %v2833
      %v2999 = vunpack.c.l.b16 %v2834
      %v3000 = vunpack.c.h.b16 %v2834
      %v3001 = vunpack.c.l.b16 %v2835
      %v3002 = vunpack.c.h.b16 %v2835
      %v3003 = vunpack.c.l.b16 %v2836
      %v3004 = vunpack.c.h.b16 %v2836
      %v3005 = vunpack.c.l.b16 %v2837
      %v3006 = vunpack.c.h.b16 %v2837
      %v3007 = vunpack.c.l.b16 %v2838
      %v3008 = vunpack.c.h.b16 %v2838
      %v3009 = vunpack.c.l.b16 %v2839
      %v3010 = vunpack.c.h.b16 %v2839
      %v3011 = vunpack.c.l.b16 %v2840
      %v3012 = vunpack.c.h.b16 %v2840
      %v3013 = vunpack.c.l.b16 %v2841
      %v3014 = vunpack.c.h.b16 %v2841
      %v3015 = vunpack.c.l.b16 %v2842
      %v3016 = vunpack.c.h.b16 %v2842
      %v3017 = vunpack.c.l.b16 %v2843
      %v3018 = vunpack.c.h.b16 %v2843
      %v3019 = vunpack.c.l.b16 %v2844
      %v3020 = vunpack.c.h.b16 %v2844
      %v3021 = vunpack.c.l.b16 %v2845
      %v3022 = vunpack.c.h.b16 %v2845
      %v3023 = vunpack.c.l.b16 %v2846
      %v3024 = vunpack.c.h.b16 %v2846
      %v3025 = vunpack.c.l.b16 %v2847
      %v3026 = vunpack.c.h.b16 %v2847
      %v3027 = vunpack.c.l.b16 %v2848
      %v3028 = vunpack.c.h.b16 %v2848
      %v3029 = vpack.c.b16 %v2981, %v2965
      %v3030 = vpack.c.b16 %v2982, %v2966
      %v3031 = vpack.c.b16 %v2983, %v2967
      %v3032 = vpack.c.b16 %v2984, %v2968
      %v3033 = vpack.c.b16 %v2985, %v2969
      %v3034 = vpack.c.b16 %v2986, %v2970
      %v3035 = vpack.c.b16 %v2987, %v2971
      %v3036 = vpack.c.b16 %v2988, %v2972
      %v3037 = vpack.c.b16 %v2989, %v2973
      %v3038 = vpack.c.b16 %v2990, %v2974
      %v3039 = vpack.c.b16 %v2991, %v2975
      %v3040 = vpack.c.b16 %v2992, %v2976
      %v3041 = vpack.c.b16 %v2993, %v2977
      %v3042 = vpack.c.b16 %v2994, %v2978
      %v3043 = vpack.c.b16 %v2995, %v2979
      %v3044 = vpack.c.b16 %v2996, %v2980
      %v3045 = vpack.c.b16 %v3013, %v2997
      %v3046 = vpack.c.b16 %v3014, %v2998
      %v3047 = vpack.c.b16 %v3015, %v2999
      %v3048 = vpack.c.b16 %v3016, %v3000
      %v3049 = vpack.c.b16 %v3017, %v3001
      %v3050 = vpack.c.b16 %v3018, %v3002
      %v3051 = vpack.c.b16 %v3019, %v3003
      %v3052 = vpack.c.b16 %v3020, %v3004
      %v3053 = vpack.c.b16 %v3021, %v3005
      %v3054 = vpack.c.b16 %v3022, %v3006
      %v3055 = vpack.c.b16 %v3023, %v3007
      %v3056 = vpack.c.b16 %v3024, %v3008
      %v3057 = vpack.c.b16 %v3025, %v3009
      %v3058 = vpack.c.b16 %v3026, %v3010
      %v3059 = vpack.c.b16 %v3027, %v3011
      %v3060 = vpack.c.b16 %v3028, %v3012
      %v3094 = vsel %vm1551, %v2815, 0
      %v3097 = vsel %vm1551, %v2816, 0
      %3099 = vmatprep.subr.bf16.mxu0 %v3030
      %3100 = vmatpush1.bf16.msra.mxu0 %v3029
      %3101 = vmatprep.subr.bf16.mxu0 %v3046
      %3102 = vmatpush1.bf16.msra.mxu0 %v3045
      %3103 = vmatprep.subr.bf16.mxu0 0
      %3104 = vmatpush1.bf16.msra.mxu0 0
      %3105 = vmatprep.subr.bf16.mxu0 0
      %3106 = vmatpush1.bf16.msra.mxu0 0
      %3107 = vmatprep.subr.bf16.mxu0 0
      %3108 = vmatpush1.bf16.msra.mxu0 0
      %3109 = vmatprep.subr.bf16.mxu0 0
      %3110 = vmatpush1.bf16.msra.mxu0 0
      %3111 = vmatprep.subr.bf16.mxu0 0
      %3112 = vmatpush1.bf16.msra.mxu0 0
      %3113 = vmatprep.subr.bf16.mxu0 0
      %3114 = vmatpush1.bf16.msra.mxu0 0
      %3115 = vmatprep.subr.bf16.mxu0 0
      %3116 = vmatpush1.bf16.msra.mxu0 0
      %3117 = vmatprep.subr.bf16.mxu0 0
      %3118 = vmatpush1.bf16.msra.mxu0 0
      %3119 = vmatprep.subr.bf16.mxu0 0
      %3120 = vmatpush1.bf16.msra.mxu0 0
      %3121 = vmatprep.subr.bf16.mxu0 0
      %3122 = vmatpush1.bf16.msra.mxu0 0
      %3123 = vmatprep.subr.bf16.mxu0 0
      %3124 = vmatpush1.bf16.msra.mxu0 0
      %3125 = vmatprep.subr.bf16.mxu0 0
      %3126 = vmatpush1.bf16.msra.mxu0 0
      %3127 = vmatprep.subr.bf16.mxu0 0
      %3128 = vmatpush1.bf16.msra.mxu0 0
      %3129 = vmatprep.subr.bf16.mxu0 0
      %3130 = vmatpush1.bf16.msra.mxu0 0
      %3131 = vmatprep.mubr.bf16.mxu0 0
      %3132 = vmatmul.mubr.bf16.gmra.mrb[0].mxu0 %v3094
      %v3133 = vpop.f32.mrb[0].mxu0
      %v3134 = vadd.f32 %v2856, %v3133
      %v3135 = vpop.f32.mrb[0].mxu0
      %v3136 = vadd.f32 %v2860, %v3135
      %v3137 = vpop.f32.mrb[0].mxu0
      %v3138 = vadd.f32 %v2856, %v3137
      %v3139 = vpop.f32.mrb[0].mxu0
      %v3140 = vadd.f32 %v2860, %v3139
      %3141 = vmatprep.mubr.bf16.mxu0 0
      %3142 = vmatmul.mubr.bf16.gmra.mrb[0].mxu0 %v3097
      %v3143 = vpop.f32.mrb[0].mxu0
      %v3144 = vadd.f32 %v2856, %v3143
      %v3145 = vpop.f32.mrb[0].mxu0
      %v3146 = vadd.f32 %v2860, %v3145
      %v3147 = vpop.f32.mrb[0].mxu0
      %v3148 = vpop.f32.mrb[0].mxu0
      %3149 = vdwg.mxu0
      %3150 = vmatprep.subr.bf16.mxu0 %v3032
      %3151 = vmatpush1.bf16.msra.mxu0 %v3031
      %3152 = vmatprep.subr.bf16.mxu0 %v3048
      %3153 = vmatpush1.bf16.msra.mxu0 %v3047
      %3154 = vmatprep.subr.bf16.mxu0 0
      %3155 = vmatpush1.bf16.msra.mxu0 0
      %3156 = vmatprep.subr.bf16.mxu0 0
      %3157 = vmatpush1.bf16.msra.mxu0 0
      %3158 = vmatprep.subr.bf16.mxu0 0
      %3159 = vmatpush1.bf16.msra.mxu0 0
      %3160 = vmatprep.subr.bf16.mxu0 0
      %3161 = vmatpush1.bf16.msra.mxu0 0
      %3162 = vmatprep.subr.bf16.mxu0 0
      %3163 = vmatpush1.bf16.msra.mxu0 0
      %3164 = vmatprep.subr.bf16.mxu0 0
      %3165 = vmatpush1.bf16.msra.mxu0 0
      %3166 = vmatprep.subr.bf16.mxu0 0
      %3167 = vmatpush1.bf16.msra.mxu0 0
      %3168 = vmatprep.subr.bf16.mxu0 0
      %3169 = vmatpush1.bf16.msra.mxu0 0
      %3170 = vmatprep.subr.bf16.mxu0 0
      %3171 = vmatpush1.bf16.msra.mxu0 0
      %3172 = vmatprep.subr.bf16.mxu0 0
      %3173 = vmatpush1.bf16.msra.mxu0 0
      %3174 = vmatprep.subr.bf16.mxu0 0
      %3175 = vmatpush1.bf16.msra.mxu0 0
      %3176 = vmatprep.subr.bf16.mxu0 0
      %3177 = vmatpush1.bf16.msra.mxu0 0
      %3178 = vmatprep.subr.bf16.mxu0 0
      %3179 = vmatpush1.bf16.msra.mxu0 0
      %3180 = vmatprep.subr.bf16.mxu0 0
      %3181 = vmatpush1.bf16.msra.mxu0 0
      %3182 = vmatprep.mubr.bf16.mxu0 0
      %3183 = vmatmul.mubr.bf16.gmra.mrb[0].mxu0 %v3094
      %v3184 = vpop.f32.mrb[0].mxu0
      %v3185 = vadd.f32 %v2864, %v3184
      %v3186 = vpop.f32.mrb[0].mxu0
      %v3187 = vadd.f32 %v2868, %v3186
      %v3188 = vpop.f32.mrb[0].mxu0
      %v3189 = vadd.f32 %v2864, %v3188
      %v3190 = vpop.f32.mrb[0].mxu0
      %v3191 = vadd.f32 %v2868, %v3190
      %3192 = vmatprep.mubr.bf16.mxu0 0
      %3193 = vmatmul.mubr.bf16.gmra.mrb[0].mxu0 %v3097
      %v3194 = vpop.f32.mrb[0].mxu0
      %v3195 = vadd.f32 %v2864, %v3194
      %v3196 = vpop.f32.mrb[0].mxu0
      %v3197 = vadd.f32 %v2868, %v3196
      %v3198 = vpop.f32.mrb[0].mxu0
      %v3199 = vpop.f32.mrb[0].mxu0
      %3200 = vdwg.mxu0
      %3201 = vmatprep.subr.bf16.mxu0 %v3034
      %3202 = vmatpush1.bf16.msra.mxu0 %v3033
      %3203 = vmatprep.subr.bf16.mxu0 %v3050
      %3204 = vmatpush1.bf16.msra.mxu0 %v3049
      %3205 = vmatprep.subr.bf16.mxu0 0
      %3206 = vmatpush1.bf16.msra.mxu0 0
      %3207 = vmatprep.subr.bf16.mxu0 0
      %3208 = vmatpush1.bf16.msra.mxu0 0
      %3209 = vmatprep.subr.bf16.mxu0 0
      %3210 = vmatpush1.bf16.msra.mxu0 0
      %3211 = vmatprep.subr.bf16.mxu0 0
      %3212 = vmatpush1.bf16.msra.mxu0 0
      %3213 = vmatprep.subr.bf16.mxu0 0
      %3214 = vmatpush1.bf16.msra.mxu0 0
      %3215 = vmatprep.subr.bf16.mxu0 0
      %3216 = vmatpush1.bf16.msra.mxu0 0
      %3217 = vmatprep.subr.bf16.mxu0 0
      %3218 = vmatpush1.bf16.msra.mxu0 0
      %3219 = vmatprep.subr.bf16.mxu0 0
      %3220 = vmatpush1.bf16.msra.mxu0 0
      %3221 = vmatprep.subr.bf16.mxu0 0
      %3222 = vmatpush1.bf16.msra.mxu0 0
      %3223 = vmatprep.subr.bf16.mxu0 0
      %3224 = vmatpush1.bf16.msra.mxu0 0
      %3225 = vmatprep.subr.bf16.mxu0 0
      %3226 = vmatpush1.bf16.msra.mxu0 0
      %3227 = vmatprep.subr.bf16.mxu0 0
      %3228 = vmatpush1.bf16.msra.mxu0 0
      %3229 = vmatprep.subr.bf16.mxu0 0
      %3230 = vmatpush1.bf16.msra.mxu0 0
      %3231 = vmatprep.subr.bf16.mxu0 0
      %3232 = vmatpush1.bf16.msra.mxu0 0
      %3233 = vmatprep.mubr.bf16.mxu0 0
      %3234 = vmatmul.mubr.bf16.gmra.mrb[0].mxu0 %v3094
      %v3235 = vpop.f32.mrb[0].mxu0
      %v3236 = vadd.f32 %v2872, %v3235
      %v3237 = vpop.f32.mrb[0].mxu0
      %v3238 = vadd.f32 %v2876, %v3237
      %v3239 = vpop.f32.mrb[0].mxu0
      %v3240 = vadd.f32 %v2872, %v3239
      %v3241 = vpop.f32.mrb[0].mxu0
      %v3242 = vadd.f32 %v2876, %v3241
      %3243 = vmatprep.mubr.bf16.mxu0 0
      %3244 = vmatmul.mubr.bf16.gmra.mrb[0].mxu0 %v3097
      %v3245 = vpop.f32.mrb[0].mxu0
      %v3246 = vadd.f32 %v2872, %v3245
      %v3247 = vpop.f32.mrb[0].mxu0
      %v3248 = vadd.f32 %v2876, %v3247
      %v3249 = vpop.f32.mrb[0].mxu0
      %v3250 = vpop.f32.mrb[0].mxu0
      %3251 = vdwg.mxu0
      %3252 = vmatprep.subr.bf16.mxu0 %v3036
      %3253 = vmatpush1.bf16.msra.mxu0 %v3035
      %3254 = vmatprep.subr.bf16.mxu0 %v3052
      %3255 = vmatpush1.bf16.msra.mxu0 %v3051
      %3256 = vmatprep.subr.bf16.mxu0 0
      %3257 = vmatpush1.bf16.msra.mxu0 0
      %3258 = vmatprep.subr.bf16.mxu0 0
      %3259 = vmatpush1.bf16.msra.mxu0 0
      %3260 = vmatprep.subr.bf16.mxu0 0
      %3261 = vmatpush1.bf16.msra.mxu0 0
      %3262 = vmatprep.subr.bf16.mxu0 0
      %3263 = vmatpush1.bf16.msra.mxu0 0
      %3264 = vmatprep.subr.bf16.mxu0 0
      %3265 = vmatpush1.bf16.msra.mxu0 0
      %3266 = vmatprep.subr.bf16.mxu0 0
      %3267 = vmatpush1.bf16.msra.mxu0 0
      %3268 = vmatprep.subr.bf16.mxu0 0
      %3269 = vmatpush1.bf16.msra.mxu0 0
      %3270 = vmatprep.subr.bf16.mxu0 0
      %3271 = vmatpush1.bf16.msra.mxu0 0
      %3272 = vmatprep.subr.bf16.mxu0 0
      %3273 = vmatpush1.bf16.msra.mxu0 0
      %3274 = vmatprep.subr.bf16.mxu0 0
      %3275 = vmatpush1.bf16.msra.mxu0 0
      %3276 = vmatprep.subr.bf16.mxu0 0
      %3277 = vmatpush1.bf16.msra.mxu0 0
      %3278 = vmatprep.subr.bf16.mxu0 0
      %3279 = vmatpush1.bf16.msra.mxu0 0
      %3280 = vmatprep.subr.bf16.mxu0 0
      %3281 = vmatpush1.bf16.msra.mxu0 0
      %3282 = vmatprep.subr.bf16.mxu0 0
      %3283 = vmatpush1.bf16.msra.mxu0 0
      %3284 = vmatprep.mubr.bf16.mxu0 0
      %3285 = vmatmul.mubr.bf16.gmra.mrb[0].mxu0 %v3094
      %v3286 = vpop.f32.mrb[0].mxu0
      %v3287 = vadd.f32 %v2880, %v3286
      %v3288 = vpop.f32.mrb[0].mxu0
      %v3289 = vadd.f32 %v2884, %v3288
      %v3290 = vpop.f32.mrb[0].mxu0
      %v3291 = vadd.f32 %v2880, %v3290
      %v3292 = vpop.f32.mrb[0].mxu0
      %v3293 = vadd.f32 %v2884, %v3292
      %3294 = vmatprep.mubr.bf16.mxu0 0
      %3295 = vmatmul.mubr.bf16.gmra.mrb[0].mxu0 %v3097
      %v3296 = vpop.f32.mrb[0].mxu0
      %v3297 = vadd.f32 %v2880, %v3296
      %v3298 = vpop.f32.mrb[0].mxu0
      %v3299 = vadd.f32 %v2884, %v3298
      %v3300 = vpop.f32.mrb[0].mxu0
      %v3301 = vpop.f32.mrb[0].mxu0
      %3302 = vdwg.mxu0
      %3303 = vmatprep.subr.bf16.mxu0 %v3038
      %3304 = vmatpush1.bf16.msra.mxu0 %v3037
      %3305 = vmatprep.subr.bf16.mxu0 %v3054
      %3306 = vmatpush1.bf16.msra.mxu0 %v3053
      %3307 = vmatprep.subr.bf16.mxu0 0
      %3308 = vmatpush1.bf16.msra.mxu0 0
      %3309 = vmatprep.subr.bf16.mxu0 0
      %3310 = vmatpush1.bf16.msra.mxu0 0
      %3311 = vmatprep.subr.bf16.mxu0 0
      %3312 = vmatpush1.bf16.msra.mxu0 0
      %3313 = vmatprep.subr.bf16.mxu0 0
      %3314 = vmatpush1.bf16.msra.mxu0 0
      %3315 = vmatprep.subr.bf16.mxu0 0
      %3316 = vmatpush1.bf16.msra.mxu0 0
      %3317 = vmatprep.subr.bf16.mxu0 0
      %3318 = vmatpush1.bf16.msra.mxu0 0
      %3319 = vmatprep.subr.bf16.mxu0 0
      %3320 = vmatpush1.bf16.msra.mxu0 0
      %3321 = vmatprep.subr.bf16.mxu0 0
      %3322 = vmatpush1.bf16.msra.mxu0 0
      %3323 = vmatprep.subr.bf16.mxu0 0
      %3324 = vmatpush1.bf16.msra.mxu0 0
      %3325 = vmatprep.subr.bf16.mxu0 0
      %3326 = vmatpush1.bf16.msra.mxu0 0
      %3327 = vmatprep.subr.bf16.mxu0 0
      %3328 = vmatpush1.bf16.msra.mxu0 0
      %3329 = vmatprep.subr.bf16.mxu0 0
      %3330 = vmatpush1.bf16.msra.mxu0 0
      %3331 = vmatprep.subr.bf16.mxu0 0
      %3332 = vmatpush1.bf16.msra.mxu0 0
      %3333 = vmatprep.subr.bf16.mxu0 0
      %3334 = vmatpush1.bf16.msra.mxu0 0
      %3335 = vmatprep.mubr.bf16.mxu0 0
      %3336 = vmatmul.mubr.bf16.gmra.mrb[0].mxu0 %v3094
      %v3337 = vpop.f32.mrb[0].mxu0
      %v3338 = vadd.f32 %v2888, %v3337
      %v3339 = vpop.f32.mrb[0].mxu0
      %v3340 = vadd.f32 %v2892, %v3339
      %v3341 = vpop.f32.mrb[0].mxu0
      %v3342 = vadd.f32 %v2888, %v3341
      %v3343 = vpop.f32.mrb[0].mxu0
      %v3344 = vadd.f32 %v2892, %v3343
      %3345 = vmatprep.mubr.bf16.mxu0 0
      %3346 = vmatmul.mubr.bf16.gmra.mrb[0].mxu0 %v3097
      %v3347 = vpop.f32.mrb[0].mxu0
      %v3348 = vadd.f32 %v2888, %v3347
      %v3349 = vpop.f32.mrb[0].mxu0
      %v3350 = vadd.f32 %v2892, %v3349
      %v3351 = vpop.f32.mrb[0].mxu0
      %v3352 = vpop.f32.mrb[0].mxu0
      %3353 = vdwg.mxu0
      %3354 = vmatprep.subr.bf16.mxu0 %v3040
      %3355 = vmatpush1.bf16.msra.mxu0 %v3039
      %3356 = vmatprep.subr.bf16.mxu0 %v3056
      %3357 = vmatpush1.bf16.msra.mxu0 %v3055
      %3358 = vmatprep.subr.bf16.mxu0 0
      %3359 = vmatpush1.bf16.msra.mxu0 0
      %3360 = vmatprep.subr.bf16.mxu0 0
      %3361 = vmatpush1.bf16.msra.mxu0 0
      %3362 = vmatprep.subr.bf16.mxu0 0
      %3363 = vmatpush1.bf16.msra.mxu0 0
      %3364 = vmatprep.subr.bf16.mxu0 0
      %3365 = vmatpush1.bf16.msra.mxu0 0
      %3366 = vmatprep.subr.bf16.mxu0 0
      %3367 = vmatpush1.bf16.msra.mxu0 0
      %3368 = vmatprep.subr.bf16.mxu0 0
      %3369 = vmatpush1.bf16.msra.mxu0 0
      %3370 = vmatprep.subr.bf16.mxu0 0
      %3371 = vmatpush1.bf16.msra.mxu0 0
      %3372 = vmatprep.subr.bf16.mxu0 0
      %3373 = vmatpush1.bf16.msra.mxu0 0
      %3374 = vmatprep.subr.bf16.mxu0 0
      %3375 = vmatpush1.bf16.msra.mxu0 0
      %3376 = vmatprep.subr.bf16.mxu0 0
      %3377 = vmatpush1.bf16.msra.mxu0 0
      %3378 = vmatprep.subr.bf16.mxu0 0
      %3379 = vmatpush1.bf16.msra.mxu0 0
      %3380 = vmatprep.subr.bf16.mxu0 0
      %3381 = vmatpush1.bf16.msra.mxu0 0
      %3382 = vmatprep.subr.bf16.mxu0 0
      %3383 = vmatpush1.bf16.msra.mxu0 0
      %3384 = vmatprep.subr.bf16.mxu0 0
      %3385 = vmatpush1.bf16.msra.mxu0 0
      %3386 = vmatprep.mubr.bf16.mxu0 0
      %3387 = vmatmul.mubr.bf16.gmra.mrb[0].mxu0 %v3094
      %v3388 = vpop.f32.mrb[0].mxu0
      %v3389 = vadd.f32 %v2896, %v3388
      %v3390 = vpop.f32.mrb[0].mxu0
      %v3391 = vadd.f32 %v2900, %v3390
      %v3392 = vpop.f32.mrb[0].mxu0
      %v3393 = vadd.f32 %v2896, %v3392
      %v3394 = vpop.f32.mrb[0].mxu0
      %v3395 = vadd.f32 %v2900, %v3394
      %3396 = vmatprep.mubr.bf16.mxu0 0
      %3397 = vmatmul.mubr.bf16.gmra.mrb[0].mxu0 %v3097
      %v3398 = vpop.f32.mrb[0].mxu0
      %v3399 = vadd.f32 %v2896, %v3398
      %v3400 = vpop.f32.mrb[0].mxu0
      %v3401 = vadd.f32 %v2900, %v3400
      %v3402 = vpop.f32.mrb[0].mxu0
      %v3403 = vpop.f32.mrb[0].mxu0
      %3404 = vdwg.mxu0
      %3405 = vmatprep.subr.bf16.mxu0 %v3042
      %3406 = vmatpush1.bf16.msra.mxu0 %v3041
      %3407 = vmatprep.subr.bf16.mxu0 %v3058
      %3408 = vmatpush1.bf16.msra.mxu0 %v3057
      %3409 = vmatprep.subr.bf16.mxu0 0
      %3410 = vmatpush1.bf16.msra.mxu0 0
      %3411 = vmatprep.subr.bf16.mxu0 0
      %3412 = vmatpush1.bf16.msra.mxu0 0
      %3413 = vmatprep.subr.bf16.mxu0 0
      %3414 = vmatpush1.bf16.msra.mxu0 0
      %3415 = vmatprep.subr.bf16.mxu0 0
      %3416 = vmatpush1.bf16.msra.mxu0 0
      %3417 = vmatprep.subr.bf16.mxu0 0
      %3418 = vmatpush1.bf16.msra.mxu0 0
      %3419 = vmatprep.subr.bf16.mxu0 0
      %3420 = vmatpush1.bf16.msra.mxu0 0
      %3421 = vmatprep.subr.bf16.mxu0 0
      %3422 = vmatpush1.bf16.msra.mxu0 0
      %3423 = vmatprep.subr.bf16.mxu0 0
      %3424 = vmatpush1.bf16.msra.mxu0 0
      %3425 = vmatprep.subr.bf16.mxu0 0
      %3426 = vmatpush1.bf16.msra.mxu0 0
      %3427 = vmatprep.subr.bf16.mxu0 0
      %3428 = vmatpush1.bf16.msra.mxu0 0
      %3429 = vmatprep.subr.bf16.mxu0 0
      %3430 = vmatpush1.bf16.msra.mxu0 0
      %3431 = vmatprep.subr.bf16.mxu0 0
      %3432 = vmatpush1.bf16.msra.mxu0 0
      %3433 = vmatprep.subr.bf16.mxu0 0
      %3434 = vmatpush1.bf16.msra.mxu0 0
      %3435 = vmatprep.subr.bf16.mxu0 0
      %3436 = vmatpush1.bf16.msra.mxu0 0
      %3437 = vmatprep.mubr.bf16.mxu0 0
      %3438 = vmatmul.mubr.bf16.gmra.mrb[0].mxu0 %v3094
      %v3439 = vpop.f32.mrb[0].mxu0
      %v3440 = vadd.f32 %v2904, %v3439
      %v3441 = vpop.f32.mrb[0].mxu0
      %v3442 = vadd.f32 %v2908, %v3441
      %v3443 = vpop.f32.mrb[0].mxu0
      %v3444 = vadd.f32 %v2904, %v3443
      %v3445 = vpop.f32.mrb[0].mxu0
      %v3446 = vadd.f32 %v2908, %v3445
      %3447 = vmatprep.mubr.bf16.mxu0 0
      %3448 = vmatmul.mubr.bf16.gmra.mrb[0].mxu0 %v3097
      %v3449 = vpop.f32.mrb[0].mxu0
      %v3450 = vadd.f32 %v2904, %v3449
      %v3451 = vpop.f32.mrb[0].mxu0
      %v3452 = vadd.f32 %v2908, %v3451
      %v3453 = vpop.f32.mrb[0].mxu0
      %v3454 = vpop.f32.mrb[0].mxu0
      %3455 = vdwg.mxu0
      %3456 = vmatprep.subr.bf16.mxu0 %v3044
      %3457 = vmatpush1.bf16.msra.mxu0 %v3043
      %3458 = vmatprep.subr.bf16.mxu0 %v3060
      %3459 = vmatpush1.bf16.msra.mxu0 %v3059
      %3460 = vmatprep.subr.bf16.mxu0 0
      %3461 = vmatpush1.bf16.msra.mxu0 0
      %3462 = vmatprep.subr.bf16.mxu0 0
      %3463 = vmatpush1.bf16.msra.mxu0 0
      %3464 = vmatprep.subr.bf16.mxu0 0
      %3465 = vmatpush1.bf16.msra.mxu0 0
      %3466 = vmatprep.subr.bf16.mxu0 0
      %3467 = vmatpush1.bf16.msra.mxu0 0
      %3468 = vmatprep.subr.bf16.mxu0 0
      %3469 = vmatpush1.bf16.msra.mxu0 0
      %3470 = vmatprep.subr.bf16.mxu0 0
      %3471 = vmatpush1.bf16.msra.mxu0 0
      %3472 = vmatprep.subr.bf16.mxu0 0
      %3473 = vmatpush1.bf16.msra.mxu0 0
      %3474 = vmatprep.subr.bf16.mxu0 0
      %3475 = vmatpush1.bf16.msra.mxu0 0
      %3476 = vmatprep.subr.bf16.mxu0 0
      %3477 = vmatpush1.bf16.msra.mxu0 0
      %3478 = vmatprep.subr.bf16.mxu0 0
      %3479 = vmatpush1.bf16.msra.mxu0 0
      %3480 = vmatprep.subr.bf16.mxu0 0
      %3481 = vmatpush1.bf16.msra.mxu0 0
      %3482 = vmatprep.subr.bf16.mxu0 0
      %3483 = vmatpush1.bf16.msra.mxu0 0
      %3484 = vmatprep.subr.bf16.mxu0 0
      %3485 = vmatpush1.bf16.msra.mxu0 0
      %3486 = vmatprep.subr.bf16.mxu0 0
      %3487 = vmatpush1.bf16.msra.mxu0 0
      %3488 = vmatprep.mubr.bf16.mxu0 0
      %3489 = vmatmul.mubr.bf16.gmra.mrb[0].mxu0 %v3094
      %v3490 = vpop.f32.mrb[0].mxu0
      %v3491 = vadd.f32 %v2912, %v3490
      %v3492 = vpop.f32.mrb[0].mxu0
      %v3493 = vadd.f32 %v2916, %v3492
      %v3494 = vpop.f32.mrb[0].mxu0
      %v3495 = vadd.f32 %v2912, %v3494
      %v3496 = vpop.f32.mrb[0].mxu0
      %v3497 = vadd.f32 %v2916, %v3496
      %3498 = vmatprep.mubr.bf16.mxu0 0
      %3499 = vmatmul.mubr.bf16.gmra.mrb[0].mxu0 %v3097
      %v3500 = vpop.f32.mrb[0].mxu0
      %v3501 = vadd.f32 %v2912, %v3500
      %v3502 = vpop.f32.mrb[0].mxu0
      %v3503 = vadd.f32 %v2916, %v3502
      %v3504 = vpop.f32.mrb[0].mxu0
      %v3505 = vpop.f32.mrb[0].mxu0
      %3506 = vdwg.mxu0
      %v3507 = vmax.f32 %v3134, 0.0
      %v3508 = vmax.f32 %v3136, 0.0
      %v3509 = vmax.f32 %v3185, 0.0
      %v3510 = vmax.f32 %v3187, 0.0
      %v3511 = vmax.f32 %v3236, 0.0
      %v3512 = vmax.f32 %v3238, 0.0
      %v3513 = vmax.f32 %v3287, 0.0
      %v3514 = vmax.f32 %v3289, 0.0
      %v3515 = vmax.f32 %v3338, 0.0
      %v3516 = vmax.f32 %v3340, 0.0
      %v3517 = vmax.f32 %v3389, 0.0
      %v3518 = vmax.f32 %v3391, 0.0
      %v3519 = vmax.f32 %v3440, 0.0
      %v3520 = vmax.f32 %v3442, 0.0
      %v3521 = vmax.f32 %v3491, 0.0
      %v3522 = vmax.f32 %v3493, 0.0
      %v3523 = vmax.f32 %v3138, 0.0
      %v3524 = vmax.f32 %v3140, 0.0
      %v3525 = vmax.f32 %v3189, 0.0
      %v3526 = vmax.f32 %v3191, 0.0
      %v3527 = vmax.f32 %v3240, 0.0
      %v3528 = vmax.f32 %v3242, 0.0
      %v3529 = vmax.f32 %v3291, 0.0
      %v3530 = vmax.f32 %v3293, 0.0
      %v3531 = vmax.f32 %v3342, 0.0
      %v3532 = vmax.f32 %v3344, 0.0
      %v3533 = vmax.f32 %v3393, 0.0
      %v3534 = vmax.f32 %v3395, 0.0
      %v3535 = vmax.f32 %v3444, 0.0
      %v3536 = vmax.f32 %v3446, 0.0
      %v3537 = vmax.f32 %v3495, 0.0
      %v3538 = vmax.f32 %v3497, 0.0
      %v3539 = vmax.f32 %v3144, 0.0
      %v3540 = vmax.f32 %v3146, 0.0
      %v3541 = vmax.f32 %v3195, 0.0
      %v3542 = vmax.f32 %v3197, 0.0
      %v3543 = vmax.f32 %v3246, 0.0
      %v3544 = vmax.f32 %v3248, 0.0
      %v3545 = vmax.f32 %v3297, 0.0
      %v3546 = vmax.f32 %v3299, 0.0
      %v3547 = vmax.f32 %v3348, 0.0
      %v3548 = vmax.f32 %v3350, 0.0
      %v3549 = vmax.f32 %v3399, 0.0
      %v3550 = vmax.f32 %v3401, 0.0
      %v3551 = vmax.f32 %v3450, 0.0
      %v3552 = vmax.f32 %v3452, 0.0
      %v3553 = vmax.f32 %v3501, 0.0
      %v3554 = vmax.f32 %v3503, 0.0
      %v3555 = vpack.c.bf16 %v3523, %v3507
      %v3556 = vpack.c.bf16 %v3524, %v3508
      %v3557 = vpack.c.bf16 %v3525, %v3509
      %v3558 = vpack.c.bf16 %v3526, %v3510
      %v3559 = vpack.c.bf16 %v3527, %v3511
      %v3560 = vpack.c.bf16 %v3528, %v3512
      %v3561 = vpack.c.bf16 %v3529, %v3513
      %v3562 = vpack.c.bf16 %v3530, %v3514
      %v3563 = vpack.c.bf16 %v3531, %v3515
      %v3564 = vpack.c.bf16 %v3532, %v3516
      %v3565 = vpack.c.bf16 %v3533, %v3517
      %v3566 = vpack.c.bf16 %v3534, %v3518
      %v3567 = vpack.c.bf16 %v3535, %v3519
      %v3568 = vpack.c.bf16 %v3536, %v3520
      %v3569 = vpack.c.bf16 %v3537, %v3521
      %v3570 = vpack.c.bf16 %v3538, %v3522
      %v3571 = vpack.c.bf16 %v3539, %v3539
      %v3572 = vpack.c.bf16 %v3540, %v3540
      %v3573 = vpack.c.bf16 %v3541, %v3541
      %v3574 = vpack.c.bf16 %v3542, %v3542
      %v3575 = vpack.c.bf16 %v3543, %v3543
      %v3576 = vpack.c.bf16 %v3544, %v3544
      %v3577 = vpack.c.bf16 %v3545, %v3545
      %v3578 = vpack.c.bf16 %v3546, %v3546
      %v3579 = vpack.c.bf16 %v3547, %v3547
      %v3580 = vpack.c.bf16 %v3548, %v3548
      %v3581 = vpack.c.bf16 %v3549, %v3549
      %v3582 = vpack.c.bf16 %v3550, %v3550
      %v3583 = vpack.c.bf16 %v3551, %v3551
      %v3584 = vpack.c.bf16 %v3552, %v3552
      %v3585 = vpack.c.bf16 %v3553, %v3553
      %v3586 = vpack.c.bf16 %v3554, %v3554
      %v3587 = vld [vmem:[%s699] sm:$0xf]
      %v3588 = vld [vmem:[%s699 + $0x4] sm:$0xf]
      %v3589 = vld [vmem:[%s699 + $0x8] sm:$0xf]
      %v3590 = vld [vmem:[%s699 + $0xc] sm:$0xf]
      %v3591 = vld [vmem:[%s699 + $0x10] sm:$0xf]
      %v3592 = vld [vmem:[%s699 + $0x14] sm:$0xf]
      %v3593 = vld [vmem:[%s699 + $0x18] sm:$0xf]
      %v3594 = vld [vmem:[%s699 + $0x1c] sm:$0xf]
      %v3595 = vld [vmem:[%s699 + $0x20] sm:$0xf]
      %v3596 = vld [vmem:[%s699 + $0x24] sm:$0xf]
      %v3597 = vld [vmem:[%s699 + $0x28] sm:$0xf]
      %v3598 = vld [vmem:[%s699 + $0x2c] sm:$0xf]
      %v3599 = vld [vmem:[%s699 + $0x30] sm:$0xf]
      %v3600 = vld [vmem:[%s699 + $0x34] sm:$0xf]
      %v3601 = vld [vmem:[%s699 + $0x38] sm:$0xf]
      %v3602 = vld [vmem:[%s699 + $0x3c] sm:$0xf]
      %v3603 = vld [vmem:[%s699 + $0x40] sm:$0xf]
      %v3604 = vld [vmem:[%s699 + $0x44] sm:$0xf]
      %v3605 = vld [vmem:[%s699 + $0x48] sm:$0xf]
      %v3606 = vld [vmem:[%s699 + $0x4c] sm:$0xf]
      %v3607 = vld [vmem:[%s699 + $0x50] sm:$0xf]
      %v3608 = vld [vmem:[%s699 + $0x54] sm:$0xf]
      %v3609 = vld [vmem:[%s699 + $0x58] sm:$0xf]
      %v3610 = vld [vmem:[%s699 + $0x5c] sm:$0xf]
      %v3611 = vld [vmem:[%s699 + $0x60] sm:$0xf]
      %v3612 = vld [vmem:[%s699 + $0x64] sm:$0xf]
      %v3613 = vld [vmem:[%s699 + $0x68] sm:$0xf]
      %v3614 = vld [vmem:[%s699 + $0x6c] sm:$0xf]
      %v3615 = vld [vmem:[%s699 + $0x70] sm:$0xf]
      %v3616 = vld [vmem:[%s699 + $0x74] sm:$0xf]
      %v3617 = vld [vmem:[%s699 + $0x78] sm:$0xf]
      %v3618 = vld [vmem:[%s699 + $0x7c] sm:$0xf]
      %v3619 = vld [vmem:[%s699 + $0x80] sm:$0xf]
      %v3620 = vld [vmem:[%s699 + $0x84] sm:$0xf]
      %v3621 = vld [vmem:[%s699 + $0x88] sm:$0xf]
      %v3622 = vld [vmem:[%s699 + $0x8c] sm:$0xf]
      %v3623 = vld [vmem:[%s699 + $0x90] sm:$0xf]
      %v3624 = vld [vmem:[%s699 + $0x94] sm:$0xf]
      %v3625 = vld [vmem:[%s699 + $0x98] sm:$0xf]
      %v3626 = vld [vmem:[%s699 + $0x9c] sm:$0xf]
      %v3627 = vld [vmem:[%s699 + $0xa0] sm:$0xf]
      %v3628 = vld [vmem:[%s699 + $0xa4] sm:$0xf]
      %v3629 = vld [vmem:[%s699 + $0xa8] sm:$0xf]
      %v3630 = vld [vmem:[%s699 + $0xac] sm:$0xf]
      %v3631 = vld [vmem:[%s699 + $0xb0] sm:$0xf]
      %v3632 = vld [vmem:[%s699 + $0xb4] sm:$0xf]
      %v3633 = vld [vmem:[%s699 + $0xb8] sm:$0xf]
      %v3634 = vld [vmem:[%s699 + $0xbc] sm:$0xf]
      %v3635 = vld [vmem:[%s699 + $0xc0] sm:$0xf]
      %v3636 = vld [vmem:[%s699 + $0xc4] sm:$0xf]
      %v3637 = vld [vmem:[%s699 + $0xc8] sm:$0xf]
      %v3638 = vld [vmem:[%s699 + $0xcc] sm:$0xf]
      %v3639 = vld [vmem:[%s699 + $0xd0] sm:$0xf]
      %v3640 = vld [vmem:[%s699 + $0xd4] sm:$0xf]
      %v3641 = vld [vmem:[%s699 + $0xd8] sm:$0xf]
      %v3642 = vld [vmem:[%s699 + $0xdc] sm:$0xf]
      %v3643 = vld [vmem:[%s699 + $0xe0] sm:$0xf]
      %v3644 = vld [vmem:[%s699 + $0xe4] sm:$0xf]
      %v3645 = vld [vmem:[%s699 + $0xe8] sm:$0xf]
      %v3646 = vld [vmem:[%s699 + $0xec] sm:$0xf]
      %v3647 = vld [vmem:[%s699 + $0xf0] sm:$0xf]
      %v3648 = vld [vmem:[%s699 + $0xf4] sm:$0xf]
      %v3649 = vld [vmem:[%s699 + $0xf8] sm:$0xf]
      %v3650 = vld [vmem:[%s699 + $0xfc] sm:$0xf]
      %v3651 = vld [vmem:[%s699 + $0x100] sm:$0xf]
      %v3652 = vld [vmem:[%s699 + $0x104] sm:$0xf]
      %v3653 = vld [vmem:[%s699 + $0x108] sm:$0xf]
      %v3654 = vld [vmem:[%s699 + $0x10c] sm:$0xf]
      %v3655 = vld [vmem:[%s699 + $0x110] sm:$0xf]
      %v3656 = vld [vmem:[%s699 + $0x114] sm:$0xf]
      %v3657 = vld [vmem:[%s699 + $0x118] sm:$0xf]
      %v3658 = vld [vmem:[%s699 + $0x11c] sm:$0xf]
      %v3659 = vld [vmem:[%s699 + $0x120] sm:$0xf]
      %v3660 = vld [vmem:[%s699 + $0x124] sm:$0xf]
      %v3661 = vld [vmem:[%s699 + $0x128] sm:$0xf]
      %v3662 = vld [vmem:[%s699 + $0x12c] sm:$0xf]
      %v3663 = vld [vmem:[%s699 + $0x130] sm:$0xf]
      %v3664 = vld [vmem:[%s699 + $0x134] sm:$0xf]
      %v3665 = vld [vmem:[%s699 + $0x138] sm:$0xf]
      %v3666 = vld [vmem:[%s699 + $0x13c] sm:$0xf]
      %v3667 = vld [vmem:[%s699 + $0x140] sm:$0xf]
      %v3668 = vld [vmem:[%s699 + $0x144] sm:$0xf]
      %v3669 = vld [vmem:[%s699 + $0x148] sm:$0xf]
      %v3670 = vld [vmem:[%s699 + $0x14c] sm:$0xf]
      %v3671 = vld [vmem:[%s699 + $0x150] sm:$0xf]
      %v3672 = vld [vmem:[%s699 + $0x154] sm:$0xf]
      %v3673 = vld [vmem:[%s699 + $0x158] sm:$0xf]
      %v3674 = vld [vmem:[%s699 + $0x15c] sm:$0xf]
      %v3675 = vld [vmem:[%s699 + $0x160] sm:$0xf]
      %v3676 = vld [vmem:[%s699 + $0x164] sm:$0xf]
      %v3677 = vld [vmem:[%s699 + $0x168] sm:$0xf]
      %v3678 = vld [vmem:[%s699 + $0x16c] sm:$0xf]
      %v3679 = vld [vmem:[%s699 + $0x170] sm:$0xf]
      %v3680 = vld [vmem:[%s699 + $0x174] sm:$0xf]
      %v3681 = vld [vmem:[%s699 + $0x178] sm:$0xf]
      %v3682 = vld [vmem:[%s699 + $0x17c] sm:$0xf]
      %v3683 = vld [vmem:[%s699 + $0x180] sm:$0xf]
      %v3684 = vld [vmem:[%s699 + $0x184] sm:$0xf]
      %v3685 = vld [vmem:[%s699 + $0x188] sm:$0xf]
      %v3686 = vld [vmem:[%s699 + $0x18c] sm:$0xf]
      %v3687 = vld [vmem:[%s699 + $0x190] sm:$0xf]
      %v3688 = vld [vmem:[%s699 + $0x194] sm:$0xf]
      %v3689 = vld [vmem:[%s699 + $0x198] sm:$0xf]
      %v3690 = vld [vmem:[%s699 + $0x19c] sm:$0xf]
      %v3691 = vld [vmem:[%s699 + $0x1a0] sm:$0xf]
      %v3692 = vld [vmem:[%s699 + $0x1a4] sm:$0xf]
      %v3693 = vld [vmem:[%s699 + $0x1a8] sm:$0xf]
      %v3694 = vld [vmem:[%s699 + $0x1ac] sm:$0xf]
      %v3695 = vld [vmem:[%s699 + $0x1b0] sm:$0xf]
      %v3696 = vld [vmem:[%s699 + $0x1b4] sm:$0xf]
      %v3697 = vld [vmem:[%s699 + $0x1b8] sm:$0xf]
      %v3698 = vld [vmem:[%s699 + $0x1bc] sm:$0xf]
      %v3699 = vld [vmem:[%s699 + $0x1c0] sm:$0xf]
      %v3700 = vld [vmem:[%s699 + $0x1c4] sm:$0xf]
      %v3701 = vld [vmem:[%s699 + $0x1c8] sm:$0xf]
      %v3702 = vld [vmem:[%s699 + $0x1cc] sm:$0xf]
      %v3703 = vld [vmem:[%s699 + $0x1d0] sm:$0xf]
      %v3704 = vld [vmem:[%s699 + $0x1d4] sm:$0xf]
      %v3705 = vld [vmem:[%s699 + $0x1d8] sm:$0xf]
      %v3706 = vld [vmem:[%s699 + $0x1dc] sm:$0xf]
      %v3707 = vld [vmem:[%s699 + $0x1e0] sm:$0xf]
      %v3708 = vld [vmem:[%s699 + $0x1e4] sm:$0xf]
      %v3709 = vld [vmem:[%s699 + $0x1e8] sm:$0xf]
      %v3710 = vld [vmem:[%s699 + $0x1ec] sm:$0xf]
      %v3711 = vld [vmem:[%s699 + $0x1f0] sm:$0xf]
      %v3712 = vld [vmem:[%s699 + $0x1f4] sm:$0xf]
      %v3713 = vld [vmem:[%s699 + $0x1f8] sm:$0xf]
      %v3714 = vld [vmem:[%s699 + $0x1fc] sm:$0xf]
      %v3715 = vld [vmem:[%s699 + $0x200] sm:$0xf]
      %v3716 = vld [vmem:[%s699 + $0x204] sm:$0xf]
      %v3717 = vld [vmem:[%s699 + $0x208] sm:$0xf]
      %v3718 = vld [vmem:[%s699 + $0x20c] sm:$0xf]
      %v3719 = vld [vmem:[%s699 + $0x210] sm:$0xf]
      %v3720 = vld [vmem:[%s699 + $0x214] sm:$0xf]
      %v3721 = vld [vmem:[%s699 + $0x218] sm:$0xf]
      %v3722 = vld [vmem:[%s699 + $0x21c] sm:$0xf]
      %v3723 = vld [vmem:[%s699 + $0x220] sm:$0xf]
      %v3724 = vld [vmem:[%s699 + $0x224] sm:$0xf]
      %v3725 = vld [vmem:[%s699 + $0x228] sm:$0xf]
      %v3726 = vld [vmem:[%s699 + $0x22c] sm:$0xf]
      %v3727 = vld [vmem:[%s699 + $0x230] sm:$0xf]
      %v3728 = vld [vmem:[%s699 + $0x234] sm:$0xf]
      %v3729 = vld [vmem:[%s699 + $0x238] sm:$0xf]
      %v3730 = vld [vmem:[%s699 + $0x23c] sm:$0xf]
      %v3731 = vld [vmem:[%s699 + $0x240] sm:$0xf]
      %v3732 = vld [vmem:[%s699 + $0x244] sm:$0xf]
      %v3733 = vld [vmem:[%s699 + $0x248] sm:$0xf]
      %v3734 = vld [vmem:[%s699 + $0x24c] sm:$0xf]
      %v3735 = vld [vmem:[%s699 + $0x250] sm:$0xf]
      %v3736 = vld [vmem:[%s699 + $0x254] sm:$0xf]
      %v3737 = vld [vmem:[%s699 + $0x258] sm:$0xf]
      %v3738 = vld [vmem:[%s699 + $0x25c] sm:$0xf]
      %v3739 = vld [vmem:[%s699 + $0x260] sm:$0xf]
      %v3740 = vld [vmem:[%s699 + $0x264] sm:$0xf]
      %v3741 = vld [vmem:[%s699 + $0x268] sm:$0xf]
      %v3742 = vld [vmem:[%s699 + $0x26c] sm:$0xf]
      %v3743 = vld [vmem:[%s699 + $0x270] sm:$0xf]
      %v3744 = vld [vmem:[%s699 + $0x274] sm:$0xf]
      %v3745 = vld [vmem:[%s699 + $0x278] sm:$0xf]
      %v3746 = vld [vmem:[%s699 + $0x27c] sm:$0xf]
      %v3747 = vld [vmem:[%s699 + $0x280] sm:$0xf]
      %v3748 = vld [vmem:[%s699 + $0x284] sm:$0xf]
      %v3749 = vld [vmem:[%s699 + $0x288] sm:$0xf]
      %v3750 = vld [vmem:[%s699 + $0x28c] sm:$0xf]
      %v3751 = vld [vmem:[%s699 + $0x290] sm:$0xf]
      %v3752 = vld [vmem:[%s699 + $0x294] sm:$0xf]
      %v3753 = vld [vmem:[%s699 + $0x298] sm:$0xf]
      %v3754 = vld [vmem:[%s699 + $0x29c] sm:$0xf]
      %v3755 = vld [vmem:[%s699 + $0x2a0] sm:$0xf]
      %v3756 = vld [vmem:[%s699 + $0x2a4] sm:$0xf]
      %v3757 = vld [vmem:[%s699 + $0x2a8] sm:$0xf]
      %v3758 = vld [vmem:[%s699 + $0x2ac] sm:$0xf]
      %v3759 = vld [vmem:[%s699 + $0x2b0] sm:$0xf]
      %v3760 = vld [vmem:[%s699 + $0x2b4] sm:$0xf]
      %v3761 = vld [vmem:[%s699 + $0x2b8] sm:$0xf]
      %v3762 = vld [vmem:[%s699 + $0x2bc] sm:$0xf]
      %v3763 = vld [vmem:[%s699 + $0x2c0] sm:$0xf]
      %v3764 = vld [vmem:[%s699 + $0x2c4] sm:$0xf]
      %v3765 = vld [vmem:[%s699 + $0x2c8] sm:$0xf]
      %v3766 = vld [vmem:[%s699 + $0x2cc] sm:$0xf]
      %v3767 = vld [vmem:[%s699 + $0x2d0] sm:$0xf]
      %v3768 = vld [vmem:[%s699 + $0x2d4] sm:$0xf]
      %v3769 = vld [vmem:[%s699 + $0x2d8] sm:$0xf]
      %v3770 = vld [vmem:[%s699 + $0x2dc] sm:$0xf]
      %v3771 = vld [vmem:[%s699 + $0x2e0] sm:$0xf]
      %v3772 = vld [vmem:[%s699 + $0x2e4] sm:$0xf]
      %v3773 = vld [vmem:[%s699 + $0x2e8] sm:$0xf]
      %v3774 = vld [vmem:[%s699 + $0x2ec] sm:$0xf]
      %v3775 = vld [vmem:[%s699 + $0x2f0] sm:$0xf]
      %v3776 = vld [vmem:[%s699 + $0x2f4] sm:$0xf]
      %v3777 = vld [vmem:[%s699 + $0x2f8] sm:$0xf]
      %v3778 = vld [vmem:[%s699 + $0x2fc] sm:$0xf]
      %v3779 = vld [vmem:[%s699 + $0x300] sm:$0xf]
      %v3780 = vld [vmem:[%s699 + $0x304] sm:$0xf]
      %v3781 = vld [vmem:[%s699 + $0x308] sm:$0xf]
      %v3782 = vld [vmem:[%s699 + $0x30c] sm:$0xf]
      %v3783 = vld [vmem:[%s699 + $0x310] sm:$0xf]
      %v3784 = vld [vmem:[%s699 + $0x314] sm:$0xf]
      %v3785 = vld [vmem:[%s699 + $0x318] sm:$0xf]
      %v3786 = vld [vmem:[%s699 + $0x31c] sm:$0xf]
      %v3787 = vld [vmem:[%s699 + $0x320] sm:$0xf]
      %v3788 = vld [vmem:[%s699 + $0x324] sm:$0xf]
      %v3789 = vld [vmem:[%s699 + $0x328] sm:$0xf]
      %v3790 = vld [vmem:[%s699 + $0x32c] sm:$0xf]
      %v3791 = vld [vmem:[%s699 + $0x330] sm:$0xf]
      %v3792 = vld [vmem:[%s699 + $0x334] sm:$0xf]
      %v3793 = vld [vmem:[%s699 + $0x338] sm:$0xf]
      %v3794 = vld [vmem:[%s699 + $0x33c] sm:$0xf]
      %v3795 = vld [vmem:[%s699 + $0x340] sm:$0xf]
      %v3796 = vld [vmem:[%s699 + $0x344] sm:$0xf]
      %v3797 = vld [vmem:[%s699 + $0x348] sm:$0xf]
      %v3798 = vld [vmem:[%s699 + $0x34c] sm:$0xf]
      %v3799 = vld [vmem:[%s699 + $0x350] sm:$0xf]
      %v3800 = vld [vmem:[%s699 + $0x354] sm:$0xf]
      %v3801 = vld [vmem:[%s699 + $0x358] sm:$0xf]
      %v3802 = vld [vmem:[%s699 + $0x35c] sm:$0xf]
      %v3803 = vld [vmem:[%s699 + $0x360] sm:$0xf]
      %v3804 = vld [vmem:[%s699 + $0x364] sm:$0xf]
      %v3805 = vld [vmem:[%s699 + $0x368] sm:$0xf]
      %v3806 = vld [vmem:[%s699 + $0x36c] sm:$0xf]
      %v3807 = vld [vmem:[%s699 + $0x370] sm:$0xf]
      %v3808 = vld [vmem:[%s699 + $0x374] sm:$0xf]
      %v3809 = vld [vmem:[%s699 + $0x378] sm:$0xf]
      %v3810 = vld [vmem:[%s699 + $0x37c] sm:$0xf]
      %v3811 = vld [vmem:[%s699 + $0x380] sm:$0xf]
      %v3812 = vld [vmem:[%s699 + $0x384] sm:$0xf]
      %v3813 = vld [vmem:[%s699 + $0x388] sm:$0xf]
      %v3814 = vld [vmem:[%s699 + $0x38c] sm:$0xf]
      %v3815 = vld [vmem:[%s699 + $0x390] sm:$0xf]
      %v3816 = vld [vmem:[%s699 + $0x394] sm:$0xf]
      %v3817 = vld [vmem:[%s699 + $0x398] sm:$0xf]
      %v3818 = vld [vmem:[%s699 + $0x39c] sm:$0xf]
      %v3819 = vld [vmem:[%s699 + $0x3a0] sm:$0xf]
      %v3820 = vld [vmem:[%s699 + $0x3a4] sm:$0xf]
      %v3821 = vld [vmem:[%s699 + $0x3a8] sm:$0xf]
      %v3822 = vld [vmem:[%s699 + $0x3ac] sm:$0xf]
      %v3823 = vld [vmem:[%s699 + $0x3b0] sm:$0xf]
      %v3824 = vld [vmem:[%s699 + $0x3b4] sm:$0xf]
      %v3825 = vld [vmem:[%s699 + $0x3b8] sm:$0xf]
      %v3826 = vld [vmem:[%s699 + $0x3bc] sm:$0xf]
      %v3827 = vld [vmem:[%s699 + $0x3c0] sm:$0xf]
      %v3828 = vld [vmem:[%s699 + $0x3c4] sm:$0xf]
      %v3829 = vld [vmem:[%s699 + $0x3c8] sm:$0xf]
      %v3830 = vld [vmem:[%s699 + $0x3cc] sm:$0xf]
      %v3831 = vld [vmem:[%s699 + $0x3d0] sm:$0xf]
      %v3832 = vld [vmem:[%s699 + $0x3d4] sm:$0xf]
      %v3833 = vld [vmem:[%s699 + $0x3d8] sm:$0xf]
      %v3834 = vld [vmem:[%s699 + $0x3dc] sm:$0xf]
      %v3835 = vld [vmem:[%s699 + $0x3e0] sm:$0xf]
      %v3836 = vld [vmem:[%s699 + $0x3e4] sm:$0xf]
      %v3837 = vld [vmem:[%s699 + $0x3e8] sm:$0xf]
      %v3838 = vld [vmem:[%s699 + $0x3ec] sm:$0xf]
      %v3839 = vld [vmem:[%s699 + $0x3f0] sm:$0xf]
      %v3840 = vld [vmem:[%s699 + $0x3f4] sm:$0xf]
      %v3841 = vld [vmem:[%s699 + $0x3f8] sm:$0xf]
      %v3842 = vld [vmem:[%s699 + $0x3fc] sm:$0xf]
      %v3843 = vld [vmem:[%s702] sm:$0x1]
      %v3845 = vlaneseq
      %v3846 = vshrl.u32 %v3845, 7
      %v3847 = vsub.s32 0, %v3846
      %v3848 = vrot.slane %v3843, %v3847
      %v4106 = vunpack.c.l.b16 %v3587
      %v4107 = vunpack.c.l.b16 %v3588
      %v4108 = vunpack.c.l.b16 %v3589
      %v4109 = vunpack.c.l.b16 %v3590
      %v4110 = vunpack.c.l.b16 %v3591
      %v4111 = vunpack.c.l.b16 %v3592
      %v4112 = vunpack.c.l.b16 %v3593
      %v4113 = vunpack.c.l.b16 %v3594
      %v4114 = vunpack.c.l.b16 %v3595
      %v4115 = vunpack.c.l.b16 %v3596
      %v4116 = vunpack.c.l.b16 %v3597
      %v4117 = vunpack.c.l.b16 %v3598
      %v4118 = vunpack.c.l.b16 %v3599
      %v4119 = vunpack.c.l.b16 %v3600
      %v4120 = vunpack.c.l.b16 %v3601
      %v4121 = vunpack.c.l.b16 %v3602
      %v4122 = vunpack.c.l.b16 %v3603
      %v4123 = vunpack.c.l.b16 %v3604
      %v4124 = vunpack.c.l.b16 %v3605
      %v4125 = vunpack.c.l.b16 %v3606
      %v4126 = vunpack.c.l.b16 %v3607
      %v4127 = vunpack.c.l.b16 %v3608
      %v4128 = vunpack.c.l.b16 %v3609
      %v4129 = vunpack.c.l.b16 %v3610
      %v4130 = vunpack.c.l.b16 %v3611
      %v4131 = vunpack.c.l.b16 %v3612
      %v4132 = vunpack.c.l.b16 %v3613
      %v4133 = vunpack.c.l.b16 %v3614
      %v4134 = vunpack.c.l.b16 %v3615
      %v4135 = vunpack.c.l.b16 %v3616
      %v4136 = vunpack.c.l.b16 %v3617
      %v4137 = vunpack.c.l.b16 %v3618
      %v4138 = vunpack.c.l.b16 %v3619
      %v4139 = vunpack.c.l.b16 %v3620
      %v4140 = vunpack.c.l.b16 %v3621
      %v4141 = vunpack.c.l.b16 %v3622
      %v4142 = vunpack.c.l.b16 %v3623
      %v4143 = vunpack.c.l.b16 %v3624
      %v4144 = vunpack.c.l.b16 %v3625
      %v4145 = vunpack.c.l.b16 %v3626
      %v4146 = vunpack.c.l.b16 %v3627
      %v4147 = vunpack.c.l.b16 %v3628
      %v4148 = vunpack.c.l.b16 %v3629
      %v4149 = vunpack.c.l.b16 %v3630
      %v4150 = vunpack.c.l.b16 %v3631
      %v4151 = vunpack.c.l.b16 %v3632
      %v4152 = vunpack.c.l.b16 %v3633
      %v4153 = vunpack.c.l.b16 %v3634
      %v4154 = vunpack.c.l.b16 %v3635
      %v4155 = vunpack.c.l.b16 %v3636
      %v4156 = vunpack.c.l.b16 %v3637
      %v4157 = vunpack.c.l.b16 %v3638
      %v4158 = vunpack.c.l.b16 %v3639
      %v4159 = vunpack.c.l.b16 %v3640
      %v4160 = vunpack.c.l.b16 %v3641
      %v4161 = vunpack.c.l.b16 %v3642
      %v4162 = vunpack.c.l.b16 %v3643
      %v4163 = vunpack.c.l.b16 %v3644
      %v4164 = vunpack.c.l.b16 %v3645
      %v4165 = vunpack.c.l.b16 %v3646
      %v4166 = vunpack.c.l.b16 %v3647
      %v4167 = vunpack.c.l.b16 %v3648
      %v4168 = vunpack.c.l.b16 %v3649
      %v4169 = vunpack.c.l.b16 %v3650
      %v4170 = vunpack.c.l.b16 %v3651
      %v4171 = vunpack.c.l.b16 %v3652
      %v4172 = vunpack.c.l.b16 %v3653
      %v4173 = vunpack.c.l.b16 %v3654
      %v4174 = vunpack.c.l.b16 %v3655
      %v4175 = vunpack.c.l.b16 %v3656
      %v4176 = vunpack.c.l.b16 %v3657
      %v4177 = vunpack.c.l.b16 %v3658
      %v4178 = vunpack.c.l.b16 %v3659
      %v4179 = vunpack.c.l.b16 %v3660
      %v4180 = vunpack.c.l.b16 %v3661
      %v4181 = vunpack.c.l.b16 %v3662
      %v4182 = vunpack.c.l.b16 %v3663
      %v4183 = vunpack.c.l.b16 %v3664
      %v4184 = vunpack.c.l.b16 %v3665
      %v4185 = vunpack.c.l.b16 %v3666
      %v4186 = vunpack.c.l.b16 %v3667
      %v4187 = vunpack.c.l.b16 %v3668
      %v4188 = vunpack.c.l.b16 %v3669
      %v4189 = vunpack.c.l.b16 %v3670
      %v4190 = vunpack.c.l.b16 %v3671
      %v4191 = vunpack.c.l.b16 %v3672
      %v4192 = vunpack.c.l.b16 %v3673
      %v4193 = vunpack.c.l.b16 %v3674
      %v4194 = vunpack.c.l.b16 %v3675
      %v4195 = vunpack.c.l.b16 %v3676
      %v4196 = vunpack.c.l.b16 %v3677
      %v4197 = vunpack.c.l.b16 %v3678
      %v4198 = vunpack.c.l.b16 %v3679
      %v4199 = vunpack.c.l.b16 %v3680
      %v4200 = vunpack.c.l.b16 %v3681
      %v4201 = vunpack.c.l.b16 %v3682
      %v4202 = vunpack.c.l.b16 %v3683
      %v4203 = vunpack.c.l.b16 %v3684
      %v4204 = vunpack.c.l.b16 %v3685
      %v4205 = vunpack.c.l.b16 %v3686
      %v4206 = vunpack.c.l.b16 %v3687
      %v4207 = vunpack.c.l.b16 %v3688
      %v4208 = vunpack.c.l.b16 %v3689
      %v4209 = vunpack.c.l.b16 %v3690
      %v4210 = vunpack.c.l.b16 %v3691
      %v4211 = vunpack.c.l.b16 %v3692
      %v4212 = vunpack.c.l.b16 %v3693
      %v4213 = vunpack.c.l.b16 %v3694
      %v4214 = vunpack.c.l.b16 %v3695
      %v4215 = vunpack.c.l.b16 %v3696
      %v4216 = vunpack.c.l.b16 %v3697
      %v4217 = vunpack.c.l.b16 %v3698
      %v4218 = vunpack.c.l.b16 %v3699
      %v4219 = vunpack.c.l.b16 %v3700
      %v4220 = vunpack.c.l.b16 %v3701
      %v4221 = vunpack.c.l.b16 %v3702
      %v4222 = vunpack.c.l.b16 %v3703
      %v4223 = vunpack.c.l.b16 %v3704
      %v4224 = vunpack.c.l.b16 %v3705
      %v4225 = vunpack.c.l.b16 %v3706
      %v4226 = vunpack.c.l.b16 %v3707
      %v4227 = vunpack.c.l.b16 %v3708
      %v4228 = vunpack.c.l.b16 %v3709
      %v4229 = vunpack.c.l.b16 %v3710
      %v4230 = vunpack.c.l.b16 %v3711
      %v4231 = vunpack.c.l.b16 %v3712
      %v4232 = vunpack.c.l.b16 %v3713
      %v4233 = vunpack.c.l.b16 %v3714
      %v4234 = vunpack.c.l.b16 %v3715
      %v4235 = vunpack.c.l.b16 %v3716
      %v4236 = vunpack.c.l.b16 %v3717
      %v4237 = vunpack.c.l.b16 %v3718
      %v4238 = vunpack.c.l.b16 %v3719
      %v4239 = vunpack.c.l.b16 %v3720
      %v4240 = vunpack.c.l.b16 %v3721
      %v4241 = vunpack.c.l.b16 %v3722
      %v4242 = vunpack.c.l.b16 %v3723
      %v4243 = vunpack.c.l.b16 %v3724
      %v4244 = vunpack.c.l.b16 %v3725
      %v4245 = vunpack.c.l.b16 %v3726
      %v4246 = vunpack.c.l.b16 %v3727
      %v4247 = vunpack.c.l.b16 %v3728
      %v4248 = vunpack.c.l.b16 %v3729
      %v4249 = vunpack.c.l.b16 %v3730
      %v4250 = vunpack.c.l.b16 %v3731
      %v4251 = vunpack.c.l.b16 %v3732
      %v4252 = vunpack.c.l.b16 %v3733
      %v4253 = vunpack.c.l.b16 %v3734
      %v4254 = vunpack.c.l.b16 %v3735
      %v4255 = vunpack.c.l.b16 %v3736
      %v4256 = vunpack.c.l.b16 %v3737
      %v4257 = vunpack.c.l.b16 %v3738
      %v4258 = vunpack.c.l.b16 %v3739
      %v4259 = vunpack.c.l.b16 %v3740
      %v4260 = vunpack.c.l.b16 %v3741
      %v4261 = vunpack.c.l.b16 %v3742
      %v4262 = vunpack.c.l.b16 %v3743
      %v4263 = vunpack.c.l.b16 %v3744
      %v4264 = vunpack.c.l.b16 %v3745
      %v4265 = vunpack.c.l.b16 %v3746
      %v4266 = vunpack.c.l.b16 %v3747
      %v4267 = vunpack.c.l.b16 %v3748
      %v4268 = vunpack.c.l.b16 %v3749
      %v4269 = vunpack.c.l.b16 %v3750
      %v4270 = vunpack.c.l.b16 %v3751
      %v4271 = vunpack.c.l.b16 %v3752
      %v4272 = vunpack.c.l.b16 %v3753
      %v4273 = vunpack.c.l.b16 %v3754
      %v4274 = vunpack.c.l.b16 %v3755
      %v4275 = vunpack.c.l.b16 %v3756
      %v4276 = vunpack.c.l.b16 %v3757
      %v4277 = vunpack.c.l.b16 %v3758
      %v4278 = vunpack.c.l.b16 %v3759
      %v4279 = vunpack.c.l.b16 %v3760
      %v4280 = vunpack.c.l.b16 %v3761
      %v4281 = vunpack.c.l.b16 %v3762
      %v4282 = vunpack.c.l.b16 %v3763
      %v4283 = vunpack.c.l.b16 %v3764
      %v4284 = vunpack.c.l.b16 %v3765
      %v4285 = vunpack.c.l.b16 %v3766
      %v4286 = vunpack.c.l.b16 %v3767
      %v4287 = vunpack.c.l.b16 %v3768
      %v4288 = vunpack.c.l.b16 %v3769
      %v4289 = vunpack.c.l.b16 %v3770
      %v4290 = vunpack.c.l.b16 %v3771
      %v4291 = vunpack.c.l.b16 %v3772
      %v4292 = vunpack.c.l.b16 %v3773
      %v4293 = vunpack.c.l.b16 %v3774
      %v4294 = vunpack.c.l.b16 %v3775
      %v4295 = vunpack.c.l.b16 %v3776
      %v4296 = vunpack.c.l.b16 %v3777
      %v4297 = vunpack.c.l.b16 %v3778
      %v4298 = vunpack.c.l.b16 %v3779
      %v4299 = vunpack.c.l.b16 %v3780
      %v4300 = vunpack.c.l.b16 %v3781
      %v4301 = vunpack.c.l.b16 %v3782
      %v4302 = vunpack.c.l.b16 %v3783
      %v4303 = vunpack.c.l.b16 %v3784
      %v4304 = vunpack.c.l.b16 %v3785
      %v4305 = vunpack.c.l.b16 %v3786
      %v4306 = vunpack.c.l.b16 %v3787
      %v4307 = vunpack.c.l.b16 %v3788
      %v4308 = vunpack.c.l.b16 %v3789
      %v4309 = vunpack.c.l.b16 %v3790
      %v4310 = vunpack.c.l.b16 %v3791
      %v4311 = vunpack.c.l.b16 %v3792
      %v4312 = vunpack.c.l.b16 %v3793
      %v4313 = vunpack.c.l.b16 %v3794
      %v4314 = vunpack.c.l.b16 %v3795
      %v4315 = vunpack.c.l.b16 %v3796
      %v4316 = vunpack.c.l.b16 %v3797
      %v4317 = vunpack.c.l.b16 %v3798
      %v4318 = vunpack.c.l.b16 %v3799
      %v4319 = vunpack.c.l.b16 %v3800
      %v4320 = vunpack.c.l.b16 %v3801
      %v4321 = vunpack.c.l.b16 %v3802
      %v4322 = vunpack.c.l.b16 %v3803
      %v4323 = vunpack.c.l.b16 %v3804
      %v4324 = vunpack.c.l.b16 %v3805
      %v4325 = vunpack.c.l.b16 %v3806
      %v4326 = vunpack.c.l.b16 %v3807
      %v4327 = vunpack.c.l.b16 %v3808
      %v4328 = vunpack.c.l.b16 %v3809
      %v4329 = vunpack.c.l.b16 %v3810
      %v4330 = vunpack.c.l.b16 %v3811
      %v4331 = vunpack.c.l.b16 %v3812
      %v4332 = vunpack.c.l.b16 %v3813
      %v4333 = vunpack.c.l.b16 %v3814
      %v4334 = vunpack.c.l.b16 %v3815
      %v4335 = vunpack.c.l.b16 %v3816
      %v4336 = vunpack.c.l.b16 %v3817
      %v4337 = vunpack.c.l.b16 %v3818
      %v4338 = vunpack.c.l.b16 %v3819
      %v4339 = vunpack.c.l.b16 %v3820
      %v4340 = vunpack.c.l.b16 %v3821
      %v4341 = vunpack.c.l.b16 %v3822
      %v4342 = vunpack.c.l.b16 %v3823
      %v4343 = vunpack.c.l.b16 %v3824
      %v4344 = vunpack.c.l.b16 %v3825
      %v4345 = vunpack.c.l.b16 %v3826
      %v4346 = vunpack.c.l.b16 %v3827
      %v4347 = vunpack.c.l.b16 %v3828
      %v4348 = vunpack.c.l.b16 %v3829
      %v4349 = vunpack.c.l.b16 %v3830
      %v4350 = vunpack.c.l.b16 %v3831
      %v4351 = vunpack.c.l.b16 %v3832
      %v4352 = vunpack.c.l.b16 %v3833
      %v4353 = vunpack.c.l.b16 %v3834
      %v4354 = vunpack.c.l.b16 %v3835
      %v4355 = vunpack.c.l.b16 %v3836
      %v4356 = vunpack.c.l.b16 %v3837
      %v4357 = vunpack.c.l.b16 %v3838
      %v4358 = vunpack.c.l.b16 %v3839
      %v4359 = vunpack.c.l.b16 %v3840
      %v4360 = vunpack.c.l.b16 %v3841
      %v4361 = vunpack.c.l.b16 %v3842
      %v4362 = vpack.c.b16 %v4107, %v4106
      %v4363 = vpack.c.b16 %v4109, %v4108
      %v4364 = vpack.c.b16 %v4111, %v4110
      %v4365 = vpack.c.b16 %v4113, %v4112
      %v4366 = vpack.c.b16 %v4115, %v4114
      %v4367 = vpack.c.b16 %v4117, %v4116
      %v4368 = vpack.c.b16 %v4119, %v4118
      %v4369 = vpack.c.b16 %v4121, %v4120
      %v4370 = vpack.c.b16 %v4123, %v4122
      %v4371 = vpack.c.b16 %v4125, %v4124
      %v4372 = vpack.c.b16 %v4127, %v4126
      %v4373 = vpack.c.b16 %v4129, %v4128
      %v4374 = vpack.c.b16 %v4131, %v4130
      %v4375 = vpack.c.b16 %v4133, %v4132
      %v4376 = vpack.c.b16 %v4135, %v4134
      %v4377 = vpack.c.b16 %v4137, %v4136
      %v4378 = vpack.c.b16 %v4139, %v4138
      %v4379 = vpack.c.b16 %v4141, %v4140
      %v4380 = vpack.c.b16 %v4143, %v4142
      %v4381 = vpack.c.b16 %v4145, %v4144
      %v4382 = vpack.c.b16 %v4147, %v4146
      %v4383 = vpack.c.b16 %v4149, %v4148
      %v4384 = vpack.c.b16 %v4151, %v4150
      %v4385 = vpack.c.b16 %v4153, %v4152
      %v4386 = vpack.c.b16 %v4155, %v4154
      %v4387 = vpack.c.b16 %v4157, %v4156
      %v4388 = vpack.c.b16 %v4159, %v4158
      %v4389 = vpack.c.b16 %v4161, %v4160
      %v4390 = vpack.c.b16 %v4163, %v4162
      %v4391 = vpack.c.b16 %v4165, %v4164
      %v4392 = vpack.c.b16 %v4167, %v4166
      %v4393 = vpack.c.b16 %v4169, %v4168
      %v4394 = vpack.c.b16 %v4171, %v4170
      %v4395 = vpack.c.b16 %v4173, %v4172
      %v4396 = vpack.c.b16 %v4175, %v4174
      %v4397 = vpack.c.b16 %v4177, %v4176
      %v4398 = vpack.c.b16 %v4179, %v4178
      %v4399 = vpack.c.b16 %v4181, %v4180
      %v4400 = vpack.c.b16 %v4183, %v4182
      %v4401 = vpack.c.b16 %v4185, %v4184
      %v4402 = vpack.c.b16 %v4187, %v4186
      %v4403 = vpack.c.b16 %v4189, %v4188
      %v4404 = vpack.c.b16 %v4191, %v4190
      %v4405 = vpack.c.b16 %v4193, %v4192
      %v4406 = vpack.c.b16 %v4195, %v4194
      %v4407 = vpack.c.b16 %v4197, %v4196
      %v4408 = vpack.c.b16 %v4199, %v4198
      %v4409 = vpack.c.b16 %v4201, %v4200
      %v4410 = vpack.c.b16 %v4203, %v4202
      %v4411 = vpack.c.b16 %v4205, %v4204
      %v4412 = vpack.c.b16 %v4207, %v4206
      %v4413 = vpack.c.b16 %v4209, %v4208
      %v4414 = vpack.c.b16 %v4211, %v4210
      %v4415 = vpack.c.b16 %v4213, %v4212
      %v4416 = vpack.c.b16 %v4215, %v4214
      %v4417 = vpack.c.b16 %v4217, %v4216
      %v4418 = vpack.c.b16 %v4219, %v4218
      %v4419 = vpack.c.b16 %v4221, %v4220
      %v4420 = vpack.c.b16 %v4223, %v4222
      %v4421 = vpack.c.b16 %v4225, %v4224
      %v4422 = vpack.c.b16 %v4227, %v4226
      %v4423 = vpack.c.b16 %v4229, %v4228
      %v4424 = vpack.c.b16 %v4231, %v4230
      %v4425 = vpack.c.b16 %v4233, %v4232
      %v4426 = vpack.c.b16 %v4235, %v4234
      %v4427 = vpack.c.b16 %v4237, %v4236
      %v4428 = vpack.c.b16 %v4239, %v4238
      %v4429 = vpack.c.b16 %v4241, %v4240
      %v4430 = vpack.c.b16 %v4243, %v4242
      %v4431 = vpack.c.b16 %v4245, %v4244
      %v4432 = vpack.c.b16 %v4247, %v4246
      %v4433 = vpack.c.b16 %v4249, %v4248
      %v4434 = vpack.c.b16 %v4251, %v4250
      %v4435 = vpack.c.b16 %v4253, %v4252
      %v4436 = vpack.c.b16 %v4255, %v4254
      %v4437 = vpack.c.b16 %v4257, %v4256
      %v4438 = vpack.c.b16 %v4259, %v4258
      %v4439 = vpack.c.b16 %v4261, %v4260
      %v4440 = vpack.c.b16 %v4263, %v4262
      %v4441 = vpack.c.b16 %v4265, %v4264
      %v4442 = vpack.c.b16 %v4267, %v4266
      %v4443 = vpack.c.b16 %v4269, %v4268
      %v4444 = vpack.c.b16 %v4271, %v4270
      %v4445 = vpack.c.b16 %v4273, %v4272
      %v4446 = vpack.c.b16 %v4275, %v4274
      %v4447 = vpack.c.b16 %v4277, %v4276
      %v4448 = vpack.c.b16 %v4279, %v4278
      %v4449 = vpack.c.b16 %v4281, %v4280
      %v4450 = vpack.c.b16 %v4283, %v4282
      %v4451 = vpack.c.b16 %v4285, %v4284
      %v4452 = vpack.c.b16 %v4287, %v4286
      %v4453 = vpack.c.b16 %v4289, %v4288
      %v4454 = vpack.c.b16 %v4291, %v4290
      %v4455 = vpack.c.b16 %v4293, %v4292
      %v4456 = vpack.c.b16 %v4295, %v4294
      %v4457 = vpack.c.b16 %v4297, %v4296
      %v4458 = vpack.c.b16 %v4299, %v4298
      %v4459 = vpack.c.b16 %v4301, %v4300
      %v4460 = vpack.c.b16 %v4303, %v4302
      %v4461 = vpack.c.b16 %v4305, %v4304
      %v4462 = vpack.c.b16 %v4307, %v4306
      %v4463 = vpack.c.b16 %v4309, %v4308
      %v4464 = vpack.c.b16 %v4311, %v4310
      %v4465 = vpack.c.b16 %v4313, %v4312
      %v4466 = vpack.c.b16 %v4315, %v4314
      %v4467 = vpack.c.b16 %v4317, %v4316
      %v4468 = vpack.c.b16 %v4319, %v4318
      %v4469 = vpack.c.b16 %v4321, %v4320
      %v4470 = vpack.c.b16 %v4323, %v4322
      %v4471 = vpack.c.b16 %v4325, %v4324
      %v4472 = vpack.c.b16 %v4327, %v4326
      %v4473 = vpack.c.b16 %v4329, %v4328
      %v4474 = vpack.c.b16 %v4331, %v4330
      %v4475 = vpack.c.b16 %v4333, %v4332
      %v4476 = vpack.c.b16 %v4335, %v4334
      %v4477 = vpack.c.b16 %v4337, %v4336
      %v4478 = vpack.c.b16 %v4339, %v4338
      %v4479 = vpack.c.b16 %v4341, %v4340
      %v4480 = vpack.c.b16 %v4343, %v4342
      %v4481 = vpack.c.b16 %v4345, %v4344
      %v4482 = vpack.c.b16 %v4347, %v4346
      %v4483 = vpack.c.b16 %v4349, %v4348
      %v4484 = vpack.c.b16 %v4351, %v4350
      %v4485 = vpack.c.b16 %v4353, %v4352
      %v4486 = vpack.c.b16 %v4355, %v4354
      %v4487 = vpack.c.b16 %v4357, %v4356
      %v4488 = vpack.c.b16 %v4359, %v4358
      %v4489 = vpack.c.b16 %v4361, %v4360
      %4618 = vmatprep.subr.bf16.mxu0 0
      %4619 = vmatpush1.bf16.msra.mxu0 %v4362
      %4620 = vmatprep.subr.bf16.mxu0 0
      %4621 = vmatpush1.bf16.msra.mxu0 %v4363
      %4622 = vmatprep.subr.bf16.mxu0 0
      %4623 = vmatpush1.bf16.msra.mxu0 %v4364
      %4624 = vmatprep.subr.bf16.mxu0 0
      %4625 = vmatpush1.bf16.msra.mxu0 %v4365
      %4626 = vmatprep.subr.bf16.mxu0 0
      %4627 = vmatpush1.bf16.msra.mxu0 %v4366
      %4628 = vmatprep.subr.bf16.mxu0 0
      %4629 = vmatpush1.bf16.msra.mxu0 %v4367
      %4630 = vmatprep.subr.bf16.mxu0 0
      %4631 = vmatpush1.bf16.msra.mxu0 %v4368
      %4632 = vmatprep.subr.bf16.mxu0 0
      %4633 = vmatpush1.bf16.msra.mxu0 %v4369
      %4634 = vmatprep.subr.bf16.mxu0 0
      %4635 = vmatpush1.bf16.msra.mxu0 %v4370
      %4636 = vmatprep.subr.bf16.mxu0 0
      %4637 = vmatpush1.bf16.msra.mxu0 %v4371
      %4638 = vmatprep.subr.bf16.mxu0 0
      %4639 = vmatpush1.bf16.msra.mxu0 %v4372
      %4640 = vmatprep.subr.bf16.mxu0 0
      %4641 = vmatpush1.bf16.msra.mxu0 %v4373
      %4642 = vmatprep.subr.bf16.mxu0 0
      %4643 = vmatpush1.bf16.msra.mxu0 %v4374
      %4644 = vmatprep.subr.bf16.mxu0 0
      %4645 = vmatpush1.bf16.msra.mxu0 %v4375
      %4646 = vmatprep.subr.bf16.mxu0 0
      %4647 = vmatpush1.bf16.msra.mxu0 %v4376
      %4648 = vmatprep.subr.bf16.mxu0 0
      %4649 = vmatpush1.bf16.msra.mxu0 %v4377
      %4650 = vmatprep.mubr.bf16.mxu0 %v3556
      %4651 = vmatmul.mubr.bf16.gmra.mrb[0].mxu0 %v3555
      %v4652 = vpop.f32.mrb[0].mxu0
      %v4653 = vadd.f32 %v3848, %v4652
      %v4654 = vpop.f32.mrb[0].mxu0
      %v4655 = vpop.f32.mrb[0].mxu0
      %v4656 = vadd.f32 %v3848, %v4655
      %v4657 = vpop.f32.mrb[0].mxu0
      %4658 = vmatprep.mubr.bf16.mxu0 %v3572
      %4659 = vmatmul.mubr.bf16.gmra.mrb[0].mxu0 %v3571
      %v4660 = vpop.f32.mrb[0].mxu0
      %v4661 = vadd.f32 %v3848, %v4660
      %v4662 = vpop.f32.mrb[0].mxu0
      %v4663 = vpop.f32.mrb[0].mxu0
      %v4664 = vpop.f32.mrb[0].mxu0
      %4665 = vdwg.mxu0
      %4666 = vmatprep.subr.bf16.mxu0 0
      %4667 = vmatpush1.bf16.msra.mxu0 %v4378
      %4668 = vmatprep.subr.bf16.mxu0 0
      %4669 = vmatpush1.bf16.msra.mxu0 %v4379
      %4670 = vmatprep.subr.bf16.mxu0 0
      %4671 = vmatpush1.bf16.msra.mxu0 %v4380
      %4672 = vmatprep.subr.bf16.mxu0 0
      %4673 = vmatpush1.bf16.msra.mxu0 %v4381
      %4674 = vmatprep.subr.bf16.mxu0 0
      %4675 = vmatpush1.bf16.msra.mxu0 %v4382
      %4676 = vmatprep.subr.bf16.mxu0 0
      %4677 = vmatpush1.bf16.msra.mxu0 %v4383
      %4678 = vmatprep.subr.bf16.mxu0 0
      %4679 = vmatpush1.bf16.msra.mxu0 %v4384
      %4680 = vmatprep.subr.bf16.mxu0 0
      %4681 = vmatpush1.bf16.msra.mxu0 %v4385
      %4682 = vmatprep.subr.bf16.mxu0 0
      %4683 = vmatpush1.bf16.msra.mxu0 %v4386
      %4684 = vmatprep.subr.bf16.mxu0 0
      %4685 = vmatpush1.bf16.msra.mxu0 %v4387
      %4686 = vmatprep.subr.bf16.mxu0 0
      %4687 = vmatpush1.bf16.msra.mxu0 %v4388
      %4688 = vmatprep.subr.bf16.mxu0 0
      %4689 = vmatpush1.bf16.msra.mxu0 %v4389
      %4690 = vmatprep.subr.bf16.mxu0 0
      %4691 = vmatpush1.bf16.msra.mxu0 %v4390
      %4692 = vmatprep.subr.bf16.mxu0 0
      %4693 = vmatpush1.bf16.msra.mxu0 %v4391
      %4694 = vmatprep.subr.bf16.mxu0 0
      %4695 = vmatpush1.bf16.msra.mxu0 %v4392
      %4696 = vmatprep.subr.bf16.mxu0 0
      %4697 = vmatpush1.bf16.msra.mxu0 %v4393
      %4698 = vmatprep.mubr.bf16.mxu0 %v3558
      %4699 = vmatmul.mubr.bf16.gmra.mrb[0].mxu0 %v3557
      %v4700 = vpop.f32.mrb[0].mxu0
      %v4701 = vadd.f32 %v4653, %v4700
      %v4702 = vpop.f32.mrb[0].mxu0
      %v4703 = vpop.f32.mrb[0].mxu0
      %v4704 = vadd.f32 %v4656, %v4703
      %v4705 = vpop.f32.mrb[0].mxu0
      %4706 = vmatprep.mubr.bf16.mxu0 %v3574
      %4707 = vmatmul.mubr.bf16.gmra.mrb[0].mxu0 %v3573
      %v4708 = vpop.f32.mrb[0].mxu0
      %v4709 = vadd.f32 %v4661, %v4708
      %v4710 = vpop.f32.mrb[0].mxu0
      %v4711 = vpop.f32.mrb[0].mxu0
      %v4712 = vpop.f32.mrb[0].mxu0
      %4713 = vdwg.mxu0
      %4714 = vmatprep.subr.bf16.mxu0 0
      %4715 = vmatpush1.bf16.msra.mxu0 %v4394
      %4716 = vmatprep.subr.bf16.mxu0 0
      %4717 = vmatpush1.bf16.msra.mxu0 %v4395
      %4718 = vmatprep.subr.bf16.mxu0 0
      %4719 = vmatpush1.bf16.msra.mxu0 %v4396
      %4720 = vmatprep.subr.bf16.mxu0 0
      %4721 = vmatpush1.bf16.msra.mxu0 %v4397
      %4722 = vmatprep.subr.bf16.mxu0 0
      %4723 = vmatpush1.bf16.msra.mxu0 %v4398
      %4724 = vmatprep.subr.bf16.mxu0 0
      %4725 = vmatpush1.bf16.msra.mxu0 %v4399
      %4726 = vmatprep.subr.bf16.mxu0 0
      %4727 = vmatpush1.bf16.msra.mxu0 %v4400
      %4728 = vmatprep.subr.bf16.mxu0 0
      %4729 = vmatpush1.bf16.msra.mxu0 %v4401
      %4730 = vmatprep.subr.bf16.mxu0 0
      %4731 = vmatpush1.bf16.msra.mxu0 %v4402
      %4732 = vmatprep.subr.bf16.mxu0 0
      %4733 = vmatpush1.bf16.msra.mxu0 %v4403
      %4734 = vmatprep.subr.bf16.mxu0 0
      %4735 = vmatpush1.bf16.msra.mxu0 %v4404
      %4736 = vmatprep.subr.bf16.mxu0 0
      %4737 = vmatpush1.bf16.msra.mxu0 %v4405
      %4738 = vmatprep.subr.bf16.mxu0 0
      %4739 = vmatpush1.bf16.msra.mxu0 %v4406
      %4740 = vmatprep.subr.bf16.mxu0 0
      %4741 = vmatpush1.bf16.msra.mxu0 %v4407
      %4742 = vmatprep.subr.bf16.mxu0 0
      %4743 = vmatpush1.bf16.msra.mxu0 %v4408
      %4744 = vmatprep.subr.bf16.mxu0 0
      %4745 = vmatpush1.bf16.msra.mxu0 %v4409
      %4746 = vmatprep.mubr.bf16.mxu0 %v3560
      %4747 = vmatmul.mubr.bf16.gmra.mrb[0].mxu0 %v3559
      %v4748 = vpop.f32.mrb[0].mxu0
      %v4749 = vadd.f32 %v4701, %v4748
      %v4750 = vpop.f32.mrb[0].mxu0
      %v4751 = vpop.f32.mrb[0].mxu0
      %v4752 = vadd.f32 %v4704, %v4751
      %v4753 = vpop.f32.mrb[0].mxu0
      %4754 = vmatprep.mubr.bf16.mxu0 %v3576
      %4755 = vmatmul.mubr.bf16.gmra.mrb[0].mxu0 %v3575
      %v4756 = vpop.f32.mrb[0].mxu0
      %v4757 = vadd.f32 %v4709, %v4756
      %v4758 = vpop.f32.mrb[0].mxu0
      %v4759 = vpop.f32.mrb[0].mxu0
      %v4760 = vpop.f32.mrb[0].mxu0
      %4761 = vdwg.mxu0
      %4762 = vmatprep.subr.bf16.mxu0 0
      %4763 = vmatpush1.bf16.msra.mxu0 %v4410
      %4764 = vmatprep.subr.bf16.mxu0 0
      %4765 = vmatpush1.bf16.msra.mxu0 %v4411
      %4766 = vmatprep.subr.bf16.mxu0 0
      %4767 = vmatpush1.bf16.msra.mxu0 %v4412
      %4768 = vmatprep.subr.bf16.mxu0 0
      %4769 = vmatpush1.bf16.msra.mxu0 %v4413
      %4770 = vmatprep.subr.bf16.mxu0 0
      %4771 = vmatpush1.bf16.msra.mxu0 %v4414
      %4772 = vmatprep.subr.bf16.mxu0 0
      %4773 = vmatpush1.bf16.msra.mxu0 %v4415
      %4774 = vmatprep.subr.bf16.mxu0 0
      %4775 = vmatpush1.bf16.msra.mxu0 %v4416
      %4776 = vmatprep.subr.bf16.mxu0 0
      %4777 = vmatpush1.bf16.msra.mxu0 %v4417
      %4778 = vmatprep.subr.bf16.mxu0 0
      %4779 = vmatpush1.bf16.msra.mxu0 %v4418
      %4780 = vmatprep.subr.bf16.mxu0 0
      %4781 = vmatpush1.bf16.msra.mxu0 %v4419
      %4782 = vmatprep.subr.bf16.mxu0 0
      %4783 = vmatpush1.bf16.msra.mxu0 %v4420
      %4784 = vmatprep.subr.bf16.mxu0 0
      %4785 = vmatpush1.bf16.msra.mxu0 %v4421
      %4786 = vmatprep.subr.bf16.mxu0 0
      %4787 = vmatpush1.bf16.msra.mxu0 %v4422
      %4788 = vmatprep.subr.bf16.mxu0 0
      %4789 = vmatpush1.bf16.msra.mxu0 %v4423
      %4790 = vmatprep.subr.bf16.mxu0 0
      %4791 = vmatpush1.bf16.msra.mxu0 %v4424
      %4792 = vmatprep.subr.bf16.mxu0 0
      %4793 = vmatpush1.bf16.msra.mxu0 %v4425
      %4794 = vmatprep.mubr.bf16.mxu0 %v3562
      %4795 = vmatmul.mubr.bf16.gmra.mrb[0].mxu0 %v3561
      %v4796 = vpop.f32.mrb[0].mxu0
      %v4797 = vadd.f32 %v4749, %v4796
      %v4798 = vpop.f32.mrb[0].mxu0
      %v4799 = vpop.f32.mrb[0].mxu0
      %v4800 = vadd.f32 %v4752, %v4799
      %v4801 = vpop.f32.mrb[0].mxu0
      %4802 = vmatprep.mubr.bf16.mxu0 %v3578
      %4803 = vmatmul.mubr.bf16.gmra.mrb[0].mxu0 %v3577
      %v4804 = vpop.f32.mrb[0].mxu0
      %v4805 = vadd.f32 %v4757, %v4804
      %v4806 = vpop.f32.mrb[0].mxu0
      %v4807 = vpop.f32.mrb[0].mxu0
      %v4808 = vpop.f32.mrb[0].mxu0
      %4809 = vdwg.mxu0
      %4810 = vmatprep.subr.bf16.mxu0 0
      %4811 = vmatpush1.bf16.msra.mxu0 %v4426
      %4812 = vmatprep.subr.bf16.mxu0 0
      %4813 = vmatpush1.bf16.msra.mxu0 %v4427
      %4814 = vmatprep.subr.bf16.mxu0 0
      %4815 = vmatpush1.bf16.msra.mxu0 %v4428
      %4816 = vmatprep.subr.bf16.mxu0 0
      %4817 = vmatpush1.bf16.msra.mxu0 %v4429
      %4818 = vmatprep.subr.bf16.mxu0 0
      %4819 = vmatpush1.bf16.msra.mxu0 %v4430
      %4820 = vmatprep.subr.bf16.mxu0 0
      %4821 = vmatpush1.bf16.msra.mxu0 %v4431
      %4822 = vmatprep.subr.bf16.mxu0 0
      %4823 = vmatpush1.bf16.msra.mxu0 %v4432
      %4824 = vmatprep.subr.bf16.mxu0 0
      %4825 = vmatpush1.bf16.msra.mxu0 %v4433
      %4826 = vmatprep.subr.bf16.mxu0 0
      %4827 = vmatpush1.bf16.msra.mxu0 %v4434
      %4828 = vmatprep.subr.bf16.mxu0 0
      %4829 = vmatpush1.bf16.msra.mxu0 %v4435
      %4830 = vmatprep.subr.bf16.mxu0 0
      %4831 = vmatpush1.bf16.msra.mxu0 %v4436
      %4832 = vmatprep.subr.bf16.mxu0 0
      %4833 = vmatpush1.bf16.msra.mxu0 %v4437
      %4834 = vmatprep.subr.bf16.mxu0 0
      %4835 = vmatpush1.bf16.msra.mxu0 %v4438
      %4836 = vmatprep.subr.bf16.mxu0 0
      %4837 = vmatpush1.bf16.msra.mxu0 %v4439
      %4838 = vmatprep.subr.bf16.mxu0 0
      %4839 = vmatpush1.bf16.msra.mxu0 %v4440
      %4840 = vmatprep.subr.bf16.mxu0 0
      %4841 = vmatpush1.bf16.msra.mxu0 %v4441
      %4842 = vmatprep.mubr.bf16.mxu0 %v3564
      %4843 = vmatmul.mubr.bf16.gmra.mrb[0].mxu0 %v3563
      %v4844 = vpop.f32.mrb[0].mxu0
      %v4845 = vadd.f32 %v4797, %v4844
      %v4846 = vpop.f32.mrb[0].mxu0
      %v4847 = vpop.f32.mrb[0].mxu0
      %v4848 = vadd.f32 %v4800, %v4847
      %v4849 = vpop.f32.mrb[0].mxu0
      %4850 = vmatprep.mubr.bf16.mxu0 %v3580
      %4851 = vmatmul.mubr.bf16.gmra.mrb[0].mxu0 %v3579
      %v4852 = vpop.f32.mrb[0].mxu0
      %v4853 = vadd.f32 %v4805, %v4852
      %v4854 = vpop.f32.mrb[0].mxu0
      %v4855 = vpop.f32.mrb[0].mxu0
      %v4856 = vpop.f32.mrb[0].mxu0
      %4857 = vdwg.mxu0
      %4858 = vmatprep.subr.bf16.mxu0 0
      %4859 = vmatpush1.bf16.msra.mxu0 %v4442
      %4860 = vmatprep.subr.bf16.mxu0 0
      %4861 = vmatpush1.bf16.msra.mxu0 %v4443
      %4862 = vmatprep.subr.bf16.mxu0 0
      %4863 = vmatpush1.bf16.msra.mxu0 %v4444
      %4864 = vmatprep.subr.bf16.mxu0 0
      %4865 = vmatpush1.bf16.msra.mxu0 %v4445
      %4866 = vmatprep.subr.bf16.mxu0 0
      %4867 = vmatpush1.bf16.msra.mxu0 %v4446
      %4868 = vmatprep.subr.bf16.mxu0 0
      %4869 = vmatpush1.bf16.msra.mxu0 %v4447
      %4870 = vmatprep.subr.bf16.mxu0 0
      %4871 = vmatpush1.bf16.msra.mxu0 %v4448
      %4872 = vmatprep.subr.bf16.mxu0 0
      %4873 = vmatpush1.bf16.msra.mxu0 %v4449
      %4874 = vmatprep.subr.bf16.mxu0 0
      %4875 = vmatpush1.bf16.msra.mxu0 %v4450
      %4876 = vmatprep.subr.bf16.mxu0 0
      %4877 = vmatpush1.bf16.msra.mxu0 %v4451
      %4878 = vmatprep.subr.bf16.mxu0 0
      %4879 = vmatpush1.bf16.msra.mxu0 %v4452
      %4880 = vmatprep.subr.bf16.mxu0 0
      %4881 = vmatpush1.bf16.msra.mxu0 %v4453
      %4882 = vmatprep.subr.bf16.mxu0 0
      %4883 = vmatpush1.bf16.msra.mxu0 %v4454
      %4884 = vmatprep.subr.bf16.mxu0 0
      %4885 = vmatpush1.bf16.msra.mxu0 %v4455
      %4886 = vmatprep.subr.bf16.mxu0 0
      %4887 = vmatpush1.bf16.msra.mxu0 %v4456
      %4888 = vmatprep.subr.bf16.mxu0 0
      %4889 = vmatpush1.bf16.msra.mxu0 %v4457
      %4890 = vmatprep.mubr.bf16.mxu0 %v3566
      %4891 = vmatmul.mubr.bf16.gmra.mrb[0].mxu0 %v3565
      %v4892 = vpop.f32.mrb[0].mxu0
      %v4893 = vadd.f32 %v4845, %v4892
      %v4894 = vpop.f32.mrb[0].mxu0
      %v4895 = vpop.f32.mrb[0].mxu0
      %v4896 = vadd.f32 %v4848, %v4895
      %v4897 = vpop.f32.mrb[0].mxu0
      %4898 = vmatprep.mubr.bf16.mxu0 %v3582
      %4899 = vmatmul.mubr.bf16.gmra.mrb[0].mxu0 %v3581
      %v4900 = vpop.f32.mrb[0].mxu0
      %v4901 = vadd.f32 %v4853, %v4900
      %v4902 = vpop.f32.mrb[0].mxu0
      %v4903 = vpop.f32.mrb[0].mxu0
      %v4904 = vpop.f32.mrb[0].mxu0
      %4905 = vdwg.mxu0
      %4906 = vmatprep.subr.bf16.mxu0 0
      %4907 = vmatpush1.bf16.msra.mxu0 %v4458
      %4908 = vmatprep.subr.bf16.mxu0 0
      %4909 = vmatpush1.bf16.msra.mxu0 %v4459
      %4910 = vmatprep.subr.bf16.mxu0 0
      %4911 = vmatpush1.bf16.msra.mxu0 %v4460
      %4912 = vmatprep.subr.bf16.mxu0 0
      %4913 = vmatpush1.bf16.msra.mxu0 %v4461
      %4914 = vmatprep.subr.bf16.mxu0 0
      %4915 = vmatpush1.bf16.msra.mxu0 %v4462
      %4916 = vmatprep.subr.bf16.mxu0 0
      %4917 = vmatpush1.bf16.msra.mxu0 %v4463
      %4918 = vmatprep.subr.bf16.mxu0 0
      %4919 = vmatpush1.bf16.msra.mxu0 %v4464
      %4920 = vmatprep.subr.bf16.mxu0 0
      %4921 = vmatpush1.bf16.msra.mxu0 %v4465
      %4922 = vmatprep.subr.bf16.mxu0 0
      %4923 = vmatpush1.bf16.msra.mxu0 %v4466
      %4924 = vmatprep.subr.bf16.mxu0 0
      %4925 = vmatpush1.bf16.msra.mxu0 %v4467
      %4926 = vmatprep.subr.bf16.mxu0 0
      %4927 = vmatpush1.bf16.msra.mxu0 %v4468
      %4928 = vmatprep.subr.bf16.mxu0 0
      %4929 = vmatpush1.bf16.msra.mxu0 %v4469
      %4930 = vmatprep.subr.bf16.mxu0 0
      %4931 = vmatpush1.bf16.msra.mxu0 %v4470
      %4932 = vmatprep.subr.bf16.mxu0 0
      %4933 = vmatpush1.bf16.msra.mxu0 %v4471
      %4934 = vmatprep.subr.bf16.mxu0 0
      %4935 = vmatpush1.bf16.msra.mxu0 %v4472
      %4936 = vmatprep.subr.bf16.mxu0 0
      %4937 = vmatpush1.bf16.msra.mxu0 %v4473
      %4938 = vmatprep.mubr.bf16.mxu0 %v3568
      %4939 = vmatmul.mubr.bf16.gmra.mrb[0].mxu0 %v3567
      %v4940 = vpop.f32.mrb[0].mxu0
      %v4941 = vadd.f32 %v4893, %v4940
      %v4942 = vpop.f32.mrb[0].mxu0
      %v4943 = vpop.f32.mrb[0].mxu0
      %v4944 = vadd.f32 %v4896, %v4943
      %v4945 = vpop.f32.mrb[0].mxu0
      %4946 = vmatprep.mubr.bf16.mxu0 %v3584
      %4947 = vmatmul.mubr.bf16.gmra.mrb[0].mxu0 %v3583
      %v4948 = vpop.f32.mrb[0].mxu0
      %v4949 = vadd.f32 %v4901, %v4948
      %v4950 = vpop.f32.mrb[0].mxu0
      %v4951 = vpop.f32.mrb[0].mxu0
      %v4952 = vpop.f32.mrb[0].mxu0
      %4953 = vdwg.mxu0
      %4954 = vmatprep.subr.bf16.mxu0 0
      %4955 = vmatpush1.bf16.msra.mxu0 %v4474
      %4956 = vmatprep.subr.bf16.mxu0 0
      %4957 = vmatpush1.bf16.msra.mxu0 %v4475
      %4958 = vmatprep.subr.bf16.mxu0 0
      %4959 = vmatpush1.bf16.msra.mxu0 %v4476
      %4960 = vmatprep.subr.bf16.mxu0 0
      %4961 = vmatpush1.bf16.msra.mxu0 %v4477
      %4962 = vmatprep.subr.bf16.mxu0 0
      %4963 = vmatpush1.bf16.msra.mxu0 %v4478
      %4964 = vmatprep.subr.bf16.mxu0 0
      %4965 = vmatpush1.bf16.msra.mxu0 %v4479
      %4966 = vmatprep.subr.bf16.mxu0 0
      %4967 = vmatpush1.bf16.msra.mxu0 %v4480
      %4968 = vmatprep.subr.bf16.mxu0 0
      %4969 = vmatpush1.bf16.msra.mxu0 %v4481
      %4970 = vmatprep.subr.bf16.mxu0 0
      %4971 = vmatpush1.bf16.msra.mxu0 %v4482
      %4972 = vmatprep.subr.bf16.mxu0 0
      %4973 = vmatpush1.bf16.msra.mxu0 %v4483
      %4974 = vmatprep.subr.bf16.mxu0 0
      %4975 = vmatpush1.bf16.msra.mxu0 %v4484
      %4976 = vmatprep.subr.bf16.mxu0 0
      %4977 = vmatpush1.bf16.msra.mxu0 %v4485
      %4978 = vmatprep.subr.bf16.mxu0 0
      %4979 = vmatpush1.bf16.msra.mxu0 %v4486
      %4980 = vmatprep.subr.bf16.mxu0 0
      %4981 = vmatpush1.bf16.msra.mxu0 %v4487
      %4982 = vmatprep.subr.bf16.mxu0 0
      %4983 = vmatpush1.bf16.msra.mxu0 %v4488
      %4984 = vmatprep.subr.bf16.mxu0 0
      %4985 = vmatpush1.bf16.msra.mxu0 %v4489
      %4986 = vmatprep.mubr.bf16.mxu0 %v3570
      %4987 = vmatmul.mubr.bf16.gmra.mrb[0].mxu0 %v3569
      %v4988 = vpop.f32.mrb[0].mxu0
      %v4989 = vadd.f32 %v4941, %v4988
      %v4990 = vpop.f32.mrb[0].mxu0
      %v4991 = vpop.f32.mrb[0].mxu0
      %v4992 = vadd.f32 %v4944, %v4991
      %v4993 = vpop.f32.mrb[0].mxu0
      %4994 = vmatprep.mubr.bf16.mxu0 %v3586
      %4995 = vmatmul.mubr.bf16.gmra.mrb[0].mxu0 %v3585
      %v4996 = vpop.f32.mrb[0].mxu0
      %v4997 = vadd.f32 %v4949, %v4996
      %v4998 = vpop.f32.mrb[0].mxu0
      %v4999 = vpop.f32.mrb[0].mxu0
      %v5000 = vpop.f32.mrb[0].mxu0
      %5001 = vdwg.mxu0
      %v5002 = vadd.f32 %v2812, %v4989
      %v5003 = vadd.f32 %v2813, %v4992
      %v5004 = vadd.f32 %v2814, %v4997
      %v5005 = vld [vmem:[%s705] sm:$0x1]
      %v5006 = vld [vmem:[%s708] sm:$0x1]
      %v5007 = vsel %vm1551, %v5002, 0.0
      %5008 = vadd.xlane.f32.xlu0 %v5007
      %v5009 = vpop.xlane.xlu0 %5008
      %v5010 = vsel %vm1551, %v5003, 0.0
      %5011 = vadd.xlane.f32.xlu0 %v5010
      %v5012 = vpop.xlane.xlu0 %5011
      %v5013 = vsel %vm2762, %v5004, 0.0
      %5014 = vadd.xlane.f32.xlu0 %v5013
      %v5015 = vpop.xlane.xlu0 %5014
      %v5016 = vmul.f32 %v5009, %v2766
      %v5017 = vmul.f32 %v5012, %v2766
      %v5018 = vmul.f32 %v5015, %v2766
      %v5019 = vsub.f32 %v5002, %v5016
      %v5020 = vsub.f32 %v5003, %v5017
      %v5021 = vsub.f32 %v5004, %v5018
      %v5022 = vmul.f32 %v5019, %v5019
      %v5023 = vmul.f32 %v5020, %v5020
      %v5024 = vmul.f32 %v5021, %v5021
      %v5025 = vsel %vm1551, %v5022, 0.0
      %5026 = vadd.xlane.f32.xlu0 %v5025
      %v5027 = vpop.xlane.xlu0 %5026
      %v5028 = vsel %vm1551, %v5023, 0.0
      %5029 = vadd.xlane.f32.xlu0 %v5028
      %v5030 = vpop.xlane.xlu0 %5029
      %v5031 = vsel %vm2762, %v5024, 0.0
      %5032 = vadd.xlane.f32.xlu0 %v5031
      %v5033 = vpop.xlane.xlu0 %5032
      %v5034 = vmul.f32 %v5027, %v2766
      %v5035 = vmul.f32 %v5030, %v2766
      %v5036 = vmul.f32 %v5033, %v2766
      %v5037 = vadd.f32 %v5034, 1e-05
      %v5038 = vadd.f32 %v5035, 1e-05
      %v5039 = vadd.f32 %v5036, 1e-05
      %v5040 = vrsqrt.pop %v5037
      %v5041 = vrsqrt.pop %v5038
      %v5042 = vrsqrt.pop %v5039
      %v5043 = vmul.f32 %v5019, %v5040
      %v5044 = vmul.f32 %v5020, %v5041
      %v5045 = vmul.f32 %v5021, %v5042
      %v5047 = vlaneseq
      %v5048 = vshrl.u32 %v5047, 7
      %v5049 = vsub.s32 0, %v5048
      %v5050 = vrot.slane %v5005, %v5049
      %v5052 = vmul.f32 %v5043, %v5050
      %v5053 = vmul.f32 %v5044, %v5050
      %v5054 = vmul.f32 %v5045, %v5050
      %v5056 = vlaneseq
      %v5057 = vshrl.u32 %v5056, 7
      %v5058 = vsub.s32 0, %v5057
      %v5059 = vrot.slane %v5006, %v5058
      %v5061 = vadd.f32 %v5052, %v5059
      %v5062 = vadd.f32 %v5053, %v5059
      %v5063 = vadd.f32 %v5054, %v5059
      %5064 = vst.msk [vmem:[#allocation2] sm:$0xff] %vm1551, %v5061
      %5065 = vst.msk [vmem:[#allocation2 + $0x8] sm:$0xff] %vm1551, %v5062
      %5066 = vst.msk [vmem:[#allocation2 + $0x10] sm:$0xf] %vm2762, %v5063
      %p5067 = scmp.eq.s32.totalorder %s28, 1
      // Predicated region
      $region93: #{mini_transformer.1} parent=87 // pred_check
        %p5068 = pneg %p5067
      $region94: #{mini_transformer.1} parent=87 // pred_check_branch
        %5070 = sbr.rel (%p5068) target = $region96
      $region95: #{mini_transformer.1} parent=87 // pred_region
        %5071 = vst.msk [vmem:[%s17] sm:$0xff] %vm1551, %v5061
        %5072 = vst.msk [vmem:[%s17 + $0x8] sm:$0xff] %vm1551, %v5062
        %5073 = vst.msk [vmem:[%s17 + $0x10] sm:$0xf] %vm2762, %v5063
      $region96: #{mini_transformer.1} parent=87 // pred_fallthru
        _
      // Predicated region
      $region97: #{mini_transformer.1} parent=87 // pred_check
        %p5074 = pneg %p458
      $region98: #{mini_transformer.1} parent=87 // pred_check_branch
        %5076 = sbr.rel (%p5074) target = $region100
      $region99: #{mini_transformer.1} parent=87 // pred_region
        _
      $region100: #{mini_transformer.1} parent=87 // pred_fallthru
        _
      // Predicated region
      $region101: #{mini_transformer.1} parent=87 // pred_check
        %p5077 = pneg %p458
      $region102: #{mini_transformer.1} parent=87 // pred_check_branch
        %5079 = sbr.rel (%p5077) target = $region104
      $region103: #{mini_transformer.1} parent=87 // pred_region
        _
      $region104: #{mini_transformer.1} parent=87 // pred_fallthru
        _
    $region88: #{mini_transformer.1} parent=5 // pred_fallthru
      _
    %p5080 = scmp.le.s32.totalorder 2, %s23
    // Predicated region
    $region105: #{mini_transformer.1} parent=5 // pred_check
      %p5081 = pneg %p5080
    $region106: #{mini_transformer.1} parent=5 // pred_check_branch
      %5083 = sbr.rel (%p5081) target = $region108
    $region107: #{mini_transformer.1} parent=5 // pred_region
      %s5084 = ssub.s32 %s23, 2
    $region108: #{mini_transformer.1} parent=5 // pred_fallthru
      _
  $region6: #{mini_transformer.1} parent=0 // loop_footer
    %s27 = sadd.s32 1, %s23
  $region7: #{mini_transformer.1} parent=0 // loop_footer_branch
    %22 = sbr.rel target = $region3
  $region8: #{mini_transformer.1} parent=0 // loop_exit
    _

</llo_original>
